<compile_context>
chip_gen: v6e
topology: v6e:2x2x1
jax: 0.10.0
libtpu: 0.0.40
codegen_flags: <defaults>
</compile_context>

<pallas_src>
import jax
import jax.numpy as jnp
from jax import lax
from jax.experimental import pallas as pl
from jax.experimental.pallas import tpu as pltpu

LANE = 128  # TPU lane width on v5e / v6e / v7x


def _round_up(x, m):
    return (x + m - 1) // m * m


def _pad_gate_rows(w, h, hp):
    """Pad PyTorch stacked-gate rows (4h, ...) -> (4hp, ...), per gate chunk."""
    if w.ndim == 1:
        w4 = w.reshape(4, h)
        out = jnp.zeros((4, hp), w.dtype).at[:, :h].set(w4)
        return out.reshape(4 * hp)
    w4 = w.reshape(4, h, w.shape[1])
    out = jnp.zeros((4, hp, w.shape[1]), w.dtype).at[:, :h, :].set(w4)
    return out.reshape(4 * hp, w.shape[1])


def _pad_last(w, k, kp):
    return jnp.zeros(w.shape[:-1] + (kp,), w.dtype).at[..., :k].set(w)


def _pick_tb(B):
    # Big batch tiles: the recurrence is a serial T-step loop whose per-step
    # (TB,128)x(128,512) matmul is pure fill/drain latency at tiny TB.  Keep
    # the whole batch in one tile up to 256 rows; above that, tile so the
    # "parallel" grid axis has >=2 steps (shards across v7x's 2 TensorCores).
    if B <= 256:
        return B
    for tb in (256, 128, 64, 32, 16, 8):
        if B % tb == 0:
            return tb
    return B  # TODO(synk): masked ragged last tile for awkward batch sizes


def _make_kernel(num_layers, seq_len, hp):
    g4 = 4 * hp
    f32 = jnp.float32
    bf16 = jnp.bfloat16

    def _sig(x):
        # sigmoid(x) == 0.5*(tanh(x/2)+1): one EUP pass instead of exp + recip.
        return 0.5 * (jnp.tanh(0.5 * x) + 1.0)

    def kernel(*refs):
        x_ref = refs[0]
        layer_refs = [refs[1 + 3 * l: 4 + 3 * l] for l in range(num_layers)]
        base = 1 + 3 * num_layers
        w1_ref, b1_ref, w2_ref, b2_ref = refs[base:base + 4]
        y_ref, hn_ref, cn_ref = refs[base + 4:base + 7]
        gates_ref, seq_ref = refs[base + 7:base + 9]

        tb = x_ref.shape[1]

        def recurrence(whh_t, write_seq):
            # whh_t: (HP, 4HP) bf16.  T is small & static: fully unrolled so
            # the scheduler can overlap gate math with the next step's MXU push.
            h = jnp.zeros((tb, hp), f32)
            c = jnp.zeros((tb, hp), f32)
            for t in range(seq_len):
                g = gates_ref[t] + jnp.dot(h.astype(bf16), whh_t,
                                           preferred_element_type=f32)
                i = _sig(g[:, 0 * hp:1 * hp])
                f = _sig(g[:, 1 * hp:2 * hp])
                gc = jnp.tanh(g[:, 2 * hp:3 * hp])
                o = _sig(g[:, 3 * hp:4 * hp])
                c = f * c + i * gc
                h = o * jnp.tanh(c)
                if write_seq:
                    seq_ref[t] = h.astype(seq_ref.dtype)
            return h, c

        # ---- layer 0: input size is 1 -> x-projection is a VPU broadcast
        # (avoids a K=1 matmul that would waste the MXU). ----
        wih0 = layer_refs[0][0][...]            # (1, 4HP) f32, single input col
        whh0_t = layer_refs[0][1][...]          # (HP, 4HP) bf16
        b0 = layer_refs[0][2][...]              # (1, 4HP) f32
        x_t = x_ref[...].astype(f32)            # (T, TB) already time-major
        gates_ref[...] = x_t[:, :, None] * wih0[None, :, :] + b0[None, :, :]
        h, c = recurrence(whh0_t, write_seq=num_layers > 1)
        hn_ref[0] = h.astype(hn_ref.dtype)
        cn_ref[0] = c.astype(cn_ref.dtype)

        # ---- upper layers: whole-sequence input projection flattened into one
        # (T*TB, HP) x (HP, 4HP) bf16 MXU matmul, then the serial recurrence. ----
        for l in range(1, num_layers):
            wih_t = layer_refs[l][0][...]       # (HP, 4HP) bf16
            whh_t = layer_refs[l][1][...]       # (HP, 4HP) bf16
            b = layer_refs[l][2][...]           # (1, 4HP) f32
            seq = seq_ref[...]                  # (T, TB, HP) f32
            gx = jnp.dot(seq.reshape(seq_len * tb, hp).astype(bf16), wih_t,
                         preferred_element_type=f32)
            gates_ref[...] = gx.reshape(seq_len, tb, g4) + b[None, :, :]
            h, c = recurrence(whh_t, write_seq=l < num_layers - 1)
            hn_ref[l] = h.astype(hn_ref.dtype)
            cn_ref[l] = c.astype(cn_ref.dtype)

        # ---- head: y = fc2(tanh(fc1(h_last))), all lane-dense padded ----
        z = jnp.tanh(jnp.dot(h.astype(bf16), w1_ref[...],
                             preferred_element_type=f32) + b1_ref[...])
        y = jnp.dot(z.astype(bf16), w2_ref[...],
                    preferred_element_type=f32) + b2_ref[...]
        y_ref[...] = y.astype(y_ref.dtype)

    return kernel


def lstm_day_pallas(x, params, num_layers=2):
    """Forward of LSTM_Day with hx=None. Returns (y, (h_n, c_n))."""
    # TODO(synk): non-None initial state `hx` is not plumbed through (module
    # default hx=None / zero initial state is implemented). The first,
    # discarded `self.lstm(x)` call in the PyTorch forward is dead compute and
    # is skipped (returned values are identical).
    B, T = x.shape
    H = params["w_hh_0"].shape[1]          # dim1
    D2 = params["fc1_w"].shape[0]          # dim2
    HP = _round_up(H, LANE)
    D2P = _round_up(D2, LANE)
    OUTP = LANE
    G4 = 4 * HP
    f32, bf16 = jnp.float32, jnp.bfloat16

    TB = _pick_tb(B)
    grid = (pl.cdiv(B, TB),)

    def const_spec(shape):
        return pl.BlockSpec(shape, lambda i: (0,) * len(shape))

    # x passed time-major (T, B): the transpose is free in the XLA wrapper and
    # removes the in-kernel relayout of a narrow tile.
    inputs = [jnp.swapaxes(x.astype(f32), 0, 1)]
    in_specs = [pl.BlockSpec((T, TB), lambda i: (0, i))]

    for l in range(num_layers):
        w_ih = params[f"w_ih_{l}"].astype(f32)
        w_hh = params[f"w_hh_{l}"].astype(f32)
        b = (params[f"b_ih_{l}"] + params[f"b_hh_{l}"]).astype(f32)
        w_hh_p = _pad_last(_pad_gate_rows(w_hh, H, HP), H, HP).T.astype(bf16)
        b_p = _pad_gate_rows(b, H, HP).reshape(1, G4)          # f32 (accum base)
        if l == 0:
            # input size 1 -> pass the single input column as a (1, 4HP) f32
            # row; it is consumed by a VPU broadcast, not the MXU.
            w_ih_p = _pad_gate_rows(w_ih, H, HP)[:, 0].reshape(1, G4)
            inputs += [w_ih_p, w_hh_p, b_p]
            in_specs += [const_spec((1, G4)), const_spec((HP, G4)),
                         const_spec((1, G4))]
        else:
            w_ih_p = _pad_last(_pad_gate_rows(w_ih, H, HP), H, HP).T.astype(bf16)
            inputs += [w_ih_p, w_hh_p, b_p]
            in_specs += [const_spec((HP, G4)), const_spec((HP, G4)),
                         const_spec((1, G4))]

    w1 = params["fc1_w"].astype(f32)       # (D2, H)
    b1 = params["fc1_b"].astype(f32)       # (D2,)
    w2 = params["fc2_w"].astype(f32)       # (1, D2)
    b2 = params["fc2_b"].astype(f32)       # (1,)
    w1_p = jnp.zeros((HP, D2P), f32).at[:H, :D2].set(w1.T).astype(bf16)
    b1_p = jnp.zeros((1, D2P), f32).at[0, :D2].set(b1)
    w2_p = jnp.zeros((D2P, OUTP), f32).at[:D2, 0].set(w2[0]).astype(bf16)
    b2_p = jnp.zeros((1, OUTP), f32).at[0, 0].set(b2[0])
    inputs += [w1_p, b1_p, w2_p, b2_p]
    in_specs += [const_spec((HP, D2P)), const_spec((1, D2P)),
                 const_spec((D2P, OUTP)), const_spec((1, OUTP))]

    out_shape = (
        jax.ShapeDtypeStruct((B, OUTP), f32),
        jax.ShapeDtypeStruct((num_layers, B, HP), f32),
        jax.ShapeDtypeStruct((num_layers, B, HP), f32),
    )
    out_specs = (
        pl.BlockSpec((TB, OUTP), lambda i: (i, 0)),
        pl.BlockSpec((num_layers, TB, HP), lambda i: (0, i, 0)),
        pl.BlockSpec((num_layers, TB, HP), lambda i: (0, i, 0)),
    )
    scratch_shapes = [
        pltpu.VMEM((T, TB, G4), f32),   # per-timestep gate pre-activations
        pltpu.VMEM((T, TB, HP), f32),   # per-timestep layer output sequence
    ]

    kernel = _make_kernel(num_layers, T, HP)

    y_pad, hn_pad, cn_pad = pl.pallas_call(
        kernel,
        out_shape=out_shape,
        grid_spec=pltpu.PrefetchScalarGridSpec(
            num_scalar_prefetch=0,
            grid=grid,
            in_specs=in_specs,
            out_specs=out_specs,
            scratch_shapes=scratch_shapes),
        compiler_params=pltpu.CompilerParams(
            dimension_semantics=("parallel",)),
    )(*inputs)

    y = y_pad[:, :1]                    # (B, 1)
    h_n = hn_pad[:, :, :H]              # (L, B, H)
    c_n = cn_pad[:, :, :H]
    return y, (h_n, c_n)


# ----------------------------- pure-JAX reference -----------------------------
def _lstm_layer_ref(x_seq, w_ih, w_hh, b_ih, b_hh):
    B = x_seq.shape[0]
    H = w_hh.shape[1]

    def step(carry, xt):
        h, c = carry
        g = xt @ w_ih.T + h @ w_hh.T + b_ih + b_hh
        i, f, gg, o = jnp.split(g, 4, axis=-1)
        i = jax.nn.sigmoid(i)
        f = jax.nn.sigmoid(f)
        gg = jnp.tanh(gg)
        o = jax.nn.sigmoid(o)
        c = f * c + i * gg
        h = o * jnp.tanh(c)
        return (h, c), h

    init = (jnp.zeros((B, H), jnp.float32), jnp.zeros((B, H), jnp.float32))
    (h_t, c_t), hs = lax.scan(step, init, jnp.swapaxes(x_seq, 0, 1))
    return jnp.swapaxes(hs, 0, 1), h_t, c_t


def lstm_day_ref(x, params, num_layers=2):
    inp = x[:, :, None].astype(jnp.float32)
    h_ns, c_ns = [], []
    out = inp
    for l in range(num_layers):
        out, h_t, c_t = _lstm_layer_ref(
            inp, params[f"w_ih_{l}"], params[f"w_hh_{l}"],
            params[f"b_ih_{l}"], params[f"b_hh_{l}"])
        h_ns.append(h_t)
        c_ns.append(c_t)
        inp = out
    last = out[:, -1, :]
    z = jnp.tanh(last @ params["fc1_w"].T + params["fc1_b"])
    y = z @ params["fc2_w"].T + params["fc2_b"]       # (B, 1)
    return y, (jnp.stack(h_ns), jnp.stack(c_ns))


if __name__ == "__main__":
    B, T = 2, 8                 # batch=2, past-days sequence length=8
    dim1, dim2, num_layers = 10, 6, 2

    key = jax.random.PRNGKey(0)
    keys = jax.random.split(key, 16)
    kb = 1.0 / (dim1 ** 0.5)

    params = {}
    ki = 0
    for l in range(num_layers):
        in_dim = 1 if l == 0 else dim1
        params[f"w_ih_{l}"] = jax.random.uniform(
            keys[ki], (4 * dim1, in_dim), jnp.float32, -kb, kb); ki += 1
        params[f"w_hh_{l}"] = jax.random.uniform(
            keys[ki], (4 * dim1, dim1), jnp.float32, -kb, kb); ki += 1
        params[f"b_ih_{l}"] = jax.random.uniform(
            keys[ki], (4 * dim1,), jnp.float32, -kb, kb); ki += 1
        params[f"b_hh_{l}"] = jax.random.uniform(
            keys[ki], (4 * dim1,), jnp.float32, -kb, kb); ki += 1
    b1s = 1.0 / (dim1 ** 0.5)
    params["fc1_w"] = jax.random.uniform(keys[ki], (dim2, dim1), jnp.float32, -b1s, b1s); ki += 1
    params["fc1_b"] = jax.random.uniform(keys[ki], (dim2,), jnp.float32, -b1s, b1s); ki += 1
    b2s = 1.0 / (dim2 ** 0.5)
    params["fc2_w"] = jax.random.uniform(keys[ki], (1, dim2), jnp.float32, -b2s, b2s); ki += 1
    params["fc2_b"] = jax.random.uniform(keys[ki], (1,), jnp.float32, -b2s, b2s); ki += 1

    x = jax.random.normal(keys[ki], (B, T), dtype=jnp.float32)

    y, (h_n, c_n) = lstm_day_pallas(x, params, num_layers=num_layers)
    jax.block_until_ready((y, h_n, c_n))

    y_r, (h_r, c_r) = lstm_day_ref(x, params, num_layers=num_layers)

    assert y.shape == (B, 1)
    assert h_n.shape == (num_layers, B, dim1)
    assert c_n.shape == (num_layers, B, dim1)
    # Tolerance allows for bf16 MXU operands (kernel) vs. TPU-default-precision
    # f32 matmuls (reference); both accumulate in f32.
    assert jnp.allclose(y, y_r, atol=5e-3, rtol=2e-2)
    assert jnp.allclose(h_n, h_r, atol=5e-3, rtol=2e-2)
    assert jnp.allclose(c_n, c_r, atol=5e-3, rtol=2e-2)

    print("KERNEL_OK")
</pallas_src>

<mosaic_0001>
module attributes {stable_mosaic.version = 11 : i64} {
  func.func @kernel(%arg0: i32, %arg1: memref<8x2xf32, #tpu.memory_space<vmem>>, %arg2: memref<1x512xf32, #tpu.memory_space<vmem>>, %arg3: memref<128x512xbf16, #tpu.memory_space<vmem>>, %arg4: memref<1x512xf32, #tpu.memory_space<vmem>>, %arg5: memref<128x512xbf16, #tpu.memory_space<vmem>>, %arg6: memref<128x512xbf16, #tpu.memory_space<vmem>>, %arg7: memref<1x512xf32, #tpu.memory_space<vmem>>, %arg8: memref<128x128xbf16, #tpu.memory_space<vmem>>, %arg9: memref<1x128xf32, #tpu.memory_space<vmem>>, %arg10: memref<128x128xbf16, #tpu.memory_space<vmem>>, %arg11: memref<1x128xf32, #tpu.memory_space<vmem>>, %arg12: memref<2x128xf32, #tpu.memory_space<vmem>>, %arg13: memref<2x2x128xf32, #tpu.memory_space<vmem>>, %arg14: memref<2x2x128xf32, #tpu.memory_space<vmem>>, %arg15: memref<8x2x512xf32, #tpu.memory_space<vmem>>, %arg16: memref<8x2x128xf32, #tpu.memory_space<vmem>>) attributes {dimension_semantics = [#tpu.dimension_semantics<parallel>], iteration_bounds = array<i64: 1>, scalar_prefetch = 0 : i64, scratch_operands = 2 : i64, tpu.core_type = #tpu.core_type<tc>, window_params = [{transform_indices = @transform_0, window_bounds = array<i64: 8, 2>}, {pipeline_mode = #tpu.pipeline_mode<synchronous>, transform_indices = @transform_1, window_bounds = array<i64: 1, 512>}, {pipeline_mode = #tpu.pipeline_mode<synchronous>, transform_indices = @transform_2, window_bounds = array<i64: 128, 512>}, {pipeline_mode = #tpu.pipeline_mode<synchronous>, transform_indices = @transform_3, window_bounds = array<i64: 1, 512>}, {pipeline_mode = #tpu.pipeline_mode<synchronous>, transform_indices = @transform_4, window_bounds = array<i64: 128, 512>}, {pipeline_mode = #tpu.pipeline_mode<synchronous>, transform_indices = @transform_5, window_bounds = array<i64: 128, 512>}, {pipeline_mode = #tpu.pipeline_mode<synchronous>, transform_indices = @transform_6, window_bounds = array<i64: 1, 512>}, {pipeline_mode = #tpu.pipeline_mode<synchronous>, transform_indices = @transform_7, window_bounds = array<i64: 128, 128>}, {pipeline_mode = #tpu.pipeline_mode<synchronous>, transform_indices = @transform_8, window_bounds = array<i64: 1, 128>}, {pipeline_mode = #tpu.pipeline_mode<synchronous>, transform_indices = @transform_9, window_bounds = array<i64: 128, 128>}, {pipeline_mode = #tpu.pipeline_mode<synchronous>, transform_indices = @transform_10, window_bounds = array<i64: 1, 128>}, {transform_indices = @transform_11, window_bounds = array<i64: 2, 128>}, {transform_indices = @transform_12, window_bounds = array<i64: 2, 2, 128>}, {transform_indices = @transform_13, window_bounds = array<i64: 2, 2, 128>}]} {
    %c0 = arith.constant 0 : index
    %c0_0 = arith.constant 0 : index
    %0 = vector.load %arg2[%c0, %c0_0] : memref<1x512xf32, #tpu.memory_space<vmem>>, vector<1x512xf32>
    %c0_1 = arith.constant 0 : index
    %c0_2 = arith.constant 0 : index
    %1 = vector.load %arg3[%c0_1, %c0_2] : memref<128x512xbf16, #tpu.memory_space<vmem>>, vector<128x512xbf16>
    %c0_3 = arith.constant 0 : index
    %c0_4 = arith.constant 0 : index
    %2 = vector.load %arg4[%c0_3, %c0_4] : memref<1x512xf32, #tpu.memory_space<vmem>>, vector<1x512xf32>
    %c0_5 = arith.constant 0 : index
    %c0_6 = arith.constant 0 : index
    %3 = vector.load %arg1[%c0_5, %c0_6] : memref<8x2xf32, #tpu.memory_space<vmem>>, vector<8x2xf32>
    %4 = vector.shape_cast %3 : vector<8x2xf32> to vector<8x2x1xf32>
    %5 = vector.shape_cast %0 : vector<1x512xf32> to vector<1x1x512xf32>
    %6 = vector.broadcast %4 : vector<8x2x1xf32> to vector<8x2x512xf32>
    %7 = vector.broadcast %5 : vector<1x1x512xf32> to vector<8x2x512xf32>
    %8 = arith.mulf %6, %7 : vector<8x2x512xf32>
    %9 = vector.shape_cast %2 : vector<1x512xf32> to vector<1x1x512xf32>
    %10 = vector.broadcast %9 : vector<1x1x512xf32> to vector<8x2x512xf32>
    %11 = arith.addf %8, %10 : vector<8x2x512xf32>
    %c0_7 = arith.constant 0 : index
    %c0_8 = arith.constant 0 : index
    %c0_9 = arith.constant 0 : index
    %12 = vector.load %arg15[%c0_7, %c0_8, %c0_9] : memref<8x2x512xf32, #tpu.memory_space<vmem>>, vector<8x2x512xf32>
    tpu.vector_store %arg15[%c0_7, %c0_8, %c0_9], %11 {strides = array<i32>} : memref<8x2x512xf32, #tpu.memory_space<vmem>>, vector<8x2x512xf32>,
    %cst = arith.constant 0.000000e+00 : f32
    %13 = vector.broadcast %cst : f32 to vector<2x128xf32>
    %cst_10 = arith.constant 0.000000e+00 : f32
    %14 = vector.broadcast %cst_10 : f32 to vector<2x128xf32>
    %c0_11 = arith.constant 0 : index
    %c0_12 = arith.constant 0 : index
    %c0_13 = arith.constant 0 : index
    %15 = vector.load %arg15[%c0_11, %c0_12, %c0_13] : memref<8x2x512xf32, #tpu.memory_space<vmem>>, vector<1x2x512xf32>
    %16 = vector.shape_cast %15 : vector<1x2x512xf32> to vector<2x512xf32>
    %17 = arith.truncf %13 : vector<2x128xf32> to vector<2x128xbf16>
    %cst_14 = arith.constant dense<0.000000e+00> : vector<2x512xf32>
    %18 = tpu.matmul %17, %1, %cst_14 {dimension_numbers = #tpu.dot_dimension_numbers<[1], [0], [0], [1], [0, 0, 1, 1], [], []>} : vector<2x128xbf16>, vector<128x512xbf16>, vector<2x512xf32> -> vector<2x512xf32>
    %19 = arith.addf %16, %18 : vector<2x512xf32>
    %20 = vector.extract_strided_slice %19 {offsets = [0, 0], sizes = [2, 128], strides = [1, 1]} : vector<2x512xf32> to vector<2x128xf32>
    %cst_15 = arith.constant 5.000000e-01 : f32
    %21 = vector.broadcast %cst_15 : f32 to vector<2x128xf32>
    %22 = arith.mulf %21, %20 : vector<2x128xf32>
    %23 = math.tanh %22 : vector<2x128xf32>
    %cst_16 = arith.constant 1.000000e+00 : f32
    %24 = vector.broadcast %cst_16 : f32 to vector<2x128xf32>
    %25 = arith.addf %23, %24 : vector<2x128xf32>
    %cst_17 = arith.constant 5.000000e-01 : f32
    %26 = vector.broadcast %cst_17 : f32 to vector<2x128xf32>
    %27 = arith.mulf %26, %25 : vector<2x128xf32>
    %28 = vector.extract_strided_slice %19 {offsets = [0, 128], sizes = [2, 128], strides = [1, 1]} : vector<2x512xf32> to vector<2x128xf32>
    %cst_18 = arith.constant 5.000000e-01 : f32
    %29 = vector.broadcast %cst_18 : f32 to vector<2x128xf32>
    %30 = arith.mulf %29, %28 : vector<2x128xf32>
    %31 = math.tanh %30 : vector<2x128xf32>
    %cst_19 = arith.constant 1.000000e+00 : f32
    %32 = vector.broadcast %cst_19 : f32 to vector<2x128xf32>
    %33 = arith.addf %31, %32 : vector<2x128xf32>
    %cst_20 = arith.constant 5.000000e-01 : f32
    %34 = vector.broadcast %cst_20 : f32 to vector<2x128xf32>
    %35 = arith.mulf %34, %33 : vector<2x128xf32>
    %36 = vector.extract_strided_slice %19 {offsets = [0, 256], sizes = [2, 128], strides = [1, 1]} : vector<2x512xf32> to vector<2x128xf32>
    %37 = math.tanh %36 : vector<2x128xf32>
    %38 = vector.extract_strided_slice %19 {offsets = [0, 384], sizes = [2, 128], strides = [1, 1]} : vector<2x512xf32> to vector<2x128xf32>
    %cst_21 = arith.constant 5.000000e-01 : f32
    %39 = vector.broadcast %cst_21 : f32 to vector<2x128xf32>
    %40 = arith.mulf %39, %38 : vector<2x128xf32>
    %41 = math.tanh %40 : vector<2x128xf32>
    %cst_22 = arith.constant 1.000000e+00 : f32
    %42 = vector.broadcast %cst_22 : f32 to vector<2x128xf32>
    %43 = arith.addf %41, %42 : vector<2x128xf32>
    %cst_23 = arith.constant 5.000000e-01 : f32
    %44 = vector.broadcast %cst_23 : f32 to vector<2x128xf32>
    %45 = arith.mulf %44, %43 : vector<2x128xf32>
    %46 = arith.mulf %35, %14 : vector<2x128xf32>
    %47 = arith.mulf %27, %37 : vector<2x128xf32>
    %48 = arith.addf %46, %47 : vector<2x128xf32>
    %49 = math.tanh %48 : vector<2x128xf32>
    %50 = arith.mulf %45, %49 : vector<2x128xf32>
    %c0_24 = arith.constant 0 : index
    %c0_25 = arith.constant 0 : index
    %c0_26 = arith.constant 0 : index
    %51 = vector.load %arg16[%c0_24, %c0_25, %c0_26] : memref<8x2x128xf32, #tpu.memory_space<vmem>>, vector<1x2x128xf32>
    %52 = vector.shape_cast %51 : vector<1x2x128xf32> to vector<2x128xf32>
    %53 = vector.shape_cast %50 : vector<2x128xf32> to vector<1x2x128xf32>
    tpu.vector_store %arg16[%c0_24, %c0_25, %c0_26], %53 {strides = array<i32>} : memref<8x2x128xf32, #tpu.memory_space<vmem>>, vector<1x2x128xf32>,
    %c1 = arith.constant 1 : index
    %c0_27 = arith.constant 0 : index
    %c0_28 = arith.constant 0 : index
    %54 = vector.load %arg15[%c1, %c0_27, %c0_28] : memref<8x2x512xf32, #tpu.memory_space<vmem>>, vector<1x2x512xf32>
    %55 = vector.shape_cast %54 : vector<1x2x512xf32> to vector<2x512xf32>
    %56 = arith.truncf %50 : vector<2x128xf32> to vector<2x128xbf16>
    %cst_29 = arith.constant dense<0.000000e+00> : vector<2x512xf32>
    %57 = tpu.matmul %56, %1, %cst_29 {dimension_numbers = #tpu.dot_dimension_numbers<[1], [0], [0], [1], [0, 0, 1, 1], [], []>} : vector<2x128xbf16>, vector<128x512xbf16>, vector<2x512xf32> -> vector<2x512xf32>
    %58 = arith.addf %55, %57 : vector<2x512xf32>
    %59 = vector.extract_strided_slice %58 {offsets = [0, 0], sizes = [2, 128], strides = [1, 1]} : vector<2x512xf32> to vector<2x128xf32>
    %cst_30 = arith.constant 5.000000e-01 : f32
    %60 = vector.broadcast %cst_30 : f32 to vector<2x128xf32>
    %61 = arith.mulf %60, %59 : vector<2x128xf32>
    %62 = math.tanh %61 : vector<2x128xf32>
    %cst_31 = arith.constant 1.000000e+00 : f32
    %63 = vector.broadcast %cst_31 : f32 to vector<2x128xf32>
    %64 = arith.addf %62, %63 : vector<2x128xf32>
    %cst_32 = arith.constant 5.000000e-01 : f32
    %65 = vector.broadcast %cst_32 : f32 to vector<2x128xf32>
    %66 = arith.mulf %65, %64 : vector<2x128xf32>
    %67 = vector.extract_strided_slice %58 {offsets = [0, 128], sizes = [2, 128], strides = [1, 1]} : vector<2x512xf32> to vector<2x128xf32>
    %cst_33 = arith.constant 5.000000e-01 : f32
    %68 = vector.broadcast %cst_33 : f32 to vector<2x128xf32>
    %69 = arith.mulf %68, %67 : vector<2x128xf32>
    %70 = math.tanh %69 : vector<2x128xf32>
    %cst_34 = arith.constant 1.000000e+00 : f32
    %71 = vector.broadcast %cst_34 : f32 to vector<2x128xf32>
    %72 = arith.addf %70, %71 : vector<2x128xf32>
    %cst_35 = arith.constant 5.000000e-01 : f32
    %73 = vector.broadcast %cst_35 : f32 to vector<2x128xf32>
    %74 = arith.mulf %73, %72 : vector<2x128xf32>
    %75 = vector.extract_strided_slice %58 {offsets = [0, 256], sizes = [2, 128], strides = [1, 1]} : vector<2x512xf32> to vector<2x128xf32>
    %76 = math.tanh %75 : vector<2x128xf32>
    %77 = vector.extract_strided_slice %58 {offsets = [0, 384], sizes = [2, 128], strides = [1, 1]} : vector<2x512xf32> to vector<2x128xf32>
    %cst_36 = arith.constant 5.000000e-01 : f32
    %78 = vector.broadcast %cst_36 : f32 to vector<2x128xf32>
    %79 = arith.mulf %78, %77 : vector<2x128xf32>
    %80 = math.tanh %79 : vector<2x128xf32>
    %cst_37 = arith.constant 1.000000e+00 : f32
    %81 = vector.broadcast %cst_37 : f32 to vector<2x128xf32>
    %82 = arith.addf %80, %81 : vector<2x128xf32>
    %cst_38 = arith.constant 5.000000e-01 : f32
    %83 = vector.broadcast %cst_38 : f32 to vector<2x128xf32>
    %84 = arith.mulf %83, %82 : vector<2x128xf32>
    %85 = arith.mulf %74, %48 : vector<2x128xf32>
    %86 = arith.mulf %66, %76 : vector<2x128xf32>
    %87 = arith.addf %85, %86 : vector<2x128xf32>
    %88 = math.tanh %87 : vector<2x128xf32>
    %89 = arith.mulf %84, %88 : vector<2x128xf32>
    %c1_39 = arith.constant 1 : index
    %c0_40 = arith.constant 0 : index
    %c0_41 = arith.constant 0 : index
    %90 = vector.load %arg16[%c1_39, %c0_40, %c0_41] : memref<8x2x128xf32, #tpu.memory_space<vmem>>, vector<1x2x128xf32>
    %91 = vector.shape_cast %90 : vector<1x2x128xf32> to vector<2x128xf32>
    %92 = vector.shape_cast %89 : vector<2x128xf32> to vector<1x2x128xf32>
    tpu.vector_store %arg16[%c1_39, %c0_40, %c0_41], %92 {strides = array<i32>} : memref<8x2x128xf32, #tpu.memory_space<vmem>>, vector<1x2x128xf32>,
    %c2 = arith.constant 2 : index
    %c0_42 = arith.constant 0 : index
    %c0_43 = arith.constant 0 : index
    %93 = vector.load %arg15[%c2, %c0_42, %c0_43] : memref<8x2x512xf32, #tpu.memory_space<vmem>>, vector<1x2x512xf32>
    %94 = vector.shape_cast %93 : vector<1x2x512xf32> to vector<2x512xf32>
    %95 = arith.truncf %89 : vector<2x128xf32> to vector<2x128xbf16>
    %cst_44 = arith.constant dense<0.000000e+00> : vector<2x512xf32>
    %96 = tpu.matmul %95, %1, %cst_44 {dimension_numbers = #tpu.dot_dimension_numbers<[1], [0], [0], [1], [0, 0, 1, 1], [], []>} : vector<2x128xbf16>, vector<128x512xbf16>, vector<2x512xf32> -> vector<2x512xf32>
    %97 = arith.addf %94, %96 : vector<2x512xf32>
    %98 = vector.extract_strided_slice %97 {offsets = [0, 0], sizes = [2, 128], strides = [1, 1]} : vector<2x512xf32> to vector<2x128xf32>
    %cst_45 = arith.constant 5.000000e-01 : f32
    %99 = vector.broadcast %cst_45 : f32 to vector<2x128xf32>
    %100 = arith.mulf %99, %98 : vector<2x128xf32>
    %101 = math.tanh %100 : vector<2x128xf32>
    %cst_46 = arith.constant 1.000000e+00 : f32
    %102 = vector.broadcast %cst_46 : f32 to vector<2x128xf32>
    %103 = arith.addf %101, %102 : vector<2x128xf32>
    %cst_47 = arith.constant 5.000000e-01 : f32
    %104 = vector.broadcast %cst_47 : f32 to vector<2x128xf32>
    %105 = arith.mulf %104, %103 : vector<2x128xf32>
    %106 = vector.extract_strided_slice %97 {offsets = [0, 128], sizes = [2, 128], strides = [1, 1]} : vector<2x512xf32> to vector<2x128xf32>
    %cst_48 = arith.constant 5.000000e-01 : f32
    %107 = vector.broadcast %cst_48 : f32 to vector<2x128xf32>
    %108 = arith.mulf %107, %106 : vector<2x128xf32>
    %109 = math.tanh %108 : vector<2x128xf32>
    %cst_49 = arith.constant 1.000000e+00 : f32
    %110 = vector.broadcast %cst_49 : f32 to vector<2x128xf32>
    %111 = arith.addf %109, %110 : vector<2x128xf32>
    %cst_50 = arith.constant 5.000000e-01 : f32
    %112 = vector.broadcast %cst_50 : f32 to vector<2x128xf32>
    %113 = arith.mulf %112, %111 : vector<2x128xf32>
    %114 = vector.extract_strided_slice %97 {offsets = [0, 256], sizes = [2, 128], strides = [1, 1]} : vector<2x512xf32> to vector<2x128xf32>
    %115 = math.tanh %114 : vector<2x128xf32>
    %116 = vector.extract_strided_slice %97 {offsets = [0, 384], sizes = [2, 128], strides = [1, 1]} : vector<2x512xf32> to vector<2x128xf32>
    %cst_51 = arith.constant 5.000000e-01 : f32
    %117 = vector.broadcast %cst_51 : f32 to vector<2x128xf32>
    %118 = arith.mulf %117, %116 : vector<2x128xf32>
    %119 = math.tanh %118 : vector<2x128xf32>
    %cst_52 = arith.constant 1.000000e+00 : f32
    %120 = vector.broadcast %cst_52 : f32 to vector<2x128xf32>
    %121 = arith.addf %119, %120 : vector<2x128xf32>
    %cst_53 = arith.constant 5.000000e-01 : f32
    %122 = vector.broadcast %cst_53 : f32 to vector<2x128xf32>
    %123 = arith.mulf %122, %121 : vector<2x128xf32>
    %124 = arith.mulf %113, %87 : vector<2x128xf32>
    %125 = arith.mulf %105, %115 : vector<2x128xf32>
    %126 = arith.addf %124, %125 : vector<2x128xf32>
    %127 = math.tanh %126 : vector<2x128xf32>
    %128 = arith.mulf %123, %127 : vector<2x128xf32>
    %c2_54 = arith.constant 2 : index
    %c0_55 = arith.constant 0 : index
    %c0_56 = arith.constant 0 : index
    %129 = vector.load %arg16[%c2_54, %c0_55, %c0_56] : memref<8x2x128xf32, #tpu.memory_space<vmem>>, vector<1x2x128xf32>
    %130 = vector.shape_cast %129 : vector<1x2x128xf32> to vector<2x128xf32>
    %131 = vector.shape_cast %128 : vector<2x128xf32> to vector<1x2x128xf32>
    tpu.vector_store %arg16[%c2_54, %c0_55, %c0_56], %131 {strides = array<i32>} : memref<8x2x128xf32, #tpu.memory_space<vmem>>, vector<1x2x128xf32>,
    %c3 = arith.constant 3 : index
    %c0_57 = arith.constant 0 : index
    %c0_58 = arith.constant 0 : index
    %132 = vector.load %arg15[%c3, %c0_57, %c0_58] : memref<8x2x512xf32, #tpu.memory_space<vmem>>, vector<1x2x512xf32>
    %133 = vector.shape_cast %132 : vector<1x2x512xf32> to vector<2x512xf32>
    %134 = arith.truncf %128 : vector<2x128xf32> to vector<2x128xbf16>
    %cst_59 = arith.constant dense<0.000000e+00> : vector<2x512xf32>
    %135 = tpu.matmul %134, %1, %cst_59 {dimension_numbers = #tpu.dot_dimension_numbers<[1], [0], [0], [1], [0, 0, 1, 1], [], []>} : vector<2x128xbf16>, vector<128x512xbf16>, vector<2x512xf32> -> vector<2x512xf32>
    %136 = arith.addf %133, %135 : vector<2x512xf32>
    %137 = vector.extract_strided_slice %136 {offsets = [0, 0], sizes = [2, 128], strides = [1, 1]} : vector<2x512xf32> to vector<2x128xf32>
    %cst_60 = arith.constant 5.000000e-01 : f32
    %138 = vector.broadcast %cst_60 : f32 to vector<2x128xf32>
    %139 = arith.mulf %138, %137 : vector<2x128xf32>
    %140 = math.tanh %139 : vector<2x128xf32>
    %cst_61 = arith.constant 1.000000e+00 : f32
    %141 = vector.broadcast %cst_61 : f32 to vector<2x128xf32>
    %142 = arith.addf %140, %141 : vector<2x128xf32>
    %cst_62 = arith.constant 5.000000e-01 : f32
    %143 = vector.broadcast %cst_62 : f32 to vector<2x128xf32>
    %144 = arith.mulf %143, %142 : vector<2x128xf32>
    %145 = vector.extract_strided_slice %136 {offsets = [0, 128], sizes = [2, 128], strides = [1, 1]} : vector<2x512xf32> to vector<2x128xf32>
    %cst_63 = arith.constant 5.000000e-01 : f32
    %146 = vector.broadcast %cst_63 : f32 to vector<2x128xf32>
    %147 = arith.mulf %146, %145 : vector<2x128xf32>
    %148 = math.tanh %147 : vector<2x128xf32>
    %cst_64 = arith.constant 1.000000e+00 : f32
    %149 = vector.broadcast %cst_64 : f32 to vector<2x128xf32>
    %150 = arith.addf %148, %149 : vector<2x128xf32>
    %cst_65 = arith.constant 5.000000e-01 : f32
    %151 = vector.broadcast %cst_65 : f32 to vector<2x128xf32>
    %152 = arith.mulf %151, %150 : vector<2x128xf32>
    %153 = vector.extract_strided_slice %136 {offsets = [0, 256], sizes = [2, 128], strides = [1, 1]} : vector<2x512xf32> to vector<2x128xf32>
    %154 = math.tanh %153 : vector<2x128xf32>
    %155 = vector.extract_strided_slice %136 {offsets = [0, 384], sizes = [2, 128], strides = [1, 1]} : vector<2x512xf32> to vector<2x128xf32>
    %cst_66 = arith.constant 5.000000e-01 : f32
    %156 = vector.broadcast %cst_66 : f32 to vector<2x128xf32>
    %157 = arith.mulf %156, %155 : vector<2x128xf32>
    %158 = math.tanh %157 : vector<2x128xf32>
    %cst_67 = arith.constant 1.000000e+00 : f32
    %159 = vector.broadcast %cst_67 : f32 to vector<2x128xf32>
    %160 = arith.addf %158, %159 : vector<2x128xf32>
    %cst_68 = arith.constant 5.000000e-01 : f32
    %161 = vector.broadcast %cst_68 : f32 to vector<2x128xf32>
    %162 = arith.mulf %161, %160 : vector<2x128xf32>
    %163 = arith.mulf %152, %126 : vector<2x128xf32>
    %164 = arith.mulf %144, %154 : vector<2x128xf32>
    %165 = arith.addf %163, %164 : vector<2x128xf32>
    %166 = math.tanh %165 : vector<2x128xf32>
    %167 = arith.mulf %162, %166 : vector<2x128xf32>
    %c3_69 = arith.constant 3 : index
    %c0_70 = arith.constant 0 : index
    %c0_71 = arith.constant 0 : index
    %168 = vector.load %arg16[%c3_69, %c0_70, %c0_71] : memref<8x2x128xf32, #tpu.memory_space<vmem>>, vector<1x2x128xf32>
    %169 = vector.shape_cast %168 : vector<1x2x128xf32> to vector<2x128xf32>
    %170 = vector.shape_cast %167 : vector<2x128xf32> to vector<1x2x128xf32>
    tpu.vector_store %arg16[%c3_69, %c0_70, %c0_71], %170 {strides = array<i32>} : memref<8x2x128xf32, #tpu.memory_space<vmem>>, vector<1x2x128xf32>,
    %c4 = arith.constant 4 : index
    %c0_72 = arith.constant 0 : index
    %c0_73 = arith.constant 0 : index
    %171 = vector.load %arg15[%c4, %c0_72, %c0_73] : memref<8x2x512xf32, #tpu.memory_space<vmem>>, vector<1x2x512xf32>
    %172 = vector.shape_cast %171 : vector<1x2x512xf32> to vector<2x512xf32>
    %173 = arith.truncf %167 : vector<2x128xf32> to vector<2x128xbf16>
    %cst_74 = arith.constant dense<0.000000e+00> : vector<2x512xf32>
    %174 = tpu.matmul %173, %1, %cst_74 {dimension_numbers = #tpu.dot_dimension_numbers<[1], [0], [0], [1], [0, 0, 1, 1], [], []>} : vector<2x128xbf16>, vector<128x512xbf16>, vector<2x512xf32> -> vector<2x512xf32>
    %175 = arith.addf %172, %174 : vector<2x512xf32>
    %176 = vector.extract_strided_slice %175 {offsets = [0, 0], sizes = [2, 128], strides = [1, 1]} : vector<2x512xf32> to vector<2x128xf32>
    %cst_75 = arith.constant 5.000000e-01 : f32
    %177 = vector.broadcast %cst_75 : f32 to vector<2x128xf32>
    %178 = arith.mulf %177, %176 : vector<2x128xf32>
    %179 = math.tanh %178 : vector<2x128xf32>
    %cst_76 = arith.constant 1.000000e+00 : f32
    %180 = vector.broadcast %cst_76 : f32 to vector<2x128xf32>
    %181 = arith.addf %179, %180 : vector<2x128xf32>
    %cst_77 = arith.constant 5.000000e-01 : f32
    %182 = vector.broadcast %cst_77 : f32 to vector<2x128xf32>
    %183 = arith.mulf %182, %181 : vector<2x128xf32>
    %184 = vector.extract_strided_slice %175 {offsets = [0, 128], sizes = [2, 128], strides = [1, 1]} : vector<2x512xf32> to vector<2x128xf32>
    %cst_78 = arith.constant 5.000000e-01 : f32
    %185 = vector.broadcast %cst_78 : f32 to vector<2x128xf32>
    %186 = arith.mulf %185, %184 : vector<2x128xf32>
    %187 = math.tanh %186 : vector<2x128xf32>
    %cst_79 = arith.constant 1.000000e+00 : f32
    %188 = vector.broadcast %cst_79 : f32 to vector<2x128xf32>
    %189 = arith.addf %187, %188 : vector<2x128xf32>
    %cst_80 = arith.constant 5.000000e-01 : f32
    %190 = vector.broadcast %cst_80 : f32 to vector<2x128xf32>
    %191 = arith.mulf %190, %189 : vector<2x128xf32>
    %192 = vector.extract_strided_slice %175 {offsets = [0, 256], sizes = [2, 128], strides = [1, 1]} : vector<2x512xf32> to vector<2x128xf32>
    %193 = math.tanh %192 : vector<2x128xf32>
    %194 = vector.extract_strided_slice %175 {offsets = [0, 384], sizes = [2, 128], strides = [1, 1]} : vector<2x512xf32> to vector<2x128xf32>
    %cst_81 = arith.constant 5.000000e-01 : f32
    %195 = vector.broadcast %cst_81 : f32 to vector<2x128xf32>
    %196 = arith.mulf %195, %194 : vector<2x128xf32>
    %197 = math.tanh %196 : vector<2x128xf32>
    %cst_82 = arith.constant 1.000000e+00 : f32
    %198 = vector.broadcast %cst_82 : f32 to vector<2x128xf32>
    %199 = arith.addf %197, %198 : vector<2x128xf32>
    %cst_83 = arith.constant 5.000000e-01 : f32
    %200 = vector.broadcast %cst_83 : f32 to vector<2x128xf32>
    %201 = arith.mulf %200, %199 : vector<2x128xf32>
    %202 = arith.mulf %191, %165 : vector<2x128xf32>
    %203 = arith.mulf %183, %193 : vector<2x128xf32>
    %204 = arith.addf %202, %203 : vector<2x128xf32>
    %205 = math.tanh %204 : vector<2x128xf32>
    %206 = arith.mulf %201, %205 : vector<2x128xf32>
    %c4_84 = arith.constant 4 : index
    %c0_85 = arith.constant 0 : index
    %c0_86 = arith.constant 0 : index
    %207 = vector.load %arg16[%c4_84, %c0_85, %c0_86] : memref<8x2x128xf32, #tpu.memory_space<vmem>>, vector<1x2x128xf32>
    %208 = vector.shape_cast %207 : vector<1x2x128xf32> to vector<2x128xf32>
    %209 = vector.shape_cast %206 : vector<2x128xf32> to vector<1x2x128xf32>
    tpu.vector_store %arg16[%c4_84, %c0_85, %c0_86], %209 {strides = array<i32>} : memref<8x2x128xf32, #tpu.memory_space<vmem>>, vector<1x2x128xf32>,
    %c5 = arith.constant 5 : index
    %c0_87 = arith.constant 0 : index
    %c0_88 = arith.constant 0 : index
    %210 = vector.load %arg15[%c5, %c0_87, %c0_88] : memref<8x2x512xf32, #tpu.memory_space<vmem>>, vector<1x2x512xf32>
    %211 = vector.shape_cast %210 : vector<1x2x512xf32> to vector<2x512xf32>
    %212 = arith.truncf %206 : vector<2x128xf32> to vector<2x128xbf16>
    %cst_89 = arith.constant dense<0.000000e+00> : vector<2x512xf32>
    %213 = tpu.matmul %212, %1, %cst_89 {dimension_numbers = #tpu.dot_dimension_numbers<[1], [0], [0], [1], [0, 0, 1, 1], [], []>} : vector<2x128xbf16>, vector<128x512xbf16>, vector<2x512xf32> -> vector<2x512xf32>
    %214 = arith.addf %211, %213 : vector<2x512xf32>
    %215 = vector.extract_strided_slice %214 {offsets = [0, 0], sizes = [2, 128], strides = [1, 1]} : vector<2x512xf32> to vector<2x128xf32>
    %cst_90 = arith.constant 5.000000e-01 : f32
    %216 = vector.broadcast %cst_90 : f32 to vector<2x128xf32>
    %217 = arith.mulf %216, %215 : vector<2x128xf32>
    %218 = math.tanh %217 : vector<2x128xf32>
    %cst_91 = arith.constant 1.000000e+00 : f32
    %219 = vector.broadcast %cst_91 : f32 to vector<2x128xf32>
    %220 = arith.addf %218, %219 : vector<2x128xf32>
    %cst_92 = arith.constant 5.000000e-01 : f32
    %221 = vector.broadcast %cst_92 : f32 to vector<2x128xf32>
    %222 = arith.mulf %221, %220 : vector<2x128xf32>
    %223 = vector.extract_strided_slice %214 {offsets = [0, 128], sizes = [2, 128], strides = [1, 1]} : vector<2x512xf32> to vector<2x128xf32>
    %cst_93 = arith.constant 5.000000e-01 : f32
    %224 = vector.broadcast %cst_93 : f32 to vector<2x128xf32>
    %225 = arith.mulf %224, %223 : vector<2x128xf32>
    %226 = math.tanh %225 : vector<2x128xf32>
    %cst_94 = arith.constant 1.000000e+00 : f32
    %227 = vector.broadcast %cst_94 : f32 to vector<2x128xf32>
    %228 = arith.addf %226, %227 : vector<2x128xf32>
    %cst_95 = arith.constant 5.000000e-01 : f32
    %229 = vector.broadcast %cst_95 : f32 to vector<2x128xf32>
    %230 = arith.mulf %229, %228 : vector<2x128xf32>
    %231 = vector.extract_strided_slice %214 {offsets = [0, 256], sizes = [2, 128], strides = [1, 1]} : vector<2x512xf32> to vector<2x128xf32>
    %232 = math.tanh %231 : vector<2x128xf32>
    %233 = vector.extract_strided_slice %214 {offsets = [0, 384], sizes = [2, 128], strides = [1, 1]} : vector<2x512xf32> to vector<2x128xf32>
    %cst_96 = arith.constant 5.000000e-01 : f32
    %234 = vector.broadcast %cst_96 : f32 to vector<2x128xf32>
    %235 = arith.mulf %234, %233 : vector<2x128xf32>
    %236 = math.tanh %235 : vector<2x128xf32>
    %cst_97 = arith.constant 1.000000e+00 : f32
    %237 = vector.broadcast %cst_97 : f32 to vector<2x128xf32>
    %238 = arith.addf %236, %237 : vector<2x128xf32>
    %cst_98 = arith.constant 5.000000e-01 : f32
    %239 = vector.broadcast %cst_98 : f32 to vector<2x128xf32>
    %240 = arith.mulf %239, %238 : vector<2x128xf32>
    %241 = arith.mulf %230, %204 : vector<2x128xf32>
    %242 = arith.mulf %222, %232 : vector<2x128xf32>
    %243 = arith.addf %241, %242 : vector<2x128xf32>
    %244 = math.tanh %243 : vector<2x128xf32>
    %245 = arith.mulf %240, %244 : vector<2x128xf32>
    %c5_99 = arith.constant 5 : index
    %c0_100 = arith.constant 0 : index
    %c0_101 = arith.constant 0 : index
    %246 = vector.load %arg16[%c5_99, %c0_100, %c0_101] : memref<8x2x128xf32, #tpu.memory_space<vmem>>, vector<1x2x128xf32>
    %247 = vector.shape_cast %246 : vector<1x2x128xf32> to vector<2x128xf32>
    %248 = vector.shape_cast %245 : vector<2x128xf32> to vector<1x2x128xf32>
    tpu.vector_store %arg16[%c5_99, %c0_100, %c0_101], %248 {strides = array<i32>} : memref<8x2x128xf32, #tpu.memory_space<vmem>>, vector<1x2x128xf32>,
    %c6 = arith.constant 6 : index
    %c0_102 = arith.constant 0 : index
    %c0_103 = arith.constant 0 : index
    %249 = vector.load %arg15[%c6, %c0_102, %c0_103] : memref<8x2x512xf32, #tpu.memory_space<vmem>>, vector<1x2x512xf32>
    %250 = vector.shape_cast %249 : vector<1x2x512xf32> to vector<2x512xf32>
    %251 = arith.truncf %245 : vector<2x128xf32> to vector<2x128xbf16>
    %cst_104 = arith.constant dense<0.000000e+00> : vector<2x512xf32>
    %252 = tpu.matmul %251, %1, %cst_104 {dimension_numbers = #tpu.dot_dimension_numbers<[1], [0], [0], [1], [0, 0, 1, 1], [], []>} : vector<2x128xbf16>, vector<128x512xbf16>, vector<2x512xf32> -> vector<2x512xf32>
    %253 = arith.addf %250, %252 : vector<2x512xf32>
    %254 = vector.extract_strided_slice %253 {offsets = [0, 0], sizes = [2, 128], strides = [1, 1]} : vector<2x512xf32> to vector<2x128xf32>
    %cst_105 = arith.constant 5.000000e-01 : f32
    %255 = vector.broadcast %cst_105 : f32 to vector<2x128xf32>
    %256 = arith.mulf %255, %254 : vector<2x128xf32>
    %257 = math.tanh %256 : vector<2x128xf32>
    %cst_106 = arith.constant 1.000000e+00 : f32
    %258 = vector.broadcast %cst_106 : f32 to vector<2x128xf32>
    %259 = arith.addf %257, %258 : vector<2x128xf32>
    %cst_107 = arith.constant 5.000000e-01 : f32
    %260 = vector.broadcast %cst_107 : f32 to vector<2x128xf32>
    %261 = arith.mulf %260, %259 : vector<2x128xf32>
    %262 = vector.extract_strided_slice %253 {offsets = [0, 128], sizes = [2, 128], strides = [1, 1]} : vector<2x512xf32> to vector<2x128xf32>
    %cst_108 = arith.constant 5.000000e-01 : f32
    %263 = vector.broadcast %cst_108 : f32 to vector<2x128xf32>
    %264 = arith.mulf %263, %262 : vector<2x128xf32>
    %265 = math.tanh %264 : vector<2x128xf32>
    %cst_109 = arith.constant 1.000000e+00 : f32
    %266 = vector.broadcast %cst_109 : f32 to vector<2x128xf32>
    %267 = arith.addf %265, %266 : vector<2x128xf32>
    %cst_110 = arith.constant 5.000000e-01 : f32
    %268 = vector.broadcast %cst_110 : f32 to vector<2x128xf32>
    %269 = arith.mulf %268, %267 : vector<2x128xf32>
    %270 = vector.extract_strided_slice %253 {offsets = [0, 256], sizes = [2, 128], strides = [1, 1]} : vector<2x512xf32> to vector<2x128xf32>
    %271 = math.tanh %270 : vector<2x128xf32>
    %272 = vector.extract_strided_slice %253 {offsets = [0, 384], sizes = [2, 128], strides = [1, 1]} : vector<2x512xf32> to vector<2x128xf32>
    %cst_111 = arith.constant 5.000000e-01 : f32
    %273 = vector.broadcast %cst_111 : f32 to vector<2x128xf32>
    %274 = arith.mulf %273, %272 : vector<2x128xf32>
    %275 = math.tanh %274 : vector<2x128xf32>
    %cst_112 = arith.constant 1.000000e+00 : f32
    %276 = vector.broadcast %cst_112 : f32 to vector<2x128xf32>
    %277 = arith.addf %275, %276 : vector<2x128xf32>
    %cst_113 = arith.constant 5.000000e-01 : f32
    %278 = vector.broadcast %cst_113 : f32 to vector<2x128xf32>
    %279 = arith.mulf %278, %277 : vector<2x128xf32>
    %280 = arith.mulf %269, %243 : vector<2x128xf32>
    %281 = arith.mulf %261, %271 : vector<2x128xf32>
    %282 = arith.addf %280, %281 : vector<2x128xf32>
    %283 = math.tanh %282 : vector<2x128xf32>
    %284 = arith.mulf %279, %283 : vector<2x128xf32>
    %c6_114 = arith.constant 6 : index
    %c0_115 = arith.constant 0 : index
    %c0_116 = arith.constant 0 : index
    %285 = vector.load %arg16[%c6_114, %c0_115, %c0_116] : memref<8x2x128xf32, #tpu.memory_space<vmem>>, vector<1x2x128xf32>
    %286 = vector.shape_cast %285 : vector<1x2x128xf32> to vector<2x128xf32>
    %287 = vector.shape_cast %284 : vector<2x128xf32> to vector<1x2x128xf32>
    tpu.vector_store %arg16[%c6_114, %c0_115, %c0_116], %287 {strides = array<i32>} : memref<8x2x128xf32, #tpu.memory_space<vmem>>, vector<1x2x128xf32>,
    %c7 = arith.constant 7 : index
    %c0_117 = arith.constant 0 : index
    %c0_118 = arith.constant 0 : index
    %288 = vector.load %arg15[%c7, %c0_117, %c0_118] : memref<8x2x512xf32, #tpu.memory_space<vmem>>, vector<1x2x512xf32>
    %289 = vector.shape_cast %288 : vector<1x2x512xf32> to vector<2x512xf32>
    %290 = arith.truncf %284 : vector<2x128xf32> to vector<2x128xbf16>
    %cst_119 = arith.constant dense<0.000000e+00> : vector<2x512xf32>
    %291 = tpu.matmul %290, %1, %cst_119 {dimension_numbers = #tpu.dot_dimension_numbers<[1], [0], [0], [1], [0, 0, 1, 1], [], []>} : vector<2x128xbf16>, vector<128x512xbf16>, vector<2x512xf32> -> vector<2x512xf32>
    %292 = arith.addf %289, %291 : vector<2x512xf32>
    %293 = vector.extract_strided_slice %292 {offsets = [0, 0], sizes = [2, 128], strides = [1, 1]} : vector<2x512xf32> to vector<2x128xf32>
    %cst_120 = arith.constant 5.000000e-01 : f32
    %294 = vector.broadcast %cst_120 : f32 to vector<2x128xf32>
    %295 = arith.mulf %294, %293 : vector<2x128xf32>
    %296 = math.tanh %295 : vector<2x128xf32>
    %cst_121 = arith.constant 1.000000e+00 : f32
    %297 = vector.broadcast %cst_121 : f32 to vector<2x128xf32>
    %298 = arith.addf %296, %297 : vector<2x128xf32>
    %cst_122 = arith.constant 5.000000e-01 : f32
    %299 = vector.broadcast %cst_122 : f32 to vector<2x128xf32>
    %300 = arith.mulf %299, %298 : vector<2x128xf32>
    %301 = vector.extract_strided_slice %292 {offsets = [0, 128], sizes = [2, 128], strides = [1, 1]} : vector<2x512xf32> to vector<2x128xf32>
    %cst_123 = arith.constant 5.000000e-01 : f32
    %302 = vector.broadcast %cst_123 : f32 to vector<2x128xf32>
    %303 = arith.mulf %302, %301 : vector<2x128xf32>
    %304 = math.tanh %303 : vector<2x128xf32>
    %cst_124 = arith.constant 1.000000e+00 : f32
    %305 = vector.broadcast %cst_124 : f32 to vector<2x128xf32>
    %306 = arith.addf %304, %305 : vector<2x128xf32>
    %cst_125 = arith.constant 5.000000e-01 : f32
    %307 = vector.broadcast %cst_125 : f32 to vector<2x128xf32>
    %308 = arith.mulf %307, %306 : vector<2x128xf32>
    %309 = vector.extract_strided_slice %292 {offsets = [0, 256], sizes = [2, 128], strides = [1, 1]} : vector<2x512xf32> to vector<2x128xf32>
    %310 = math.tanh %309 : vector<2x128xf32>
    %311 = vector.extract_strided_slice %292 {offsets = [0, 384], sizes = [2, 128], strides = [1, 1]} : vector<2x512xf32> to vector<2x128xf32>
    %cst_126 = arith.constant 5.000000e-01 : f32
    %312 = vector.broadcast %cst_126 : f32 to vector<2x128xf32>
    %313 = arith.mulf %312, %311 : vector<2x128xf32>
    %314 = math.tanh %313 : vector<2x128xf32>
    %cst_127 = arith.constant 1.000000e+00 : f32
    %315 = vector.broadcast %cst_127 : f32 to vector<2x128xf32>
    %316 = arith.addf %314, %315 : vector<2x128xf32>
    %cst_128 = arith.constant 5.000000e-01 : f32
    %317 = vector.broadcast %cst_128 : f32 to vector<2x128xf32>
    %318 = arith.mulf %317, %316 : vector<2x128xf32>
    %319 = arith.mulf %308, %282 : vector<2x128xf32>
    %320 = arith.mulf %300, %310 : vector<2x128xf32>
    %321 = arith.addf %319, %320 : vector<2x128xf32>
    %322 = math.tanh %321 : vector<2x128xf32>
    %323 = arith.mulf %318, %322 : vector<2x128xf32>
    %c7_129 = arith.constant 7 : index
    %c0_130 = arith.constant 0 : index
    %c0_131 = arith.constant 0 : index
    %324 = vector.load %arg16[%c7_129, %c0_130, %c0_131] : memref<8x2x128xf32, #tpu.memory_space<vmem>>, vector<1x2x128xf32>
    %325 = vector.shape_cast %324 : vector<1x2x128xf32> to vector<2x128xf32>
    %326 = vector.shape_cast %323 : vector<2x128xf32> to vector<1x2x128xf32>
    tpu.vector_store %arg16[%c7_129, %c0_130, %c0_131], %326 {strides = array<i32>} : memref<8x2x128xf32, #tpu.memory_space<vmem>>, vector<1x2x128xf32>,
    %c0_132 = arith.constant 0 : index
    %c0_133 = arith.constant 0 : index
    %c0_134 = arith.constant 0 : index
    %327 = vector.load %arg13[%c0_132, %c0_133, %c0_134] : memref<2x2x128xf32, #tpu.memory_space<vmem>>, vector<1x2x128xf32>
    %328 = vector.shape_cast %327 : vector<1x2x128xf32> to vector<2x128xf32>
    %329 = vector.shape_cast %323 : vector<2x128xf32> to vector<1x2x128xf32>
    tpu.vector_store %arg13[%c0_132, %c0_133, %c0_134], %329 {strides = array<i32>} : memref<2x2x128xf32, #tpu.memory_space<vmem>>, vector<1x2x128xf32>,
    %c0_135 = arith.constant 0 : index
    %c0_136 = arith.constant 0 : index
    %c0_137 = arith.constant 0 : index
    %330 = vector.load %arg14[%c0_135, %c0_136, %c0_137] : memref<2x2x128xf32, #tpu.memory_space<vmem>>, vector<1x2x128xf32>
    %331 = vector.shape_cast %330 : vector<1x2x128xf32> to vector<2x128xf32>
    %332 = vector.shape_cast %321 : vector<2x128xf32> to vector<1x2x128xf32>
    tpu.vector_store %arg14[%c0_135, %c0_136, %c0_137], %332 {strides = array<i32>} : memref<2x2x128xf32, #tpu.memory_space<vmem>>, vector<1x2x128xf32>,
    %c0_138 = arith.constant 0 : index
    %c0_139 = arith.constant 0 : index
    %333 = vector.load %arg5[%c0_138, %c0_139] : memref<128x512xbf16, #tpu.memory_space<vmem>>, vector<128x512xbf16>
    %c0_140 = arith.constant 0 : index
    %c0_141 = arith.constant 0 : index
    %334 = vector.load %arg6[%c0_140, %c0_141] : memref<128x512xbf16, #tpu.memory_space<vmem>>, vector<128x512xbf16>
    %c0_142 = arith.constant 0 : index
    %c0_143 = arith.constant 0 : index
    %335 = vector.load %arg7[%c0_142, %c0_143] : memref<1x512xf32, #tpu.memory_space<vmem>>, vector<1x512xf32>
    %c0_144 = arith.constant 0 : index
    %c0_145 = arith.constant 0 : index
    %c0_146 = arith.constant 0 : index
    %336 = vector.load %arg16[%c0_144, %c0_145, %c0_146] : memref<8x2x128xf32, #tpu.memory_space<vmem>>, vector<8x2x128xf32>
    %337 = vector.shape_cast %336 : vector<8x2x128xf32> to vector<16x128xf32>
    %338 = arith.truncf %337 : vector<16x128xf32> to vector<16x128xbf16>
    %cst_147 = arith.constant dense<0.000000e+00> : vector<16x512xf32>
    %339 = tpu.matmul %338, %333, %cst_147 {dimension_numbers = #tpu.dot_dimension_numbers<[1], [0], [0], [1], [0, 0, 1, 1], [], []>} : vector<16x128xbf16>, vector<128x512xbf16>, vector<16x512xf32> -> vector<16x512xf32>
    %340 = vector.shape_cast %339 : vector<16x512xf32> to vector<8x2x512xf32>
    %341 = vector.shape_cast %335 : vector<1x512xf32> to vector<1x1x512xf32>
    %342 = vector.broadcast %341 : vector<1x1x512xf32> to vector<8x2x512xf32>
    %343 = arith.addf %340, %342 : vector<8x2x512xf32>
    %c0_148 = arith.constant 0 : index
    %c0_149 = arith.constant 0 : index
    %c0_150 = arith.constant 0 : index
    %344 = vector.load %arg15[%c0_148, %c0_149, %c0_150] : memref<8x2x512xf32, #tpu.memory_space<vmem>>, vector<8x2x512xf32>
    tpu.vector_store %arg15[%c0_148, %c0_149, %c0_150], %343 {strides = array<i32>} : memref<8x2x512xf32, #tpu.memory_space<vmem>>, vector<8x2x512xf32>,
    %cst_151 = arith.constant 0.000000e+00 : f32
    %345 = vector.broadcast %cst_151 : f32 to vector<2x128xf32>
    %cst_152 = arith.constant 0.000000e+00 : f32
    %346 = vector.broadcast %cst_152 : f32 to vector<2x128xf32>
    %c0_153 = arith.constant 0 : index
    %c0_154 = arith.constant 0 : index
    %c0_155 = arith.constant 0 : index
    %347 = vector.load %arg15[%c0_153, %c0_154, %c0_155] : memref<8x2x512xf32, #tpu.memory_space<vmem>>, vector<1x2x512xf32>
    %348 = vector.shape_cast %347 : vector<1x2x512xf32> to vector<2x512xf32>
    %349 = arith.truncf %345 : vector<2x128xf32> to vector<2x128xbf16>
    %cst_156 = arith.constant dense<0.000000e+00> : vector<2x512xf32>
    %350 = tpu.matmul %349, %334, %cst_156 {dimension_numbers = #tpu.dot_dimension_numbers<[1], [0], [0], [1], [0, 0, 1, 1], [], []>} : vector<2x128xbf16>, vector<128x512xbf16>, vector<2x512xf32> -> vector<2x512xf32>
    %351 = arith.addf %348, %350 : vector<2x512xf32>
    %352 = vector.extract_strided_slice %351 {offsets = [0, 0], sizes = [2, 128], strides = [1, 1]} : vector<2x512xf32> to vector<2x128xf32>
    %cst_157 = arith.constant 5.000000e-01 : f32
    %353 = vector.broadcast %cst_157 : f32 to vector<2x128xf32>
    %354 = arith.mulf %353, %352 : vector<2x128xf32>
    %355 = math.tanh %354 : vector<2x128xf32>
    %cst_158 = arith.constant 1.000000e+00 : f32
    %356 = vector.broadcast %cst_158 : f32 to vector<2x128xf32>
    %357 = arith.addf %355, %356 : vector<2x128xf32>
    %cst_159 = arith.constant 5.000000e-01 : f32
    %358 = vector.broadcast %cst_159 : f32 to vector<2x128xf32>
    %359 = arith.mulf %358, %357 : vector<2x128xf32>
    %360 = vector.extract_strided_slice %351 {offsets = [0, 128], sizes = [2, 128], strides = [1, 1]} : vector<2x512xf32> to vector<2x128xf32>
    %cst_160 = arith.constant 5.000000e-01 : f32
    %361 = vector.broadcast %cst_160 : f32 to vector<2x128xf32>
    %362 = arith.mulf %361, %360 : vector<2x128xf32>
    %363 = math.tanh %362 : vector<2x128xf32>
    %cst_161 = arith.constant 1.000000e+00 : f32
    %364 = vector.broadcast %cst_161 : f32 to vector<2x128xf32>
    %365 = arith.addf %363, %364 : vector<2x128xf32>
    %cst_162 = arith.constant 5.000000e-01 : f32
    %366 = vector.broadcast %cst_162 : f32 to vector<2x128xf32>
    %367 = arith.mulf %366, %365 : vector<2x128xf32>
    %368 = vector.extract_strided_slice %351 {offsets = [0, 256], sizes = [2, 128], strides = [1, 1]} : vector<2x512xf32> to vector<2x128xf32>
    %369 = math.tanh %368 : vector<2x128xf32>
    %370 = vector.extract_strided_slice %351 {offsets = [0, 384], sizes = [2, 128], strides = [1, 1]} : vector<2x512xf32> to vector<2x128xf32>
    %cst_163 = arith.constant 5.000000e-01 : f32
    %371 = vector.broadcast %cst_163 : f32 to vector<2x128xf32>
    %372 = arith.mulf %371, %370 : vector<2x128xf32>
    %373 = math.tanh %372 : vector<2x128xf32>
    %cst_164 = arith.constant 1.000000e+00 : f32
    %374 = vector.broadcast %cst_164 : f32 to vector<2x128xf32>
    %375 = arith.addf %373, %374 : vector<2x128xf32>
    %cst_165 = arith.constant 5.000000e-01 : f32
    %376 = vector.broadcast %cst_165 : f32 to vector<2x128xf32>
    %377 = arith.mulf %376, %375 : vector<2x128xf32>
    %378 = arith.mulf %367, %346 : vector<2x128xf32>
    %379 = arith.mulf %359, %369 : vector<2x128xf32>
    %380 = arith.addf %378, %379 : vector<2x128xf32>
    %381 = math.tanh %380 : vector<2x128xf32>
    %382 = arith.mulf %377, %381 : vector<2x128xf32>
    %c1_166 = arith.constant 1 : index
    %c0_167 = arith.constant 0 : index
    %c0_168 = arith.constant 0 : index
    %383 = vector.load %arg15[%c1_166, %c0_167, %c0_168] : memref<8x2x512xf32, #tpu.memory_space<vmem>>, vector<1x2x512xf32>
    %384 = vector.shape_cast %383 : vector<1x2x512xf32> to vector<2x512xf32>
    %385 = arith.truncf %382 : vector<2x128xf32> to vector<2x128xbf16>
    %cst_169 = arith.constant dense<0.000000e+00> : vector<2x512xf32>
    %386 = tpu.matmul %385, %334, %cst_169 {dimension_numbers = #tpu.dot_dimension_numbers<[1], [0], [0], [1], [0, 0, 1, 1], [], []>} : vector<2x128xbf16>, vector<128x512xbf16>, vector<2x512xf32> -> vector<2x512xf32>
    %387 = arith.addf %384, %386 : vector<2x512xf32>
    %388 = vector.extract_strided_slice %387 {offsets = [0, 0], sizes = [2, 128], strides = [1, 1]} : vector<2x512xf32> to vector<2x128xf32>
    %cst_170 = arith.constant 5.000000e-01 : f32
    %389 = vector.broadcast %cst_170 : f32 to vector<2x128xf32>
    %390 = arith.mulf %389, %388 : vector<2x128xf32>
    %391 = math.tanh %390 : vector<2x128xf32>
    %cst_171 = arith.constant 1.000000e+00 : f32
    %392 = vector.broadcast %cst_171 : f32 to vector<2x128xf32>
    %393 = arith.addf %391, %392 : vector<2x128xf32>
    %cst_172 = arith.constant 5.000000e-01 : f32
    %394 = vector.broadcast %cst_172 : f32 to vector<2x128xf32>
    %395 = arith.mulf %394, %393 : vector<2x128xf32>
    %396 = vector.extract_strided_slice %387 {offsets = [0, 128], sizes = [2, 128], strides = [1, 1]} : vector<2x512xf32> to vector<2x128xf32>
    %cst_173 = arith.constant 5.000000e-01 : f32
    %397 = vector.broadcast %cst_173 : f32 to vector<2x128xf32>
    %398 = arith.mulf %397, %396 : vector<2x128xf32>
    %399 = math.tanh %398 : vector<2x128xf32>
    %cst_174 = arith.constant 1.000000e+00 : f32
    %400 = vector.broadcast %cst_174 : f32 to vector<2x128xf32>
    %401 = arith.addf %399, %400 : vector<2x128xf32>
    %cst_175 = arith.constant 5.000000e-01 : f32
    %402 = vector.broadcast %cst_175 : f32 to vector<2x128xf32>
    %403 = arith.mulf %402, %401 : vector<2x128xf32>
    %404 = vector.extract_strided_slice %387 {offsets = [0, 256], sizes = [2, 128], strides = [1, 1]} : vector<2x512xf32> to vector<2x128xf32>
    %405 = math.tanh %404 : vector<2x128xf32>
    %406 = vector.extract_strided_slice %387 {offsets = [0, 384], sizes = [2, 128], strides = [1, 1]} : vector<2x512xf32> to vector<2x128xf32>
    %cst_176 = arith.constant 5.000000e-01 : f32
    %407 = vector.broadcast %cst_176 : f32 to vector<2x128xf32>
    %408 = arith.mulf %407, %406 : vector<2x128xf32>
    %409 = math.tanh %408 : vector<2x128xf32>
    %cst_177 = arith.constant 1.000000e+00 : f32
    %410 = vector.broadcast %cst_177 : f32 to vector<2x128xf32>
    %411 = arith.addf %409, %410 : vector<2x128xf32>
    %cst_178 = arith.constant 5.000000e-01 : f32
    %412 = vector.broadcast %cst_178 : f32 to vector<2x128xf32>
    %413 = arith.mulf %412, %411 : vector<2x128xf32>
    %414 = arith.mulf %403, %380 : vector<2x128xf32>
    %415 = arith.mulf %395, %405 : vector<2x128xf32>
    %416 = arith.addf %414, %415 : vector<2x128xf32>
    %417 = math.tanh %416 : vector<2x128xf32>
    %418 = arith.mulf %413, %417 : vector<2x128xf32>
    %c2_179 = arith.constant 2 : index
    %c0_180 = arith.constant 0 : index
    %c0_181 = arith.constant 0 : index
    %419 = vector.load %arg15[%c2_179, %c0_180, %c0_181] : memref<8x2x512xf32, #tpu.memory_space<vmem>>, vector<1x2x512xf32>
    %420 = vector.shape_cast %419 : vector<1x2x512xf32> to vector<2x512xf32>
    %421 = arith.truncf %418 : vector<2x128xf32> to vector<2x128xbf16>
    %cst_182 = arith.constant dense<0.000000e+00> : vector<2x512xf32>
    %422 = tpu.matmul %421, %334, %cst_182 {dimension_numbers = #tpu.dot_dimension_numbers<[1], [0], [0], [1], [0, 0, 1, 1], [], []>} : vector<2x128xbf16>, vector<128x512xbf16>, vector<2x512xf32> -> vector<2x512xf32>
    %423 = arith.addf %420, %422 : vector<2x512xf32>
    %424 = vector.extract_strided_slice %423 {offsets = [0, 0], sizes = [2, 128], strides = [1, 1]} : vector<2x512xf32> to vector<2x128xf32>
    %cst_183 = arith.constant 5.000000e-01 : f32
    %425 = vector.broadcast %cst_183 : f32 to vector<2x128xf32>
    %426 = arith.mulf %425, %424 : vector<2x128xf32>
    %427 = math.tanh %426 : vector<2x128xf32>
    %cst_184 = arith.constant 1.000000e+00 : f32
    %428 = vector.broadcast %cst_184 : f32 to vector<2x128xf32>
    %429 = arith.addf %427, %428 : vector<2x128xf32>
    %cst_185 = arith.constant 5.000000e-01 : f32
    %430 = vector.broadcast %cst_185 : f32 to vector<2x128xf32>
    %431 = arith.mulf %430, %429 : vector<2x128xf32>
    %432 = vector.extract_strided_slice %423 {offsets = [0, 128], sizes = [2, 128], strides = [1, 1]} : vector<2x512xf32> to vector<2x128xf32>
    %cst_186 = arith.constant 5.000000e-01 : f32
    %433 = vector.broadcast %cst_186 : f32 to vector<2x128xf32>
    %434 = arith.mulf %433, %432 : vector<2x128xf32>
    %435 = math.tanh %434 : vector<2x128xf32>
    %cst_187 = arith.constant 1.000000e+00 : f32
    %436 = vector.broadcast %cst_187 : f32 to vector<2x128xf32>
    %437 = arith.addf %435, %436 : vector<2x128xf32>
    %cst_188 = arith.constant 5.000000e-01 : f32
    %438 = vector.broadcast %cst_188 : f32 to vector<2x128xf32>
    %439 = arith.mulf %438, %437 : vector<2x128xf32>
    %440 = vector.extract_strided_slice %423 {offsets = [0, 256], sizes = [2, 128], strides = [1, 1]} : vector<2x512xf32> to vector<2x128xf32>
    %441 = math.tanh %440 : vector<2x128xf32>
    %442 = vector.extract_strided_slice %423 {offsets = [0, 384], sizes = [2, 128], strides = [1, 1]} : vector<2x512xf32> to vector<2x128xf32>
    %cst_189 = arith.constant 5.000000e-01 : f32
    %443 = vector.broadcast %cst_189 : f32 to vector<2x128xf32>
    %444 = arith.mulf %443, %442 : vector<2x128xf32>
    %445 = math.tanh %444 : vector<2x128xf32>
    %cst_190 = arith.constant 1.000000e+00 : f32
    %446 = vector.broadcast %cst_190 : f32 to vector<2x128xf32>
    %447 = arith.addf %445, %446 : vector<2x128xf32>
    %cst_191 = arith.constant 5.000000e-01 : f32
    %448 = vector.broadcast %cst_191 : f32 to vector<2x128xf32>
    %449 = arith.mulf %448, %447 : vector<2x128xf32>
    %450 = arith.mulf %439, %416 : vector<2x128xf32>
    %451 = arith.mulf %431, %441 : vector<2x128xf32>
    %452 = arith.addf %450, %451 : vector<2x128xf32>
    %453 = math.tanh %452 : vector<2x128xf32>
    %454 = arith.mulf %449, %453 : vector<2x128xf32>
    %c3_192 = arith.constant 3 : index
    %c0_193 = arith.constant 0 : index
    %c0_194 = arith.constant 0 : index
    %455 = vector.load %arg15[%c3_192, %c0_193, %c0_194] : memref<8x2x512xf32, #tpu.memory_space<vmem>>, vector<1x2x512xf32>
    %456 = vector.shape_cast %455 : vector<1x2x512xf32> to vector<2x512xf32>
    %457 = arith.truncf %454 : vector<2x128xf32> to vector<2x128xbf16>
    %cst_195 = arith.constant dense<0.000000e+00> : vector<2x512xf32>
    %458 = tpu.matmul %457, %334, %cst_195 {dimension_numbers = #tpu.dot_dimension_numbers<[1], [0], [0], [1], [0, 0, 1, 1], [], []>} : vector<2x128xbf16>, vector<128x512xbf16>, vector<2x512xf32> -> vector<2x512xf32>
    %459 = arith.addf %456, %458 : vector<2x512xf32>
    %460 = vector.extract_strided_slice %459 {offsets = [0, 0], sizes = [2, 128], strides = [1, 1]} : vector<2x512xf32> to vector<2x128xf32>
    %cst_196 = arith.constant 5.000000e-01 : f32
    %461 = vector.broadcast %cst_196 : f32 to vector<2x128xf32>
    %462 = arith.mulf %461, %460 : vector<2x128xf32>
    %463 = math.tanh %462 : vector<2x128xf32>
    %cst_197 = arith.constant 1.000000e+00 : f32
    %464 = vector.broadcast %cst_197 : f32 to vector<2x128xf32>
    %465 = arith.addf %463, %464 : vector<2x128xf32>
    %cst_198 = arith.constant 5.000000e-01 : f32
    %466 = vector.broadcast %cst_198 : f32 to vector<2x128xf32>
    %467 = arith.mulf %466, %465 : vector<2x128xf32>
    %468 = vector.extract_strided_slice %459 {offsets = [0, 128], sizes = [2, 128], strides = [1, 1]} : vector<2x512xf32> to vector<2x128xf32>
    %cst_199 = arith.constant 5.000000e-01 : f32
    %469 = vector.broadcast %cst_199 : f32 to vector<2x128xf32>
    %470 = arith.mulf %469, %468 : vector<2x128xf32>
    %471 = math.tanh %470 : vector<2x128xf32>
    %cst_200 = arith.constant 1.000000e+00 : f32
    %472 = vector.broadcast %cst_200 : f32 to vector<2x128xf32>
    %473 = arith.addf %471, %472 : vector<2x128xf32>
    %cst_201 = arith.constant 5.000000e-01 : f32
    %474 = vector.broadcast %cst_201 : f32 to vector<2x128xf32>
    %475 = arith.mulf %474, %473 : vector<2x128xf32>
    %476 = vector.extract_strided_slice %459 {offsets = [0, 256], sizes = [2, 128], strides = [1, 1]} : vector<2x512xf32> to vector<2x128xf32>
    %477 = math.tanh %476 : vector<2x128xf32>
    %478 = vector.extract_strided_slice %459 {offsets = [0, 384], sizes = [2, 128], strides = [1, 1]} : vector<2x512xf32> to vector<2x128xf32>
    %cst_202 = arith.constant 5.000000e-01 : f32
    %479 = vector.broadcast %cst_202 : f32 to vector<2x128xf32>
    %480 = arith.mulf %479, %478 : vector<2x128xf32>
    %481 = math.tanh %480 : vector<2x128xf32>
    %cst_203 = arith.constant 1.000000e+00 : f32
    %482 = vector.broadcast %cst_203 : f32 to vector<2x128xf32>
    %483 = arith.addf %481, %482 : vector<2x128xf32>
    %cst_204 = arith.constant 5.000000e-01 : f32
    %484 = vector.broadcast %cst_204 : f32 to vector<2x128xf32>
    %485 = arith.mulf %484, %483 : vector<2x128xf32>
    %486 = arith.mulf %475, %452 : vector<2x128xf32>
    %487 = arith.mulf %467, %477 : vector<2x128xf32>
    %488 = arith.addf %486, %487 : vector<2x128xf32>
    %489 = math.tanh %488 : vector<2x128xf32>
    %490 = arith.mulf %485, %489 : vector<2x128xf32>
    %c4_205 = arith.constant 4 : index
    %c0_206 = arith.constant 0 : index
    %c0_207 = arith.constant 0 : index
    %491 = vector.load %arg15[%c4_205, %c0_206, %c0_207] : memref<8x2x512xf32, #tpu.memory_space<vmem>>, vector<1x2x512xf32>
    %492 = vector.shape_cast %491 : vector<1x2x512xf32> to vector<2x512xf32>
    %493 = arith.truncf %490 : vector<2x128xf32> to vector<2x128xbf16>
    %cst_208 = arith.constant dense<0.000000e+00> : vector<2x512xf32>
    %494 = tpu.matmul %493, %334, %cst_208 {dimension_numbers = #tpu.dot_dimension_numbers<[1], [0], [0], [1], [0, 0, 1, 1], [], []>} : vector<2x128xbf16>, vector<128x512xbf16>, vector<2x512xf32> -> vector<2x512xf32>
    %495 = arith.addf %492, %494 : vector<2x512xf32>
    %496 = vector.extract_strided_slice %495 {offsets = [0, 0], sizes = [2, 128], strides = [1, 1]} : vector<2x512xf32> to vector<2x128xf32>
    %cst_209 = arith.constant 5.000000e-01 : f32
    %497 = vector.broadcast %cst_209 : f32 to vector<2x128xf32>
    %498 = arith.mulf %497, %496 : vector<2x128xf32>
    %499 = math.tanh %498 : vector<2x128xf32>
    %cst_210 = arith.constant 1.000000e+00 : f32
    %500 = vector.broadcast %cst_210 : f32 to vector<2x128xf32>
    %501 = arith.addf %499, %500 : vector<2x128xf32>
    %cst_211 = arith.constant 5.000000e-01 : f32
    %502 = vector.broadcast %cst_211 : f32 to vector<2x128xf32>
    %503 = arith.mulf %502, %501 : vector<2x128xf32>
    %504 = vector.extract_strided_slice %495 {offsets = [0, 128], sizes = [2, 128], strides = [1, 1]} : vector<2x512xf32> to vector<2x128xf32>
    %cst_212 = arith.constant 5.000000e-01 : f32
    %505 = vector.broadcast %cst_212 : f32 to vector<2x128xf32>
    %506 = arith.mulf %505, %504 : vector<2x128xf32>
    %507 = math.tanh %506 : vector<2x128xf32>
    %cst_213 = arith.constant 1.000000e+00 : f32
    %508 = vector.broadcast %cst_213 : f32 to vector<2x128xf32>
    %509 = arith.addf %507, %508 : vector<2x128xf32>
    %cst_214 = arith.constant 5.000000e-01 : f32
    %510 = vector.broadcast %cst_214 : f32 to vector<2x128xf32>
    %511 = arith.mulf %510, %509 : vector<2x128xf32>
    %512 = vector.extract_strided_slice %495 {offsets = [0, 256], sizes = [2, 128], strides = [1, 1]} : vector<2x512xf32> to vector<2x128xf32>
    %513 = math.tanh %512 : vector<2x128xf32>
    %514 = vector.extract_strided_slice %495 {offsets = [0, 384], sizes = [2, 128], strides = [1, 1]} : vector<2x512xf32> to vector<2x128xf32>
    %cst_215 = arith.constant 5.000000e-01 : f32
    %515 = vector.broadcast %cst_215 : f32 to vector<2x128xf32>
    %516 = arith.mulf %515, %514 : vector<2x128xf32>
    %517 = math.tanh %516 : vector<2x128xf32>
    %cst_216 = arith.constant 1.000000e+00 : f32
    %518 = vector.broadcast %cst_216 : f32 to vector<2x128xf32>
    %519 = arith.addf %517, %518 : vector<2x128xf32>
    %cst_217 = arith.constant 5.000000e-01 : f32
    %520 = vector.broadcast %cst_217 : f32 to vector<2x128xf32>
    %521 = arith.mulf %520, %519 : vector<2x128xf32>
    %522 = arith.mulf %511, %488 : vector<2x128xf32>
    %523 = arith.mulf %503, %513 : vector<2x128xf32>
    %524 = arith.addf %522, %523 : vector<2x128xf32>
    %525 = math.tanh %524 : vector<2x128xf32>
    %526 = arith.mulf %521, %525 : vector<2x128xf32>
    %c5_218 = arith.constant 5 : index
    %c0_219 = arith.constant 0 : index
    %c0_220 = arith.constant 0 : index
    %527 = vector.load %arg15[%c5_218, %c0_219, %c0_220] : memref<8x2x512xf32, #tpu.memory_space<vmem>>, vector<1x2x512xf32>
    %528 = vector.shape_cast %527 : vector<1x2x512xf32> to vector<2x512xf32>
    %529 = arith.truncf %526 : vector<2x128xf32> to vector<2x128xbf16>
    %cst_221 = arith.constant dense<0.000000e+00> : vector<2x512xf32>
    %530 = tpu.matmul %529, %334, %cst_221 {dimension_numbers = #tpu.dot_dimension_numbers<[1], [0], [0], [1], [0, 0, 1, 1], [], []>} : vector<2x128xbf16>, vector<128x512xbf16>, vector<2x512xf32> -> vector<2x512xf32>
    %531 = arith.addf %528, %530 : vector<2x512xf32>
    %532 = vector.extract_strided_slice %531 {offsets = [0, 0], sizes = [2, 128], strides = [1, 1]} : vector<2x512xf32> to vector<2x128xf32>
    %cst_222 = arith.constant 5.000000e-01 : f32
    %533 = vector.broadcast %cst_222 : f32 to vector<2x128xf32>
    %534 = arith.mulf %533, %532 : vector<2x128xf32>
    %535 = math.tanh %534 : vector<2x128xf32>
    %cst_223 = arith.constant 1.000000e+00 : f32
    %536 = vector.broadcast %cst_223 : f32 to vector<2x128xf32>
    %537 = arith.addf %535, %536 : vector<2x128xf32>
    %cst_224 = arith.constant 5.000000e-01 : f32
    %538 = vector.broadcast %cst_224 : f32 to vector<2x128xf32>
    %539 = arith.mulf %538, %537 : vector<2x128xf32>
    %540 = vector.extract_strided_slice %531 {offsets = [0, 128], sizes = [2, 128], strides = [1, 1]} : vector<2x512xf32> to vector<2x128xf32>
    %cst_225 = arith.constant 5.000000e-01 : f32
    %541 = vector.broadcast %cst_225 : f32 to vector<2x128xf32>
    %542 = arith.mulf %541, %540 : vector<2x128xf32>
    %543 = math.tanh %542 : vector<2x128xf32>
    %cst_226 = arith.constant 1.000000e+00 : f32
    %544 = vector.broadcast %cst_226 : f32 to vector<2x128xf32>
    %545 = arith.addf %543, %544 : vector<2x128xf32>
    %cst_227 = arith.constant 5.000000e-01 : f32
    %546 = vector.broadcast %cst_227 : f32 to vector<2x128xf32>
    %547 = arith.mulf %546, %545 : vector<2x128xf32>
    %548 = vector.extract_strided_slice %531 {offsets = [0, 256], sizes = [2, 128], strides = [1, 1]} : vector<2x512xf32> to vector<2x128xf32>
    %549 = math.tanh %548 : vector<2x128xf32>
    %550 = vector.extract_strided_slice %531 {offsets = [0, 384], sizes = [2, 128], strides = [1, 1]} : vector<2x512xf32> to vector<2x128xf32>
    %cst_228 = arith.constant 5.000000e-01 : f32
    %551 = vector.broadcast %cst_228 : f32 to vector<2x128xf32>
    %552 = arith.mulf %551, %550 : vector<2x128xf32>
    %553 = math.tanh %552 : vector<2x128xf32>
    %cst_229 = arith.constant 1.000000e+00 : f32
    %554 = vector.broadcast %cst_229 : f32 to vector<2x128xf32>
    %555 = arith.addf %553, %554 : vector<2x128xf32>
    %cst_230 = arith.constant 5.000000e-01 : f32
    %556 = vector.broadcast %cst_230 : f32 to vector<2x128xf32>
    %557 = arith.mulf %556, %555 : vector<2x128xf32>
    %558 = arith.mulf %547, %524 : vector<2x128xf32>
    %559 = arith.mulf %539, %549 : vector<2x128xf32>
    %560 = arith.addf %558, %559 : vector<2x128xf32>
    %561 = math.tanh %560 : vector<2x128xf32>
    %562 = arith.mulf %557, %561 : vector<2x128xf32>
    %c6_231 = arith.constant 6 : index
    %c0_232 = arith.constant 0 : index
    %c0_233 = arith.constant 0 : index
    %563 = vector.load %arg15[%c6_231, %c0_232, %c0_233] : memref<8x2x512xf32, #tpu.memory_space<vmem>>, vector<1x2x512xf32>
    %564 = vector.shape_cast %563 : vector<1x2x512xf32> to vector<2x512xf32>
    %565 = arith.truncf %562 : vector<2x128xf32> to vector<2x128xbf16>
    %cst_234 = arith.constant dense<0.000000e+00> : vector<2x512xf32>
    %566 = tpu.matmul %565, %334, %cst_234 {dimension_numbers = #tpu.dot_dimension_numbers<[1], [0], [0], [1], [0, 0, 1, 1], [], []>} : vector<2x128xbf16>, vector<128x512xbf16>, vector<2x512xf32> -> vector<2x512xf32>
    %567 = arith.addf %564, %566 : vector<2x512xf32>
    %568 = vector.extract_strided_slice %567 {offsets = [0, 0], sizes = [2, 128], strides = [1, 1]} : vector<2x512xf32> to vector<2x128xf32>
    %cst_235 = arith.constant 5.000000e-01 : f32
    %569 = vector.broadcast %cst_235 : f32 to vector<2x128xf32>
    %570 = arith.mulf %569, %568 : vector<2x128xf32>
    %571 = math.tanh %570 : vector<2x128xf32>
    %cst_236 = arith.constant 1.000000e+00 : f32
    %572 = vector.broadcast %cst_236 : f32 to vector<2x128xf32>
    %573 = arith.addf %571, %572 : vector<2x128xf32>
    %cst_237 = arith.constant 5.000000e-01 : f32
    %574 = vector.broadcast %cst_237 : f32 to vector<2x128xf32>
    %575 = arith.mulf %574, %573 : vector<2x128xf32>
    %576 = vector.extract_strided_slice %567 {offsets = [0, 128], sizes = [2, 128], strides = [1, 1]} : vector<2x512xf32> to vector<2x128xf32>
    %cst_238 = arith.constant 5.000000e-01 : f32
    %577 = vector.broadcast %cst_238 : f32 to vector<2x128xf32>
    %578 = arith.mulf %577, %576 : vector<2x128xf32>
    %579 = math.tanh %578 : vector<2x128xf32>
    %cst_239 = arith.constant 1.000000e+00 : f32
    %580 = vector.broadcast %cst_239 : f32 to vector<2x128xf32>
    %581 = arith.addf %579, %580 : vector<2x128xf32>
    %cst_240 = arith.constant 5.000000e-01 : f32
    %582 = vector.broadcast %cst_240 : f32 to vector<2x128xf32>
    %583 = arith.mulf %582, %581 : vector<2x128xf32>
    %584 = vector.extract_strided_slice %567 {offsets = [0, 256], sizes = [2, 128], strides = [1, 1]} : vector<2x512xf32> to vector<2x128xf32>
    %585 = math.tanh %584 : vector<2x128xf32>
    %586 = vector.extract_strided_slice %567 {offsets = [0, 384], sizes = [2, 128], strides = [1, 1]} : vector<2x512xf32> to vector<2x128xf32>
    %cst_241 = arith.constant 5.000000e-01 : f32
    %587 = vector.broadcast %cst_241 : f32 to vector<2x128xf32>
    %588 = arith.mulf %587, %586 : vector<2x128xf32>
    %589 = math.tanh %588 : vector<2x128xf32>
    %cst_242 = arith.constant 1.000000e+00 : f32
    %590 = vector.broadcast %cst_242 : f32 to vector<2x128xf32>
    %591 = arith.addf %589, %590 : vector<2x128xf32>
    %cst_243 = arith.constant 5.000000e-01 : f32
    %592 = vector.broadcast %cst_243 : f32 to vector<2x128xf32>
    %593 = arith.mulf %592, %591 : vector<2x128xf32>
    %594 = arith.mulf %583, %560 : vector<2x128xf32>
    %595 = arith.mulf %575, %585 : vector<2x128xf32>
    %596 = arith.addf %594, %595 : vector<2x128xf32>
    %597 = math.tanh %596 : vector<2x128xf32>
    %598 = arith.mulf %593, %597 : vector<2x128xf32>
    %c7_244 = arith.constant 7 : index
    %c0_245 = arith.constant 0 : index
    %c0_246 = arith.constant 0 : index
    %599 = vector.load %arg15[%c7_244, %c0_245, %c0_246] : memref<8x2x512xf32, #tpu.memory_space<vmem>>, vector<1x2x512xf32>
    %600 = vector.shape_cast %599 : vector<1x2x512xf32> to vector<2x512xf32>
    %601 = arith.truncf %598 : vector<2x128xf32> to vector<2x128xbf16>
    %cst_247 = arith.constant dense<0.000000e+00> : vector<2x512xf32>
    %602 = tpu.matmul %601, %334, %cst_247 {dimension_numbers = #tpu.dot_dimension_numbers<[1], [0], [0], [1], [0, 0, 1, 1], [], []>} : vector<2x128xbf16>, vector<128x512xbf16>, vector<2x512xf32> -> vector<2x512xf32>
    %603 = arith.addf %600, %602 : vector<2x512xf32>
    %604 = vector.extract_strided_slice %603 {offsets = [0, 0], sizes = [2, 128], strides = [1, 1]} : vector<2x512xf32> to vector<2x128xf32>
    %cst_248 = arith.constant 5.000000e-01 : f32
    %605 = vector.broadcast %cst_248 : f32 to vector<2x128xf32>
    %606 = arith.mulf %605, %604 : vector<2x128xf32>
    %607 = math.tanh %606 : vector<2x128xf32>
    %cst_249 = arith.constant 1.000000e+00 : f32
    %608 = vector.broadcast %cst_249 : f32 to vector<2x128xf32>
    %609 = arith.addf %607, %608 : vector<2x128xf32>
    %cst_250 = arith.constant 5.000000e-01 : f32
    %610 = vector.broadcast %cst_250 : f32 to vector<2x128xf32>
    %611 = arith.mulf %610, %609 : vector<2x128xf32>
    %612 = vector.extract_strided_slice %603 {offsets = [0, 128], sizes = [2, 128], strides = [1, 1]} : vector<2x512xf32> to vector<2x128xf32>
    %cst_251 = arith.constant 5.000000e-01 : f32
    %613 = vector.broadcast %cst_251 : f32 to vector<2x128xf32>
    %614 = arith.mulf %613, %612 : vector<2x128xf32>
    %615 = math.tanh %614 : vector<2x128xf32>
    %cst_252 = arith.constant 1.000000e+00 : f32
    %616 = vector.broadcast %cst_252 : f32 to vector<2x128xf32>
    %617 = arith.addf %615, %616 : vector<2x128xf32>
    %cst_253 = arith.constant 5.000000e-01 : f32
    %618 = vector.broadcast %cst_253 : f32 to vector<2x128xf32>
    %619 = arith.mulf %618, %617 : vector<2x128xf32>
    %620 = vector.extract_strided_slice %603 {offsets = [0, 256], sizes = [2, 128], strides = [1, 1]} : vector<2x512xf32> to vector<2x128xf32>
    %621 = math.tanh %620 : vector<2x128xf32>
    %622 = vector.extract_strided_slice %603 {offsets = [0, 384], sizes = [2, 128], strides = [1, 1]} : vector<2x512xf32> to vector<2x128xf32>
    %cst_254 = arith.constant 5.000000e-01 : f32
    %623 = vector.broadcast %cst_254 : f32 to vector<2x128xf32>
    %624 = arith.mulf %623, %622 : vector<2x128xf32>
    %625 = math.tanh %624 : vector<2x128xf32>
    %cst_255 = arith.constant 1.000000e+00 : f32
    %626 = vector.broadcast %cst_255 : f32 to vector<2x128xf32>
    %627 = arith.addf %625, %626 : vector<2x128xf32>
    %cst_256 = arith.constant 5.000000e-01 : f32
    %628 = vector.broadcast %cst_256 : f32 to vector<2x128xf32>
    %629 = arith.mulf %628, %627 : vector<2x128xf32>
    %630 = arith.mulf %619, %596 : vector<2x128xf32>
    %631 = arith.mulf %611, %621 : vector<2x128xf32>
    %632 = arith.addf %630, %631 : vector<2x128xf32>
    %633 = math.tanh %632 : vector<2x128xf32>
    %634 = arith.mulf %629, %633 : vector<2x128xf32>
    %c1_257 = arith.constant 1 : index
    %c0_258 = arith.constant 0 : index
    %c0_259 = arith.constant 0 : index
    %635 = vector.load %arg13[%c1_257, %c0_258, %c0_259] : memref<2x2x128xf32, #tpu.memory_space<vmem>>, vector<1x2x128xf32>
    %636 = vector.shape_cast %635 : vector<1x2x128xf32> to vector<2x128xf32>
    %637 = vector.shape_cast %634 : vector<2x128xf32> to vector<1x2x128xf32>
    tpu.vector_store %arg13[%c1_257, %c0_258, %c0_259], %637 {strides = array<i32>} : memref<2x2x128xf32, #tpu.memory_space<vmem>>, vector<1x2x128xf32>,
    %c1_260 = arith.constant 1 : index
    %c0_261 = arith.constant 0 : index
    %c0_262 = arith.constant 0 : index
    %638 = vector.load %arg14[%c1_260, %c0_261, %c0_262] : memref<2x2x128xf32, #tpu.memory_space<vmem>>, vector<1x2x128xf32>
    %639 = vector.shape_cast %638 : vector<1x2x128xf32> to vector<2x128xf32>
    %640 = vector.shape_cast %632 : vector<2x128xf32> to vector<1x2x128xf32>
    tpu.vector_store %arg14[%c1_260, %c0_261, %c0_262], %640 {strides = array<i32>} : memref<2x2x128xf32, #tpu.memory_space<vmem>>, vector<1x2x128xf32>,
    %641 = arith.truncf %634 : vector<2x128xf32> to vector<2x128xbf16>
    %c0_263 = arith.constant 0 : index
    %c0_264 = arith.constant 0 : index
    %642 = vector.load %arg8[%c0_263, %c0_264] : memref<128x128xbf16, #tpu.memory_space<vmem>>, vector<128x128xbf16>
    %cst_265 = arith.constant dense<0.000000e+00> : vector<2x128xf32>
    %643 = tpu.matmul %641, %642, %cst_265 {dimension_numbers = #tpu.dot_dimension_numbers<[1], [0], [0], [1], [0, 0, 1, 1], [], []>} : vector<2x128xbf16>, vector<128x128xbf16>, vector<2x128xf32> -> vector<2x128xf32>
    %c0_266 = arith.constant 0 : index
    %c0_267 = arith.constant 0 : index
    %644 = vector.load %arg9[%c0_266, %c0_267] : memref<1x128xf32, #tpu.memory_space<vmem>>, vector<1x128xf32>
    %645 = vector.broadcast %644 : vector<1x128xf32> to vector<2x128xf32>
    %646 = arith.addf %643, %645 : vector<2x128xf32>
    %647 = math.tanh %646 : vector<2x128xf32>
    %648 = arith.truncf %647 : vector<2x128xf32> to vector<2x128xbf16>
    %c0_268 = arith.constant 0 : index
    %c0_269 = arith.constant 0 : index
    %649 = vector.load %arg10[%c0_268, %c0_269] : memref<128x128xbf16, #tpu.memory_space<vmem>>, vector<128x128xbf16>
    %cst_270 = arith.constant dense<0.000000e+00> : vector<2x128xf32>
    %650 = tpu.matmul %648, %649, %cst_270 {dimension_numbers = #tpu.dot_dimension_numbers<[1], [0], [0], [1], [0, 0, 1, 1], [], []>} : vector<2x128xbf16>, vector<128x128xbf16>, vector<2x128xf32> -> vector<2x128xf32>
    %c0_271 = arith.constant 0 : index
    %c0_272 = arith.constant 0 : index
    %651 = vector.load %arg11[%c0_271, %c0_272] : memref<1x128xf32, #tpu.memory_space<vmem>>, vector<1x128xf32>
    %652 = vector.broadcast %651 : vector<1x128xf32> to vector<2x128xf32>
    %653 = arith.addf %650, %652 : vector<2x128xf32>
    %c0_273 = arith.constant 0 : index
    %c0_274 = arith.constant 0 : index
    %654 = vector.load %arg12[%c0_273, %c0_274] : memref<2x128xf32, #tpu.memory_space<vmem>>, vector<2x128xf32>
    tpu.vector_store %arg12[%c0_273, %c0_274], %653 {strides = array<i32>} : memref<2x128xf32, #tpu.memory_space<vmem>>, vector<2x128xf32>,
    return
  }
  func.func @transform_0(%arg0: i32) -> (i32, i32) {
    %c0_i32 = arith.constant 0 : i32
    %c0_i32_0 = arith.constant 0 : i32
    return %c0_i32, %arg0 : i32, i32
  }
  func.func @transform_1(%arg0: i32) -> (i32, i32) {
    %c0_i32 = arith.constant 0 : i32
    %c0_i32_0 = arith.constant 0 : i32
    %c0_i32_1 = arith.constant 0 : i32
    return %c0_i32, %c0_i32_0 : i32, i32
  }
  func.func @transform_2(%arg0: i32) -> (i32, i32) {
    %c0_i32 = arith.constant 0 : i32
    %c0_i32_0 = arith.constant 0 : i32
    %c0_i32_1 = arith.constant 0 : i32
    return %c0_i32, %c0_i32_0 : i32, i32
  }
  func.func @transform_3(%arg0: i32) -> (i32, i32) {
    %c0_i32 = arith.constant 0 : i32
    %c0_i32_0 = arith.constant 0 : i32
    %c0_i32_1 = arith.constant 0 : i32
    return %c0_i32, %c0_i32_0 : i32, i32
  }
  func.func @transform_4(%arg0: i32) -> (i32, i32) {
    %c0_i32 = arith.constant 0 : i32
    %c0_i32_0 = arith.constant 0 : i32
    %c0_i32_1 = arith.constant 0 : i32
    return %c0_i32, %c0_i32_0 : i32, i32
  }
  func.func @transform_5(%arg0: i32) -> (i32, i32) {
    %c0_i32 = arith.constant 0 : i32
    %c0_i32_0 = arith.constant 0 : i32
    %c0_i32_1 = arith.constant 0 : i32
    return %c0_i32, %c0_i32_0 : i32, i32
  }
  func.func @transform_6(%arg0: i32) -> (i32, i32) {
    %c0_i32 = arith.constant 0 : i32
    %c0_i32_0 = arith.constant 0 : i32
    %c0_i32_1 = arith.constant 0 : i32
    return %c0_i32, %c0_i32_0 : i32, i32
  }
  func.func @transform_7(%arg0: i32) -> (i32, i32) {
    %c0_i32 = arith.constant 0 : i32
    %c0_i32_0 = arith.constant 0 : i32
    %c0_i32_1 = arith.constant 0 : i32
    return %c0_i32, %c0_i32_0 : i32, i32
  }
  func.func @transform_8(%arg0: i32) -> (i32, i32) {
    %c0_i32 = arith.constant 0 : i32
    %c0_i32_0 = arith.constant 0 : i32
    %c0_i32_1 = arith.constant 0 : i32
    return %c0_i32, %c0_i32_0 : i32, i32
  }
  func.func @transform_9(%arg0: i32) -> (i32, i32) {
    %c0_i32 = arith.constant 0 : i32
    %c0_i32_0 = arith.constant 0 : i32
    %c0_i32_1 = arith.constant 0 : i32
    return %c0_i32, %c0_i32_0 : i32, i32
  }
  func.func @transform_10(%arg0: i32) -> (i32, i32) {
    %c0_i32 = arith.constant 0 : i32
    %c0_i32_0 = arith.constant 0 : i32
    %c0_i32_1 = arith.constant 0 : i32
    return %c0_i32, %c0_i32_0 : i32, i32
  }
  func.func @transform_11(%arg0: i32) -> (i32, i32) {
    %c0_i32 = arith.constant 0 : i32
    %c0_i32_0 = arith.constant 0 : i32
    return %arg0, %c0_i32 : i32, i32
  }
  func.func @transform_12(%arg0: i32) -> (i32, i32, i32) {
    %c0_i32 = arith.constant 0 : i32
    %c0_i32_0 = arith.constant 0 : i32
    %c0_i32_1 = arith.constant 0 : i32
    return %c0_i32, %arg0, %c0_i32_0 : i32, i32, i32
  }
  func.func @transform_13(%arg0: i32) -> (i32, i32, i32) {
    %c0_i32 = arith.constant 0 : i32
    %c0_i32_0 = arith.constant 0 : i32
    %c0_i32_1 = arith.constant 0 : i32
    return %c0_i32, %arg0, %c0_i32_0 : i32, i32, i32
  }
}

</mosaic_0001>

<llo_original>
// kernel: tpu_custom_call.1
$region0: #{tpu_custom_call.1}
  #allocation0 [shape = 'u32[]', space=smem, size = 0x4, offset = 0x4, fixed_abs, tag = 'smem constant byte address 0x4 - core index']
  #allocation1 [shape = 'u32[144,128]{1,0:T(1,128)}', space=vmem, size = 0x12000, scoped, tag = 'internal scratch']
  #allocation2 [shape = 'f32[8,2,512]{2,1,0:T(2,128)}', space=vmem, size = 0x8000, scoped, tag = 'scratch operand']
  #allocation3 [shape = 'f32[8,2,128]{2,1,0:T(2,128)}', space=vmem, size = 0x2000, scoped, tag = 'scratch operand']
  %s0 = inlined_call_operand.vmem [shape: f32[8,2], index: 0, kind: input, shape index: {}]
  %s1 = inlined_call_operand.vmem [shape: f32[1,512], index: 1, kind: input, shape index: {}]
  %s2 = inlined_call_operand.hbm [shape: bf16[128,512], index: 2, kind: input, shape index: {}]
  %s3 = inlined_call_operand.vmem [shape: f32[1,512], index: 3, kind: input, shape index: {}]
  %s4 = inlined_call_operand.hbm [shape: bf16[128,512], index: 4, kind: input, shape index: {}]
  %s5 = inlined_call_operand.hbm [shape: bf16[128,512], index: 5, kind: input, shape index: {}]
  %s6 = inlined_call_operand.vmem [shape: f32[1,512], index: 6, kind: input, shape index: {}]
  %s7 = inlined_call_operand.hbm [shape: bf16[128,128], index: 7, kind: input, shape index: {}]
  %s8 = inlined_call_operand.vmem [shape: f32[1,128], index: 8, kind: input, shape index: {}]
  %s9 = inlined_call_operand.hbm [shape: bf16[128,128], index: 9, kind: input, shape index: {}]
  %s10 = inlined_call_operand.vmem [shape: f32[1,128], index: 10, kind: input, shape index: {}]
  %s11 = inlined_call_operand.hbm [shape: f32[2,128], index: 11, kind: output, shape index: {0}]
  %s12 = inlined_call_operand.hbm [shape: f32[2,2,128], index: 12, kind: output, shape index: {1}]
  %s13 = inlined_call_operand.hbm [shape: f32[2,2,128], index: 13, kind: output, shape index: {2}]
  %14 = xla_tuple %s11, %s12, %s13
  %s15 = sld [smem:[#allocation0]]
  $region90: #{tpu_custom_call.1} parent=0
    _
  %s17 = ssub.s32 1, %s15
  %s18 = scalar_select 0, %s17, %s15
  $region1: #{tpu_custom_call.1} parent=0
    #allocation4 [shape = 'u8[131072]{0}', space=vmem, size = 0x20000, scoped, tag = 'input window, operand 2, single buffered']
    #allocation5 [shape = 's32[1]{0}', space=sflag, size = 0x4, scoped, tag = 'scoped memory for tpu_custom_call.1']
    #allocation6 [shape = 's32[1]{0}', space=sflag, size = 0x4, scoped, tag = 'scoped memory for tpu_custom_call.1']
    #allocation7 [shape = 'u8[131072]{0}', space=vmem, size = 0x20000, scoped, tag = 'input window, operand 4, single buffered']
    #allocation8 [shape = 's32[1]{0}', space=sflag, size = 0x4, scoped, tag = 'scoped memory for tpu_custom_call.1']
    #allocation9 [shape = 'u8[131072]{0}', space=vmem, size = 0x20000, scoped, tag = 'input window, operand 5, single buffered']
    #allocation10 [shape = 'u8[32768]{0}', space=vmem, size = 0x8000, scoped, tag = 'input window, operand 7, single buffered']
    #allocation11 [shape = 's32[1]{0}', space=sflag, size = 0x4, scoped, tag = 'scoped memory for tpu_custom_call.1']
    #allocation12 [shape = 'u8[32768]{0}', space=vmem, size = 0x8000, scoped, tag = 'input window, operand 9, single buffered']
    #allocation13 [shape = 'u8[1024]{0}', space=vmem, size = 0x400, scoped, tag = 'output window, operand 0, single buffered']
    #allocation14 [shape = 'u8[2048]{0}', space=vmem, size = 0x800, scoped, tag = 'output window, operand 1, single buffered']
    #allocation15 [shape = 's32[1]{0}', space=sflag, size = 0x4, scoped, tag = 'scoped memory for tpu_custom_call.1']
    #allocation16 [shape = 'u8[2048]{0}', space=vmem, size = 0x800, scoped, tag = 'output window, operand 2, single buffered']
    %19 = vsyncpa [#allocation5], 0
    %20 = vsyncpa [#allocation8], 0
    %21 = vsyncpa [#allocation11], 0
    %22 = vsyncpa [#allocation6], 0
    %23 = vsyncpa [#allocation15], 0
    // Predicated region
    $region2: #{tpu_custom_call.1} parent=1 // pred_check
      _
    $region3: #{tpu_custom_call.1} parent=1 // pred_check_branch
      %25 = sbr.rel (0) target = $region5
    $region4: #{tpu_custom_call.1} parent=1 // pred_region
      _
    $region5: #{tpu_custom_call.1} parent=1 // pred_fallthru
      _
    // Predicated region
    $region6: #{tpu_custom_call.1} parent=1 // pred_check
      _
    $region7: #{tpu_custom_call.1} parent=1 // pred_check_branch
      %27 = sbr.rel (0) target = $region9
    $region8: #{tpu_custom_call.1} parent=1 // pred_region
      _
    $region9: #{tpu_custom_call.1} parent=1 // pred_fallthru
      _
    // Predicated region
    $region10: #{tpu_custom_call.1} parent=1 // pred_check
      _
    $region11: #{tpu_custom_call.1} parent=1 // pred_check_branch
      %29 = sbr.rel (0) target = $region13
    $region12: #{tpu_custom_call.1} parent=1 // pred_region
      %s31 = ssub.s32 4096, 4096
      %32 = vsyncadd [#allocation5], %s31
      %s33 = sshll.u32 [#allocation4], 4
      %s34 = int_to_ptr.vmem [resolvable:$true] %s33
      %39 = dma.hbm_to_vmem [thread:$0]  %s2, 4096, %s34, [#allocation5], 256, 256, 16
    $region13: #{tpu_custom_call.1} parent=1 // pred_fallthru
      _
    // Predicated region
    $region14: #{tpu_custom_call.1} parent=1 // pred_check
      _
    $region15: #{tpu_custom_call.1} parent=1 // pred_check_branch
      %41 = sbr.rel (0) target = $region17
    $region16: #{tpu_custom_call.1} parent=1 // pred_region
      _
    $region17: #{tpu_custom_call.1} parent=1 // pred_fallthru
      _
    // Predicated region
    $region18: #{tpu_custom_call.1} parent=1 // pred_check
      _
    $region19: #{tpu_custom_call.1} parent=1 // pred_check_branch
      %43 = sbr.rel (0) target = $region21
    $region20: #{tpu_custom_call.1} parent=1 // pred_region
      %s45 = ssub.s32 4096, 4096
      %46 = vsyncadd [#allocation8], %s45
      %s47 = sshll.u32 [#allocation7], 4
      %s48 = int_to_ptr.vmem [resolvable:$true] %s47
      %53 = dma.hbm_to_vmem [thread:$0]  %s4, 4096, %s48, [#allocation8], 256, 256, 16
    $region21: #{tpu_custom_call.1} parent=1 // pred_fallthru
      _
    // Predicated region
    $region22: #{tpu_custom_call.1} parent=1 // pred_check
      _
    $region23: #{tpu_custom_call.1} parent=1 // pred_check_branch
      %55 = sbr.rel (0) target = $region25
    $region24: #{tpu_custom_call.1} parent=1 // pred_region
      %s57 = ssub.s32 4096, 4096
      %58 = vsyncadd [#allocation8], %s57
      %s59 = sshll.u32 [#allocation9], 4
      %s60 = int_to_ptr.vmem [resolvable:$true] %s59
      %65 = dma.hbm_to_vmem [thread:$0]  %s5, 4096, %s60, [#allocation8], 256, 256, 16
    $region25: #{tpu_custom_call.1} parent=1 // pred_fallthru
      _
    // Predicated region
    $region26: #{tpu_custom_call.1} parent=1 // pred_check
      _
    $region27: #{tpu_custom_call.1} parent=1 // pred_check_branch
      %67 = sbr.rel (0) target = $region29
    $region28: #{tpu_custom_call.1} parent=1 // pred_region
      _
    $region29: #{tpu_custom_call.1} parent=1 // pred_fallthru
      _
    // Predicated region
    $region30: #{tpu_custom_call.1} parent=1 // pred_check
      _
    $region31: #{tpu_custom_call.1} parent=1 // pred_check_branch
      %69 = sbr.rel (0) target = $region33
    $region32: #{tpu_custom_call.1} parent=1 // pred_region
      %s71 = ssub.s32 1024, 1024
      %72 = vsyncadd [#allocation11], %s71
      %s73 = sshll.u32 [#allocation10], 4
      %s74 = int_to_ptr.vmem [resolvable:$true] %s73
      %79 = dma.hbm_to_vmem [thread:$0]  %s7, 1024, %s74, [#allocation11], 64, 64, 4
    $region33: #{tpu_custom_call.1} parent=1 // pred_fallthru
      _
    // Predicated region
    $region34: #{tpu_custom_call.1} parent=1 // pred_check
      _
    $region35: #{tpu_custom_call.1} parent=1 // pred_check_branch
      %81 = sbr.rel (0) target = $region37
    $region36: #{tpu_custom_call.1} parent=1 // pred_region
      _
    $region37: #{tpu_custom_call.1} parent=1 // pred_fallthru
      _
    // Predicated region
    $region38: #{tpu_custom_call.1} parent=1 // pred_check
      _
    $region39: #{tpu_custom_call.1} parent=1 // pred_check_branch
      %83 = sbr.rel (0) target = $region41
    $region40: #{tpu_custom_call.1} parent=1 // pred_region
      %s85 = ssub.s32 1024, 1024
      %86 = vsyncadd [#allocation11], %s85
      %s87 = sshll.u32 [#allocation12], 4
      %s88 = int_to_ptr.vmem [resolvable:$true] %s87
      %93 = dma.hbm_to_vmem [thread:$0]  %s9, 1024, %s88, [#allocation11], 64, 64, 4
    $region41: #{tpu_custom_call.1} parent=1 // pred_fallthru
      _
    // Predicated region
    $region42: #{tpu_custom_call.1} parent=1 // pred_check
      _
    $region43: #{tpu_custom_call.1} parent=1 // pred_check_branch
      %95 = sbr.rel (0) target = $region45
    $region44: #{tpu_custom_call.1} parent=1 // pred_region
      _
    $region45: #{tpu_custom_call.1} parent=1 // pred_fallthru
      _
    // Predicated region
    $region46: #{tpu_custom_call.1} parent=1 // pred_check
      _
    $region47: #{tpu_custom_call.1} parent=1 // pred_check_branch
      %97 = sbr.rel (0) target = $region49
    $region48: #{tpu_custom_call.1} parent=1 // pred_region
      %98 = dma.done [#allocation5], 4096
    $region49: #{tpu_custom_call.1} parent=1 // pred_fallthru
      _
    // Predicated region
    $region50: #{tpu_custom_call.1} parent=1 // pred_check
      _
    $region51: #{tpu_custom_call.1} parent=1 // pred_check_branch
      %100 = sbr.rel (0) target = $region53
    $region52: #{tpu_custom_call.1} parent=1 // pred_region
      %101 = dma.done [#allocation8], 4096
    $region53: #{tpu_custom_call.1} parent=1 // pred_fallthru
      _
    // Predicated region
    $region54: #{tpu_custom_call.1} parent=1 // pred_check
      _
    $region55: #{tpu_custom_call.1} parent=1 // pred_check_branch
      %103 = sbr.rel (0) target = $region57
    $region56: #{tpu_custom_call.1} parent=1 // pred_region
      %104 = dma.done [#allocation8], 4096
    $region57: #{tpu_custom_call.1} parent=1 // pred_fallthru
      _
    // Predicated region
    $region58: #{tpu_custom_call.1} parent=1 // pred_check
      _
    $region59: #{tpu_custom_call.1} parent=1 // pred_check_branch
      %106 = sbr.rel (0) target = $region61
    $region60: #{tpu_custom_call.1} parent=1 // pred_region
      %107 = dma.done [#allocation11], 1024
    $region61: #{tpu_custom_call.1} parent=1 // pred_fallthru
      _
    // Predicated region
    $region62: #{tpu_custom_call.1} parent=1 // pred_check
      _
    $region63: #{tpu_custom_call.1} parent=1 // pred_check_branch
      %109 = sbr.rel (0) target = $region65
    $region64: #{tpu_custom_call.1} parent=1 // pred_region
      %110 = dma.done [#allocation11], 1024
    $region65: #{tpu_custom_call.1} parent=1 // pred_fallthru
      _
    %v112 = vld [vmem:[%s1] sm:$0xf]
    %v113 = vld [vmem:[#allocation4] sm:$0xff]
    %v114 = vld [vmem:[#allocation4 + $0x8] sm:$0xff]
    %v115 = vld [vmem:[#allocation4 + $0x10] sm:$0xff]
    %v116 = vld [vmem:[#allocation4 + $0x18] sm:$0xff]
    %v117 = vld [vmem:[#allocation4 + $0x20] sm:$0xff]
    %v118 = vld [vmem:[#allocation4 + $0x28] sm:$0xff]
    %v119 = vld [vmem:[#allocation4 + $0x30] sm:$0xff]
    %v120 = vld [vmem:[#allocation4 + $0x38] sm:$0xff]
    %v121 = vld [vmem:[#allocation4 + $0x40] sm:$0xff]
    %v122 = vld [vmem:[#allocation4 + $0x48] sm:$0xff]
    %v123 = vld [vmem:[#allocation4 + $0x50] sm:$0xff]
    %v124 = vld [vmem:[#allocation4 + $0x58] sm:$0xff]
    %v125 = vld [vmem:[#allocation4 + $0x60] sm:$0xff]
    %v126 = vld [vmem:[#allocation4 + $0x68] sm:$0xff]
    %v127 = vld [vmem:[#allocation4 + $0x70] sm:$0xff]
    %v128 = vld [vmem:[#allocation4 + $0x78] sm:$0xff]
    %v129 = vld [vmem:[#allocation4 + $0x80] sm:$0xff]
    %v130 = vld [vmem:[#allocation4 + $0x88] sm:$0xff]
    %v131 = vld [vmem:[#allocation4 + $0x90] sm:$0xff]
    %v132 = vld [vmem:[#allocation4 + $0x98] sm:$0xff]
    %v133 = vld [vmem:[#allocation4 + $0xa0] sm:$0xff]
    %v134 = vld [vmem:[#allocation4 + $0xa8] sm:$0xff]
    %v135 = vld [vmem:[#allocation4 + $0xb0] sm:$0xff]
    %v136 = vld [vmem:[#allocation4 + $0xb8] sm:$0xff]
    %v137 = vld [vmem:[#allocation4 + $0xc0] sm:$0xff]
    %v138 = vld [vmem:[#allocation4 + $0xc8] sm:$0xff]
    %v139 = vld [vmem:[#allocation4 + $0xd0] sm:$0xff]
    %v140 = vld [vmem:[#allocation4 + $0xd8] sm:$0xff]
    %v141 = vld [vmem:[#allocation4 + $0xe0] sm:$0xff]
    %v142 = vld [vmem:[#allocation4 + $0xe8] sm:$0xff]
    %v143 = vld [vmem:[#allocation4 + $0xf0] sm:$0xff]
    %v144 = vld [vmem:[#allocation4 + $0xf8] sm:$0xff]
    %v145 = vld [vmem:[%s3] sm:$0xf]
    %v146 = vld [vmem:[%s0] sm:$0xff]
    %v147 = vlaneseq
    %v148 = vshrl.u32 %v147, 7
    %v149 = vsub.s32 0, %v148
    %v150 = vrot.slane %v146, %v149
    %152 = vbcast.lane.b32.xlu0 %v150, 256
    %v153 = vpop.permute.xlu0 %152
    %v154 = vlaneseq
    %v155 = vshrl.u32 %v154, 7
    %v156 = vsub.s32 1, %v155
    %v157 = vrot.slane %v146, %v156
    %159 = vbcast.lane.b32.xlu0 %v157, 256
    %v160 = vpop.permute.xlu0 %159
    %v161 = vlaneseq
    %v162 = vshrl.u32 %v161, 7
    %v163 = vsub.s32 2, %v162
    %v164 = vrot.slane %v146, %v163
    %166 = vbcast.lane.b32.xlu0 %v164, 256
    %v167 = vpop.permute.xlu0 %166
    %v168 = vlaneseq
    %v169 = vshrl.u32 %v168, 7
    %v170 = vsub.s32 3, %v169
    %v171 = vrot.slane %v146, %v170
    %173 = vbcast.lane.b32.xlu0 %v171, 256
    %v174 = vpop.permute.xlu0 %173
    %v175 = vlaneseq
    %v176 = vshrl.u32 %v175, 7
    %v177 = vsub.s32 4, %v176
    %v178 = vrot.slane %v146, %v177
    %180 = vbcast.lane.b32.xlu0 %v178, 256
    %v181 = vpop.permute.xlu0 %180
    %v182 = vlaneseq
    %v183 = vshrl.u32 %v182, 7
    %v184 = vsub.s32 5, %v183
    %v185 = vrot.slane %v146, %v184
    %187 = vbcast.lane.b32.xlu0 %v185, 256
    %v188 = vpop.permute.xlu0 %187
    %v189 = vlaneseq
    %v190 = vshrl.u32 %v189, 7
    %v191 = vsub.s32 6, %v190
    %v192 = vrot.slane %v146, %v191
    %194 = vbcast.lane.b32.xlu0 %v192, 256
    %v195 = vpop.permute.xlu0 %194
    %v196 = vlaneseq
    %v197 = vshrl.u32 %v196, 7
    %v198 = vsub.s32 7, %v197
    %v199 = vrot.slane %v146, %v198
    %201 = vbcast.lane.b32.xlu0 %v199, 256
    %v202 = vpop.permute.xlu0 %201
    %v204 = vlaneseq
    %v205 = vshrl.u32 %v204, 7
    %v206 = vsub.s32 0, %v205
    %v207 = vrot.slane %v112, %v206
    %v208 = vlaneseq
    %v209 = vshrl.u32 %v208, 7
    %v210 = vsub.s32 1, %v209
    %v211 = vrot.slane %v112, %v210
    %v212 = vlaneseq
    %v213 = vshrl.u32 %v212, 7
    %v214 = vsub.s32 2, %v213
    %v215 = vrot.slane %v112, %v214
    %v216 = vlaneseq
    %v217 = vshrl.u32 %v216, 7
    %v218 = vsub.s32 3, %v217
    %v219 = vrot.slane %v112, %v218
    %v224 = vmul.f32 %v153, %v207
    %v225 = vmul.f32 %v153, %v211
    %v226 = vmul.f32 %v153, %v215
    %v227 = vmul.f32 %v153, %v219
    %v228 = vmul.f32 %v160, %v207
    %v229 = vmul.f32 %v160, %v211
    %v230 = vmul.f32 %v160, %v215
    %v231 = vmul.f32 %v160, %v219
    %v232 = vmul.f32 %v167, %v207
    %v233 = vmul.f32 %v167, %v211
    %v234 = vmul.f32 %v167, %v215
    %v235 = vmul.f32 %v167, %v219
    %v236 = vmul.f32 %v174, %v207
    %v237 = vmul.f32 %v174, %v211
    %v238 = vmul.f32 %v174, %v215
    %v239 = vmul.f32 %v174, %v219
    %v240 = vmul.f32 %v181, %v207
    %v241 = vmul.f32 %v181, %v211
    %v242 = vmul.f32 %v181, %v215
    %v243 = vmul.f32 %v181, %v219
    %v244 = vmul.f32 %v188, %v207
    %v245 = vmul.f32 %v188, %v211
    %v246 = vmul.f32 %v188, %v215
    %v247 = vmul.f32 %v188, %v219
    %v248 = vmul.f32 %v195, %v207
    %v249 = vmul.f32 %v195, %v211
    %v250 = vmul.f32 %v195, %v215
    %v251 = vmul.f32 %v195, %v219
    %v252 = vmul.f32 %v202, %v207
    %v253 = vmul.f32 %v202, %v211
    %v254 = vmul.f32 %v202, %v215
    %v255 = vmul.f32 %v202, %v219
    %v257 = vlaneseq
    %v258 = vshrl.u32 %v257, 7
    %v259 = vsub.s32 0, %v258
    %v260 = vrot.slane %v145, %v259
    %v261 = vlaneseq
    %v262 = vshrl.u32 %v261, 7
    %v263 = vsub.s32 1, %v262
    %v264 = vrot.slane %v145, %v263
    %v265 = vlaneseq
    %v266 = vshrl.u32 %v265, 7
    %v267 = vsub.s32 2, %v266
    %v268 = vrot.slane %v145, %v267
    %v269 = vlaneseq
    %v270 = vshrl.u32 %v269, 7
    %v271 = vsub.s32 3, %v270
    %v272 = vrot.slane %v145, %v271
    %v277 = vadd.f32 %v224, %v260
    %v278 = vadd.f32 %v225, %v264
    %v279 = vadd.f32 %v226, %v268
    %v280 = vadd.f32 %v227, %v272
    %v281 = vadd.f32 %v228, %v260
    %v282 = vadd.f32 %v229, %v264
    %v283 = vadd.f32 %v230, %v268
    %v284 = vadd.f32 %v231, %v272
    %v285 = vadd.f32 %v232, %v260
    %v286 = vadd.f32 %v233, %v264
    %v287 = vadd.f32 %v234, %v268
    %v288 = vadd.f32 %v235, %v272
    %v289 = vadd.f32 %v236, %v260
    %v290 = vadd.f32 %v237, %v264
    %v291 = vadd.f32 %v238, %v268
    %v292 = vadd.f32 %v239, %v272
    %v293 = vadd.f32 %v240, %v260
    %v294 = vadd.f32 %v241, %v264
    %v295 = vadd.f32 %v242, %v268
    %v296 = vadd.f32 %v243, %v272
    %v297 = vadd.f32 %v244, %v260
    %v298 = vadd.f32 %v245, %v264
    %v299 = vadd.f32 %v246, %v268
    %v300 = vadd.f32 %v247, %v272
    %v301 = vadd.f32 %v248, %v260
    %v302 = vadd.f32 %v249, %v264
    %v303 = vadd.f32 %v250, %v268
    %v304 = vadd.f32 %v251, %v272
    %v305 = vadd.f32 %v252, %v260
    %v306 = vadd.f32 %v253, %v264
    %v307 = vadd.f32 %v254, %v268
    %v308 = vadd.f32 %v255, %v272
    %v341 = vcombine.low %v277, %v278
    %v342 = vcombine.low %v279, %v280
    %v344 = vunpack.c.l.s4 1983009808
    %v345 = vunpack.c.0.s8 %v344
    %v346 = vlaneseq
    %v347 = vshrl.u32 %v346, 7
    %v348 = vsub.s32 %v345, %v347
    %v349 = vrot.slane %v341, %v348
    %v351 = vunpack.c.l.s4 1983009808
    %v352 = vunpack.c.0.s8 %v351
    %v353 = vlaneseq
    %v354 = vshrl.u32 %v353, 7
    %v355 = vsub.s32 %v352, %v354
    %v356 = vrot.slane %v342, %v355
    %v357 = vcombine.low %v349, %v356
    %v358 = vcombine.low %v281, %v282
    %v359 = vcombine.low %v283, %v284
    %v361 = vunpack.c.l.s4 1983009808
    %v362 = vunpack.c.0.s8 %v361
    %v363 = vlaneseq
    %v364 = vshrl.u32 %v363, 7
    %v365 = vsub.s32 %v362, %v364
    %v366 = vrot.slane %v358, %v365
    %v368 = vunpack.c.l.s4 1983009808
    %v369 = vunpack.c.0.s8 %v368
    %v370 = vlaneseq
    %v371 = vshrl.u32 %v370, 7
    %v372 = vsub.s32 %v369, %v371
    %v373 = vrot.slane %v359, %v372
    %v374 = vcombine.low %v366, %v373
    %v375 = vcombine.low %v285, %v286
    %v376 = vcombine.low %v287, %v288
    %v378 = vunpack.c.l.s4 1983009808
    %v379 = vunpack.c.0.s8 %v378
    %v380 = vlaneseq
    %v381 = vshrl.u32 %v380, 7
    %v382 = vsub.s32 %v379, %v381
    %v383 = vrot.slane %v375, %v382
    %v385 = vunpack.c.l.s4 1983009808
    %v386 = vunpack.c.0.s8 %v385
    %v387 = vlaneseq
    %v388 = vshrl.u32 %v387, 7
    %v389 = vsub.s32 %v386, %v388
    %v390 = vrot.slane %v376, %v389
    %v391 = vcombine.low %v383, %v390
    %v392 = vcombine.low %v289, %v290
    %v393 = vcombine.low %v291, %v292
    %v395 = vunpack.c.l.s4 1983009808
    %v396 = vunpack.c.0.s8 %v395
    %v397 = vlaneseq
    %v398 = vshrl.u32 %v397, 7
    %v399 = vsub.s32 %v396, %v398
    %v400 = vrot.slane %v392, %v399
    %v402 = vunpack.c.l.s4 1983009808
    %v403 = vunpack.c.0.s8 %v402
    %v404 = vlaneseq
    %v405 = vshrl.u32 %v404, 7
    %v406 = vsub.s32 %v403, %v405
    %v407 = vrot.slane %v393, %v406
    %v408 = vcombine.low %v400, %v407
    %v409 = vcombine.low %v293, %v294
    %v410 = vcombine.low %v295, %v296
    %v412 = vunpack.c.l.s4 1983009808
    %v413 = vunpack.c.0.s8 %v412
    %v414 = vlaneseq
    %v415 = vshrl.u32 %v414, 7
    %v416 = vsub.s32 %v413, %v415
    %v417 = vrot.slane %v409, %v416
    %v419 = vunpack.c.l.s4 1983009808
    %v420 = vunpack.c.0.s8 %v419
    %v421 = vlaneseq
    %v422 = vshrl.u32 %v421, 7
    %v423 = vsub.s32 %v420, %v422
    %v424 = vrot.slane %v410, %v423
    %v425 = vcombine.low %v417, %v424
    %v426 = vcombine.low %v297, %v298
    %v427 = vcombine.low %v299, %v300
    %v429 = vunpack.c.l.s4 1983009808
    %v430 = vunpack.c.0.s8 %v429
    %v431 = vlaneseq
    %v432 = vshrl.u32 %v431, 7
    %v433 = vsub.s32 %v430, %v432
    %v434 = vrot.slane %v426, %v433
    %v436 = vunpack.c.l.s4 1983009808
    %v437 = vunpack.c.0.s8 %v436
    %v438 = vlaneseq
    %v439 = vshrl.u32 %v438, 7
    %v440 = vsub.s32 %v437, %v439
    %v441 = vrot.slane %v427, %v440
    %v442 = vcombine.low %v434, %v441
    %v443 = vcombine.low %v301, %v302
    %v444 = vcombine.low %v303, %v304
    %v446 = vunpack.c.l.s4 1983009808
    %v447 = vunpack.c.0.s8 %v446
    %v448 = vlaneseq
    %v449 = vshrl.u32 %v448, 7
    %v450 = vsub.s32 %v447, %v449
    %v451 = vrot.slane %v443, %v450
    %v453 = vunpack.c.l.s4 1983009808
    %v454 = vunpack.c.0.s8 %v453
    %v455 = vlaneseq
    %v456 = vshrl.u32 %v455, 7
    %v457 = vsub.s32 %v454, %v456
    %v458 = vrot.slane %v444, %v457
    %v459 = vcombine.low %v451, %v458
    %v460 = vcombine.low %v305, %v306
    %v461 = vcombine.low %v307, %v308
    %v463 = vunpack.c.l.s4 1983009808
    %v464 = vunpack.c.0.s8 %v463
    %v465 = vlaneseq
    %v466 = vshrl.u32 %v465, 7
    %v467 = vsub.s32 %v464, %v466
    %v468 = vrot.slane %v460, %v467
    %v470 = vunpack.c.l.s4 1983009808
    %v471 = vunpack.c.0.s8 %v470
    %v472 = vlaneseq
    %v473 = vshrl.u32 %v472, 7
    %v474 = vsub.s32 %v471, %v473
    %v475 = vrot.slane %v461, %v474
    %v476 = vcombine.low %v468, %v475
    %485 = vst [vmem:[#allocation2] sm:$0xff] %v357
    %486 = vst [vmem:[#allocation2 + $0x8] sm:$0xff] %v374
    %487 = vst [vmem:[#allocation2 + $0x10] sm:$0xff] %v391
    %488 = vst [vmem:[#allocation2 + $0x18] sm:$0xff] %v408
    %489 = vst [vmem:[#allocation2 + $0x20] sm:$0xff] %v425
    %490 = vst [vmem:[#allocation2 + $0x28] sm:$0xff] %v442
    %491 = vst [vmem:[#allocation2 + $0x30] sm:$0xff] %v459
    %492 = vst [vmem:[#allocation2 + $0x38] sm:$0xff] %v476
    %v493 = vld [vmem:[#allocation2] sm:$0xff]
    %v526 = vunpack.c.l.b16 %v113
    %v527 = vunpack.c.h.b16 %v113
    %v528 = vunpack.c.l.b16 %v114
    %v529 = vunpack.c.h.b16 %v114
    %v530 = vunpack.c.l.b16 %v115
    %v531 = vunpack.c.h.b16 %v115
    %v532 = vunpack.c.l.b16 %v116
    %v533 = vunpack.c.h.b16 %v116
    %v534 = vunpack.c.l.b16 %v117
    %v535 = vunpack.c.h.b16 %v117
    %v536 = vunpack.c.l.b16 %v118
    %v537 = vunpack.c.h.b16 %v118
    %v538 = vunpack.c.l.b16 %v119
    %v539 = vunpack.c.h.b16 %v119
    %v540 = vunpack.c.l.b16 %v120
    %v541 = vunpack.c.h.b16 %v120
    %v542 = vunpack.c.l.b16 %v121
    %v543 = vunpack.c.h.b16 %v121
    %v544 = vunpack.c.l.b16 %v122
    %v545 = vunpack.c.h.b16 %v122
    %v546 = vunpack.c.l.b16 %v123
    %v547 = vunpack.c.h.b16 %v123
    %v548 = vunpack.c.l.b16 %v124
    %v549 = vunpack.c.h.b16 %v124
    %v550 = vunpack.c.l.b16 %v125
    %v551 = vunpack.c.h.b16 %v125
    %v552 = vunpack.c.l.b16 %v126
    %v553 = vunpack.c.h.b16 %v126
    %v554 = vunpack.c.l.b16 %v127
    %v555 = vunpack.c.h.b16 %v127
    %v556 = vunpack.c.l.b16 %v128
    %v557 = vunpack.c.h.b16 %v128
    %v558 = vunpack.c.l.b16 %v129
    %v559 = vunpack.c.h.b16 %v129
    %v560 = vunpack.c.l.b16 %v130
    %v561 = vunpack.c.h.b16 %v130
    %v562 = vunpack.c.l.b16 %v131
    %v563 = vunpack.c.h.b16 %v131
    %v564 = vunpack.c.l.b16 %v132
    %v565 = vunpack.c.h.b16 %v132
    %v566 = vunpack.c.l.b16 %v133
    %v567 = vunpack.c.h.b16 %v133
    %v568 = vunpack.c.l.b16 %v134
    %v569 = vunpack.c.h.b16 %v134
    %v570 = vunpack.c.l.b16 %v135
    %v571 = vunpack.c.h.b16 %v135
    %v572 = vunpack.c.l.b16 %v136
    %v573 = vunpack.c.h.b16 %v136
    %v574 = vunpack.c.l.b16 %v137
    %v575 = vunpack.c.h.b16 %v137
    %v576 = vunpack.c.l.b16 %v138
    %v577 = vunpack.c.h.b16 %v138
    %v578 = vunpack.c.l.b16 %v139
    %v579 = vunpack.c.h.b16 %v139
    %v580 = vunpack.c.l.b16 %v140
    %v581 = vunpack.c.h.b16 %v140
    %v582 = vunpack.c.l.b16 %v141
    %v583 = vunpack.c.h.b16 %v141
    %v584 = vunpack.c.l.b16 %v142
    %v585 = vunpack.c.h.b16 %v142
    %v586 = vunpack.c.l.b16 %v143
    %v587 = vunpack.c.h.b16 %v143
    %v588 = vunpack.c.l.b16 %v144
    %v589 = vunpack.c.h.b16 %v144
    %v590 = vpack.c.b16 %v530, %v526
    %v591 = vpack.c.b16 %v531, %v527
    %v592 = vpack.c.b16 %v532, %v528
    %v593 = vpack.c.b16 %v533, %v529
    %v594 = vpack.c.b16 %v538, %v534
    %v595 = vpack.c.b16 %v539, %v535
    %v596 = vpack.c.b16 %v540, %v536
    %v597 = vpack.c.b16 %v541, %v537
    %v598 = vpack.c.b16 %v546, %v542
    %v599 = vpack.c.b16 %v547, %v543
    %v600 = vpack.c.b16 %v548, %v544
    %v601 = vpack.c.b16 %v549, %v545
    %v602 = vpack.c.b16 %v554, %v550
    %v603 = vpack.c.b16 %v555, %v551
    %v604 = vpack.c.b16 %v556, %v552
    %v605 = vpack.c.b16 %v557, %v553
    %v606 = vpack.c.b16 %v562, %v558
    %v607 = vpack.c.b16 %v563, %v559
    %v608 = vpack.c.b16 %v564, %v560
    %v609 = vpack.c.b16 %v565, %v561
    %v610 = vpack.c.b16 %v570, %v566
    %v611 = vpack.c.b16 %v571, %v567
    %v612 = vpack.c.b16 %v572, %v568
    %v613 = vpack.c.b16 %v573, %v569
    %v614 = vpack.c.b16 %v578, %v574
    %v615 = vpack.c.b16 %v579, %v575
    %v616 = vpack.c.b16 %v580, %v576
    %v617 = vpack.c.b16 %v581, %v577
    %v618 = vpack.c.b16 %v586, %v582
    %v619 = vpack.c.b16 %v587, %v583
    %v620 = vpack.c.b16 %v588, %v584
    %v621 = vpack.c.b16 %v589, %v585
    %654 = vmatprep.subr.bf16.mxu0 %v619
    %655 = vmatpush1.bf16.msra.mxu0 %v618
    %656 = vmatprep.subr.bf16.mxu0 %v615
    %657 = vmatpush1.bf16.msra.mxu0 %v614
    %658 = vmatprep.subr.bf16.mxu0 %v611
    %659 = vmatpush1.bf16.msra.mxu0 %v610
    %660 = vmatprep.subr.bf16.mxu0 %v607
    %661 = vmatpush1.bf16.msra.mxu0 %v606
    %662 = vmatprep.subr.bf16.mxu0 %v603
    %663 = vmatpush1.bf16.msra.mxu0 %v602
    %664 = vmatprep.subr.bf16.mxu0 %v599
    %665 = vmatpush1.bf16.msra.mxu0 %v598
    %666 = vmatprep.subr.bf16.mxu0 %v595
    %667 = vmatpush1.bf16.msra.mxu0 %v594
    %668 = vmatprep.subr.bf16.mxu0 %v591
    %669 = vmatpush1.bf16.msra.mxu0 %v590
    %670 = vmatprep.subr.bf16.mxu0 0
    %671 = vmatpush2.bf16.msra.mxu0 0
    %672 = vmatprep.subr.bf16.mxu0 0
    %673 = vmatpush2.bf16.msra.mxu0 0
    %674 = vmatprep.subr.bf16.mxu0 0
    %675 = vmatpush2.bf16.msra.mxu0 0
    %676 = vmatprep.subr.bf16.mxu0 0
    %677 = vmatpush2.bf16.msra.mxu0 0
    %678 = vmatprep.subr.bf16.mxu0 0
    %679 = vmatpush2.bf16.msra.mxu0 0
    %680 = vmatprep.subr.bf16.mxu0 0
    %681 = vmatpush2.bf16.msra.mxu0 0
    %682 = vmatprep.subr.bf16.mxu0 0
    %683 = vmatpush2.bf16.msra.mxu0 0
    %684 = vmatprep.subr.bf16.mxu0 0
    %685 = vmatpush2.bf16.msra.mxu0 0
    %686 = vmatprep.mubr.bf16.mxu0 0
    %687 = vmatmul.mubr.bf16.gmra.mxu0 0
    %v688 = vpop.f32.mrf.mxu0
    %v689 = vadd.f32 0.0, %v688
    %v690 = vpop.f32.mrf.mxu0
    %v691 = vadd.f32 0.0, %v690
    %v692 = vpop.f32.mrf.mxu0
    %v693 = vpop.f32.mrf.mxu0
    %694 = vdwg.mxu0
    %695 = vmatprep.subr.bf16.mxu0 %v621
    %696 = vmatpush1.bf16.msra.mxu0 %v620
    %697 = vmatprep.subr.bf16.mxu0 %v617
    %698 = vmatpush1.bf16.msra.mxu0 %v616
    %699 = vmatprep.subr.bf16.mxu0 %v613
    %700 = vmatpush1.bf16.msra.mxu0 %v612
    %701 = vmatprep.subr.bf16.mxu0 %v609
    %702 = vmatpush1.bf16.msra.mxu0 %v608
    %703 = vmatprep.subr.bf16.mxu0 %v605
    %704 = vmatpush1.bf16.msra.mxu0 %v604
    %705 = vmatprep.subr.bf16.mxu0 %v601
    %706 = vmatpush1.bf16.msra.mxu0 %v600
    %707 = vmatprep.subr.bf16.mxu0 %v597
    %708 = vmatpush1.bf16.msra.mxu0 %v596
    %709 = vmatprep.subr.bf16.mxu0 %v593
    %710 = vmatpush1.bf16.msra.mxu0 %v592
    %711 = vmatprep.subr.bf16.mxu0 0
    %712 = vmatpush2.bf16.msra.mxu0 0
    %713 = vmatprep.subr.bf16.mxu0 0
    %714 = vmatpush2.bf16.msra.mxu0 0
    %715 = vmatprep.subr.bf16.mxu0 0
    %716 = vmatpush2.bf16.msra.mxu0 0
    %717 = vmatprep.subr.bf16.mxu0 0
    %718 = vmatpush2.bf16.msra.mxu0 0
    %719 = vmatprep.subr.bf16.mxu0 0
    %720 = vmatpush2.bf16.msra.mxu0 0
    %721 = vmatprep.subr.bf16.mxu0 0
    %722 = vmatpush2.bf16.msra.mxu0 0
    %723 = vmatprep.subr.bf16.mxu0 0
    %724 = vmatpush2.bf16.msra.mxu0 0
    %725 = vmatprep.subr.bf16.mxu0 0
    %726 = vmatpush2.bf16.msra.mxu0 0
    %727 = vmatprep.mubr.bf16.mxu0 0
    %728 = vmatmul.mubr.bf16.gmra.mxu0 0
    %v729 = vpop.f32.mrf.mxu0
    %v730 = vadd.f32 0.0, %v729
    %v731 = vpop.f32.mrf.mxu0
    %v732 = vadd.f32 0.0, %v731
    %v733 = vpop.f32.mrf.mxu0
    %v734 = vpop.f32.mrf.mxu0
    %735 = vdwg.mxu0
    %v740 = vcombine.low %v689, %v691
    %v741 = vcombine.low %v730, %v732
    %v743 = vunpack.c.l.s4 1983009808
    %v744 = vunpack.c.0.s8 %v743
    %v745 = vlaneseq
    %v746 = vshrl.u32 %v745, 7
    %v747 = vsub.s32 %v744, %v746
    %v748 = vrot.slane %v740, %v747
    %v750 = vunpack.c.l.s4 1983009808
    %v751 = vunpack.c.0.s8 %v750
    %v752 = vlaneseq
    %v753 = vshrl.u32 %v752, 7
    %v754 = vsub.s32 %v751, %v753
    %v755 = vrot.slane %v741, %v754
    %v756 = vcombine.low %v748, %v755
    %v758 = vadd.f32 %v493, %v756
    %v759 = vmul.f32 %v758, 0.5
    %v760 = vtanh.pop %v759
    %v761 = vadd.f32 %v760, 1.0
    %v762 = vmul.f32 %v761, 0.5
    %v764 = vrot.slane %v758, 2
    %v766 = vmul.f32 %v764, 0.5
    %v767 = vtanh.pop %v766
    %v768 = vadd.f32 %v767, 1.0
    %v769 = vmul.f32 %v768, 0.5
    %v770 = vrot.slane %v758, 4
    %v772 = vtanh.pop %v770
    %v773 = vrot.slane %v758, 6
    %v775 = vmul.f32 %v773, 0.5
    %v776 = vtanh.pop %v775
    %v777 = vadd.f32 %v776, 1.0
    %v778 = vmul.f32 %v777, 0.5
    %v779 = vmul.f32 %v769, 0.0
    %v780 = vmul.f32 %v762, %v772
    %v781 = vadd.f32 %v779, %v780
    %v782 = vtanh.pop %v781
    %v783 = vmul.f32 %v778, %v782
    %784 = vst [vmem:[#allocation3] sm:$0x3] %v783
    %s785 = scalar_lea.vmem [#allocation2], 8
    %v786 = vld [vmem:[%s785] sm:$0xff]
    %v787 = vpack.c.bf16 %v783, %v783
    %788 = vmatprep.subr.bf16.mxu0 %v619
    %789 = vmatpush1.bf16.msra.mxu0 %v618
    %790 = vmatprep.subr.bf16.mxu0 %v615
    %791 = vmatpush1.bf16.msra.mxu0 %v614
    %792 = vmatprep.subr.bf16.mxu0 %v611
    %793 = vmatpush1.bf16.msra.mxu0 %v610
    %794 = vmatprep.subr.bf16.mxu0 %v607
    %795 = vmatpush1.bf16.msra.mxu0 %v606
    %796 = vmatprep.subr.bf16.mxu0 %v603
    %797 = vmatpush1.bf16.msra.mxu0 %v602
    %798 = vmatprep.subr.bf16.mxu0 %v599
    %799 = vmatpush1.bf16.msra.mxu0 %v598
    %800 = vmatprep.subr.bf16.mxu0 %v595
    %801 = vmatpush1.bf16.msra.mxu0 %v594
    %802 = vmatprep.subr.bf16.mxu0 %v591
    %803 = vmatpush1.bf16.msra.mxu0 %v590
    %804 = vmatprep.subr.bf16.mxu0 0
    %805 = vmatpush2.bf16.msra.mxu0 0
    %806 = vmatprep.subr.bf16.mxu0 0
    %807 = vmatpush2.bf16.msra.mxu0 0
    %808 = vmatprep.subr.bf16.mxu0 0
    %809 = vmatpush2.bf16.msra.mxu0 0
    %810 = vmatprep.subr.bf16.mxu0 0
    %811 = vmatpush2.bf16.msra.mxu0 0
    %812 = vmatprep.subr.bf16.mxu0 0
    %813 = vmatpush2.bf16.msra.mxu0 0
    %814 = vmatprep.subr.bf16.mxu0 0
    %815 = vmatpush2.bf16.msra.mxu0 0
    %816 = vmatprep.subr.bf16.mxu0 0
    %817 = vmatpush2.bf16.msra.mxu0 0
    %818 = vmatprep.subr.bf16.mxu0 0
    %819 = vmatpush2.bf16.msra.mxu0 0
    %820 = vmatprep.mubr.bf16.mxu0 0
    %821 = vmatmul.mubr.bf16.gmra.mxu0 %v787
    %v822 = vpop.f32.mrf.mxu0
    %v823 = vadd.f32 0.0, %v822
    %v824 = vpop.f32.mrf.mxu0
    %v825 = vadd.f32 0.0, %v824
    %v826 = vpop.f32.mrf.mxu0
    %v827 = vpop.f32.mrf.mxu0
    %828 = vdwg.mxu0
    %829 = vmatprep.subr.bf16.mxu0 %v621
    %830 = vmatpush1.bf16.msra.mxu0 %v620
    %831 = vmatprep.subr.bf16.mxu0 %v617
    %832 = vmatpush1.bf16.msra.mxu0 %v616
    %833 = vmatprep.subr.bf16.mxu0 %v613
    %834 = vmatpush1.bf16.msra.mxu0 %v612
    %835 = vmatprep.subr.bf16.mxu0 %v609
    %836 = vmatpush1.bf16.msra.mxu0 %v608
    %837 = vmatprep.subr.bf16.mxu0 %v605
    %838 = vmatpush1.bf16.msra.mxu0 %v604
    %839 = vmatprep.subr.bf16.mxu0 %v601
    %840 = vmatpush1.bf16.msra.mxu0 %v600
    %841 = vmatprep.subr.bf16.mxu0 %v597
    %842 = vmatpush1.bf16.msra.mxu0 %v596
    %843 = vmatprep.subr.bf16.mxu0 %v593
    %844 = vmatpush1.bf16.msra.mxu0 %v592
    %845 = vmatprep.subr.bf16.mxu0 0
    %846 = vmatpush2.bf16.msra.mxu0 0
    %847 = vmatprep.subr.bf16.mxu0 0
    %848 = vmatpush2.bf16.msra.mxu0 0
    %849 = vmatprep.subr.bf16.mxu0 0
    %850 = vmatpush2.bf16.msra.mxu0 0
    %851 = vmatprep.subr.bf16.mxu0 0
    %852 = vmatpush2.bf16.msra.mxu0 0
    %853 = vmatprep.subr.bf16.mxu0 0
    %854 = vmatpush2.bf16.msra.mxu0 0
    %855 = vmatprep.subr.bf16.mxu0 0
    %856 = vmatpush2.bf16.msra.mxu0 0
    %857 = vmatprep.subr.bf16.mxu0 0
    %858 = vmatpush2.bf16.msra.mxu0 0
    %859 = vmatprep.subr.bf16.mxu0 0
    %860 = vmatpush2.bf16.msra.mxu0 0
    %861 = vmatprep.mubr.bf16.mxu0 0
    %862 = vmatmul.mubr.bf16.gmra.mxu0 %v787
    %v863 = vpop.f32.mrf.mxu0
    %v864 = vadd.f32 0.0, %v863
    %v865 = vpop.f32.mrf.mxu0
    %v866 = vadd.f32 0.0, %v865
    %v867 = vpop.f32.mrf.mxu0
    %v868 = vpop.f32.mrf.mxu0
    %869 = vdwg.mxu0
    %v874 = vcombine.low %v823, %v825
    %v875 = vcombine.low %v864, %v866
    %v877 = vunpack.c.l.s4 1983009808
    %v878 = vunpack.c.0.s8 %v877
    %v879 = vlaneseq
    %v880 = vshrl.u32 %v879, 7
    %v881 = vsub.s32 %v878, %v880
    %v882 = vrot.slane %v874, %v881
    %v884 = vunpack.c.l.s4 1983009808
    %v885 = vunpack.c.0.s8 %v884
    %v886 = vlaneseq
    %v887 = vshrl.u32 %v886, 7
    %v888 = vsub.s32 %v885, %v887
    %v889 = vrot.slane %v875, %v888
    %v890 = vcombine.low %v882, %v889
    %v892 = vadd.f32 %v786, %v890
    %v893 = vmul.f32 %v892, 0.5
    %v894 = vtanh.pop %v893
    %v895 = vadd.f32 %v894, 1.0
    %v896 = vmul.f32 %v895, 0.5
    %v898 = vrot.slane %v892, 2
    %v900 = vmul.f32 %v898, 0.5
    %v901 = vtanh.pop %v900
    %v902 = vadd.f32 %v901, 1.0
    %v903 = vmul.f32 %v902, 0.5
    %v904 = vrot.slane %v892, 4
    %v906 = vtanh.pop %v904
    %v907 = vrot.slane %v892, 6
    %v909 = vmul.f32 %v907, 0.5
    %v910 = vtanh.pop %v909
    %v911 = vadd.f32 %v910, 1.0
    %v912 = vmul.f32 %v911, 0.5
    %v913 = vmul.f32 %v903, %v781
    %v914 = vmul.f32 %v896, %v906
    %v915 = vadd.f32 %v913, %v914
    %v916 = vtanh.pop %v915
    %v917 = vmul.f32 %v912, %v916
    %s918 = scalar_lea.vmem [#allocation3], 2
    %919 = vst [vmem:[%s918] sm:$0x3] %v917
    %s920 = scalar_lea.vmem [#allocation2], 16
    %v921 = vld [vmem:[%s920] sm:$0xff]
    %v922 = vpack.c.bf16 %v917, %v917
    %923 = vmatprep.subr.bf16.mxu0 %v619
    %924 = vmatpush1.bf16.msra.mxu0 %v618
    %925 = vmatprep.subr.bf16.mxu0 %v615
    %926 = vmatpush1.bf16.msra.mxu0 %v614
    %927 = vmatprep.subr.bf16.mxu0 %v611
    %928 = vmatpush1.bf16.msra.mxu0 %v610
    %929 = vmatprep.subr.bf16.mxu0 %v607
    %930 = vmatpush1.bf16.msra.mxu0 %v606
    %931 = vmatprep.subr.bf16.mxu0 %v603
    %932 = vmatpush1.bf16.msra.mxu0 %v602
    %933 = vmatprep.subr.bf16.mxu0 %v599
    %934 = vmatpush1.bf16.msra.mxu0 %v598
    %935 = vmatprep.subr.bf16.mxu0 %v595
    %936 = vmatpush1.bf16.msra.mxu0 %v594
    %937 = vmatprep.subr.bf16.mxu0 %v591
    %938 = vmatpush1.bf16.msra.mxu0 %v590
    %939 = vmatprep.subr.bf16.mxu0 0
    %940 = vmatpush2.bf16.msra.mxu0 0
    %941 = vmatprep.subr.bf16.mxu0 0
    %942 = vmatpush2.bf16.msra.mxu0 0
    %943 = vmatprep.subr.bf16.mxu0 0
    %944 = vmatpush2.bf16.msra.mxu0 0
    %945 = vmatprep.subr.bf16.mxu0 0
    %946 = vmatpush2.bf16.msra.mxu0 0
    %947 = vmatprep.subr.bf16.mxu0 0
    %948 = vmatpush2.bf16.msra.mxu0 0
    %949 = vmatprep.subr.bf16.mxu0 0
    %950 = vmatpush2.bf16.msra.mxu0 0
    %951 = vmatprep.subr.bf16.mxu0 0
    %952 = vmatpush2.bf16.msra.mxu0 0
    %953 = vmatprep.subr.bf16.mxu0 0
    %954 = vmatpush2.bf16.msra.mxu0 0
    %955 = vmatprep.mubr.bf16.mxu0 0
    %956 = vmatmul.mubr.bf16.gmra.mxu0 %v922
    %v957 = vpop.f32.mrf.mxu0
    %v958 = vadd.f32 0.0, %v957
    %v959 = vpop.f32.mrf.mxu0
    %v960 = vadd.f32 0.0, %v959
    %v961 = vpop.f32.mrf.mxu0
    %v962 = vpop.f32.mrf.mxu0
    %963 = vdwg.mxu0
    %964 = vmatprep.subr.bf16.mxu0 %v621
    %965 = vmatpush1.bf16.msra.mxu0 %v620
    %966 = vmatprep.subr.bf16.mxu0 %v617
    %967 = vmatpush1.bf16.msra.mxu0 %v616
    %968 = vmatprep.subr.bf16.mxu0 %v613
    %969 = vmatpush1.bf16.msra.mxu0 %v612
    %970 = vmatprep.subr.bf16.mxu0 %v609
    %971 = vmatpush1.bf16.msra.mxu0 %v608
    %972 = vmatprep.subr.bf16.mxu0 %v605
    %973 = vmatpush1.bf16.msra.mxu0 %v604
    %974 = vmatprep.subr.bf16.mxu0 %v601
    %975 = vmatpush1.bf16.msra.mxu0 %v600
    %976 = vmatprep.subr.bf16.mxu0 %v597
    %977 = vmatpush1.bf16.msra.mxu0 %v596
    %978 = vmatprep.subr.bf16.mxu0 %v593
    %979 = vmatpush1.bf16.msra.mxu0 %v592
    %980 = vmatprep.subr.bf16.mxu0 0
    %981 = vmatpush2.bf16.msra.mxu0 0
    %982 = vmatprep.subr.bf16.mxu0 0
    %983 = vmatpush2.bf16.msra.mxu0 0
    %984 = vmatprep.subr.bf16.mxu0 0
    %985 = vmatpush2.bf16.msra.mxu0 0
    %986 = vmatprep.subr.bf16.mxu0 0
    %987 = vmatpush2.bf16.msra.mxu0 0
    %988 = vmatprep.subr.bf16.mxu0 0
    %989 = vmatpush2.bf16.msra.mxu0 0
    %990 = vmatprep.subr.bf16.mxu0 0
    %991 = vmatpush2.bf16.msra.mxu0 0
    %992 = vmatprep.subr.bf16.mxu0 0
    %993 = vmatpush2.bf16.msra.mxu0 0
    %994 = vmatprep.subr.bf16.mxu0 0
    %995 = vmatpush2.bf16.msra.mxu0 0
    %996 = vmatprep.mubr.bf16.mxu0 0
    %997 = vmatmul.mubr.bf16.gmra.mxu0 %v922
    %v998 = vpop.f32.mrf.mxu0
    %v999 = vadd.f32 0.0, %v998
    %v1000 = vpop.f32.mrf.mxu0
    %v1001 = vadd.f32 0.0, %v1000
    %v1002 = vpop.f32.mrf.mxu0
    %v1003 = vpop.f32.mrf.mxu0
    %1004 = vdwg.mxu0
    %v1009 = vcombine.low %v958, %v960
    %v1010 = vcombine.low %v999, %v1001
    %v1012 = vunpack.c.l.s4 1983009808
    %v1013 = vunpack.c.0.s8 %v1012
    %v1014 = vlaneseq
    %v1015 = vshrl.u32 %v1014, 7
    %v1016 = vsub.s32 %v1013, %v1015
    %v1017 = vrot.slane %v1009, %v1016
    %v1019 = vunpack.c.l.s4 1983009808
    %v1020 = vunpack.c.0.s8 %v1019
    %v1021 = vlaneseq
    %v1022 = vshrl.u32 %v1021, 7
    %v1023 = vsub.s32 %v1020, %v1022
    %v1024 = vrot.slane %v1010, %v1023
    %v1025 = vcombine.low %v1017, %v1024
    %v1027 = vadd.f32 %v921, %v1025
    %v1028 = vmul.f32 %v1027, 0.5
    %v1029 = vtanh.pop %v1028
    %v1030 = vadd.f32 %v1029, 1.0
    %v1031 = vmul.f32 %v1030, 0.5
    %v1033 = vrot.slane %v1027, 2
    %v1035 = vmul.f32 %v1033, 0.5
    %v1036 = vtanh.pop %v1035
    %v1037 = vadd.f32 %v1036, 1.0
    %v1038 = vmul.f32 %v1037, 0.5
    %v1039 = vrot.slane %v1027, 4
    %v1041 = vtanh.pop %v1039
    %v1042 = vrot.slane %v1027, 6
    %v1044 = vmul.f32 %v1042, 0.5
    %v1045 = vtanh.pop %v1044
    %v1046 = vadd.f32 %v1045, 1.0
    %v1047 = vmul.f32 %v1046, 0.5
    %v1048 = vmul.f32 %v1038, %v915
    %v1049 = vmul.f32 %v1031, %v1041
    %v1050 = vadd.f32 %v1048, %v1049
    %v1051 = vtanh.pop %v1050
    %v1052 = vmul.f32 %v1047, %v1051
    %s1053 = scalar_lea.vmem [#allocation3], 4
    %1054 = vst [vmem:[%s1053] sm:$0x3] %v1052
    %s1055 = scalar_lea.vmem [#allocation2], 24
    %v1056 = vld [vmem:[%s1055] sm:$0xff]
    %v1057 = vpack.c.bf16 %v1052, %v1052
    %1058 = vmatprep.subr.bf16.mxu0 %v619
    %1059 = vmatpush1.bf16.msra.mxu0 %v618
    %1060 = vmatprep.subr.bf16.mxu0 %v615
    %1061 = vmatpush1.bf16.msra.mxu0 %v614
    %1062 = vmatprep.subr.bf16.mxu0 %v611
    %1063 = vmatpush1.bf16.msra.mxu0 %v610
    %1064 = vmatprep.subr.bf16.mxu0 %v607
    %1065 = vmatpush1.bf16.msra.mxu0 %v606
    %1066 = vmatprep.subr.bf16.mxu0 %v603
    %1067 = vmatpush1.bf16.msra.mxu0 %v602
    %1068 = vmatprep.subr.bf16.mxu0 %v599
    %1069 = vmatpush1.bf16.msra.mxu0 %v598
    %1070 = vmatprep.subr.bf16.mxu0 %v595
    %1071 = vmatpush1.bf16.msra.mxu0 %v594
    %1072 = vmatprep.subr.bf16.mxu0 %v591
    %1073 = vmatpush1.bf16.msra.mxu0 %v590
    %1074 = vmatprep.subr.bf16.mxu0 0
    %1075 = vmatpush2.bf16.msra.mxu0 0
    %1076 = vmatprep.subr.bf16.mxu0 0
    %1077 = vmatpush2.bf16.msra.mxu0 0
    %1078 = vmatprep.subr.bf16.mxu0 0
    %1079 = vmatpush2.bf16.msra.mxu0 0
    %1080 = vmatprep.subr.bf16.mxu0 0
    %1081 = vmatpush2.bf16.msra.mxu0 0
    %1082 = vmatprep.subr.bf16.mxu0 0
    %1083 = vmatpush2.bf16.msra.mxu0 0
    %1084 = vmatprep.subr.bf16.mxu0 0
    %1085 = vmatpush2.bf16.msra.mxu0 0
    %1086 = vmatprep.subr.bf16.mxu0 0
    %1087 = vmatpush2.bf16.msra.mxu0 0
    %1088 = vmatprep.subr.bf16.mxu0 0
    %1089 = vmatpush2.bf16.msra.mxu0 0
    %1090 = vmatprep.mubr.bf16.mxu0 0
    %1091 = vmatmul.mubr.bf16.gmra.mxu0 %v1057
    %v1092 = vpop.f32.mrf.mxu0
    %v1093 = vadd.f32 0.0, %v1092
    %v1094 = vpop.f32.mrf.mxu0
    %v1095 = vadd.f32 0.0, %v1094
    %v1096 = vpop.f32.mrf.mxu0
    %v1097 = vpop.f32.mrf.mxu0
    %1098 = vdwg.mxu0
    %1099 = vmatprep.subr.bf16.mxu0 %v621
    %1100 = vmatpush1.bf16.msra.mxu0 %v620
    %1101 = vmatprep.subr.bf16.mxu0 %v617
    %1102 = vmatpush1.bf16.msra.mxu0 %v616
    %1103 = vmatprep.subr.bf16.mxu0 %v613
    %1104 = vmatpush1.bf16.msra.mxu0 %v612
    %1105 = vmatprep.subr.bf16.mxu0 %v609
    %1106 = vmatpush1.bf16.msra.mxu0 %v608
    %1107 = vmatprep.subr.bf16.mxu0 %v605
    %1108 = vmatpush1.bf16.msra.mxu0 %v604
    %1109 = vmatprep.subr.bf16.mxu0 %v601
    %1110 = vmatpush1.bf16.msra.mxu0 %v600
    %1111 = vmatprep.subr.bf16.mxu0 %v597
    %1112 = vmatpush1.bf16.msra.mxu0 %v596
    %1113 = vmatprep.subr.bf16.mxu0 %v593
    %1114 = vmatpush1.bf16.msra.mxu0 %v592
    %1115 = vmatprep.subr.bf16.mxu0 0
    %1116 = vmatpush2.bf16.msra.mxu0 0
    %1117 = vmatprep.subr.bf16.mxu0 0
    %1118 = vmatpush2.bf16.msra.mxu0 0
    %1119 = vmatprep.subr.bf16.mxu0 0
    %1120 = vmatpush2.bf16.msra.mxu0 0
    %1121 = vmatprep.subr.bf16.mxu0 0
    %1122 = vmatpush2.bf16.msra.mxu0 0
    %1123 = vmatprep.subr.bf16.mxu0 0
    %1124 = vmatpush2.bf16.msra.mxu0 0
    %1125 = vmatprep.subr.bf16.mxu0 0
    %1126 = vmatpush2.bf16.msra.mxu0 0
    %1127 = vmatprep.subr.bf16.mxu0 0
    %1128 = vmatpush2.bf16.msra.mxu0 0
    %1129 = vmatprep.subr.bf16.mxu0 0
    %1130 = vmatpush2.bf16.msra.mxu0 0
    %1131 = vmatprep.mubr.bf16.mxu0 0
    %1132 = vmatmul.mubr.bf16.gmra.mxu0 %v1057
    %v1133 = vpop.f32.mrf.mxu0
    %v1134 = vadd.f32 0.0, %v1133
    %v1135 = vpop.f32.mrf.mxu0
    %v1136 = vadd.f32 0.0, %v1135
    %v1137 = vpop.f32.mrf.mxu0
    %v1138 = vpop.f32.mrf.mxu0
    %1139 = vdwg.mxu0
    %v1144 = vcombine.low %v1093, %v1095
    %v1145 = vcombine.low %v1134, %v1136
    %v1147 = vunpack.c.l.s4 1983009808
    %v1148 = vunpack.c.0.s8 %v1147
    %v1149 = vlaneseq
    %v1150 = vshrl.u32 %v1149, 7
    %v1151 = vsub.s32 %v1148, %v1150
    %v1152 = vrot.slane %v1144, %v1151
    %v1154 = vunpack.c.l.s4 1983009808
    %v1155 = vunpack.c.0.s8 %v1154
    %v1156 = vlaneseq
    %v1157 = vshrl.u32 %v1156, 7
    %v1158 = vsub.s32 %v1155, %v1157
    %v1159 = vrot.slane %v1145, %v1158
    %v1160 = vcombine.low %v1152, %v1159
    %v1162 = vadd.f32 %v1056, %v1160
    %v1163 = vmul.f32 %v1162, 0.5
    %v1164 = vtanh.pop %v1163
    %v1165 = vadd.f32 %v1164, 1.0
    %v1166 = vmul.f32 %v1165, 0.5
    %v1168 = vrot.slane %v1162, 2
    %v1170 = vmul.f32 %v1168, 0.5
    %v1171 = vtanh.pop %v1170
    %v1172 = vadd.f32 %v1171, 1.0
    %v1173 = vmul.f32 %v1172, 0.5
    %v1174 = vrot.slane %v1162, 4
    %v1176 = vtanh.pop %v1174
    %v1177 = vrot.slane %v1162, 6
    %v1179 = vmul.f32 %v1177, 0.5
    %v1180 = vtanh.pop %v1179
    %v1181 = vadd.f32 %v1180, 1.0
    %v1182 = vmul.f32 %v1181, 0.5
    %v1183 = vmul.f32 %v1173, %v1050
    %v1184 = vmul.f32 %v1166, %v1176
    %v1185 = vadd.f32 %v1183, %v1184
    %v1186 = vtanh.pop %v1185
    %v1187 = vmul.f32 %v1182, %v1186
    %s1188 = scalar_lea.vmem [#allocation3], 6
    %1189 = vst [vmem:[%s1188] sm:$0x3] %v1187
    %s1190 = scalar_lea.vmem [#allocation2], 32
    %v1191 = vld [vmem:[%s1190] sm:$0xff]
    %v1192 = vpack.c.bf16 %v1187, %v1187
    %1193 = vmatprep.subr.bf16.mxu0 %v619
    %1194 = vmatpush1.bf16.msra.mxu0 %v618
    %1195 = vmatprep.subr.bf16.mxu0 %v615
    %1196 = vmatpush1.bf16.msra.mxu0 %v614
    %1197 = vmatprep.subr.bf16.mxu0 %v611
    %1198 = vmatpush1.bf16.msra.mxu0 %v610
    %1199 = vmatprep.subr.bf16.mxu0 %v607
    %1200 = vmatpush1.bf16.msra.mxu0 %v606
    %1201 = vmatprep.subr.bf16.mxu0 %v603
    %1202 = vmatpush1.bf16.msra.mxu0 %v602
    %1203 = vmatprep.subr.bf16.mxu0 %v599
    %1204 = vmatpush1.bf16.msra.mxu0 %v598
    %1205 = vmatprep.subr.bf16.mxu0 %v595
    %1206 = vmatpush1.bf16.msra.mxu0 %v594
    %1207 = vmatprep.subr.bf16.mxu0 %v591
    %1208 = vmatpush1.bf16.msra.mxu0 %v590
    %1209 = vmatprep.subr.bf16.mxu0 0
    %1210 = vmatpush2.bf16.msra.mxu0 0
    %1211 = vmatprep.subr.bf16.mxu0 0
    %1212 = vmatpush2.bf16.msra.mxu0 0
    %1213 = vmatprep.subr.bf16.mxu0 0
    %1214 = vmatpush2.bf16.msra.mxu0 0
    %1215 = vmatprep.subr.bf16.mxu0 0
    %1216 = vmatpush2.bf16.msra.mxu0 0
    %1217 = vmatprep.subr.bf16.mxu0 0
    %1218 = vmatpush2.bf16.msra.mxu0 0
    %1219 = vmatprep.subr.bf16.mxu0 0
    %1220 = vmatpush2.bf16.msra.mxu0 0
    %1221 = vmatprep.subr.bf16.mxu0 0
    %1222 = vmatpush2.bf16.msra.mxu0 0
    %1223 = vmatprep.subr.bf16.mxu0 0
    %1224 = vmatpush2.bf16.msra.mxu0 0
    %1225 = vmatprep.mubr.bf16.mxu0 0
    %1226 = vmatmul.mubr.bf16.gmra.mxu0 %v1192
    %v1227 = vpop.f32.mrf.mxu0
    %v1228 = vadd.f32 0.0, %v1227
    %v1229 = vpop.f32.mrf.mxu0
    %v1230 = vadd.f32 0.0, %v1229
    %v1231 = vpop.f32.mrf.mxu0
    %v1232 = vpop.f32.mrf.mxu0
    %1233 = vdwg.mxu0
    %1234 = vmatprep.subr.bf16.mxu0 %v621
    %1235 = vmatpush1.bf16.msra.mxu0 %v620
    %1236 = vmatprep.subr.bf16.mxu0 %v617
    %1237 = vmatpush1.bf16.msra.mxu0 %v616
    %1238 = vmatprep.subr.bf16.mxu0 %v613
    %1239 = vmatpush1.bf16.msra.mxu0 %v612
    %1240 = vmatprep.subr.bf16.mxu0 %v609
    %1241 = vmatpush1.bf16.msra.mxu0 %v608
    %1242 = vmatprep.subr.bf16.mxu0 %v605
    %1243 = vmatpush1.bf16.msra.mxu0 %v604
    %1244 = vmatprep.subr.bf16.mxu0 %v601
    %1245 = vmatpush1.bf16.msra.mxu0 %v600
    %1246 = vmatprep.subr.bf16.mxu0 %v597
    %1247 = vmatpush1.bf16.msra.mxu0 %v596
    %1248 = vmatprep.subr.bf16.mxu0 %v593
    %1249 = vmatpush1.bf16.msra.mxu0 %v592
    %1250 = vmatprep.subr.bf16.mxu0 0
    %1251 = vmatpush2.bf16.msra.mxu0 0
    %1252 = vmatprep.subr.bf16.mxu0 0
    %1253 = vmatpush2.bf16.msra.mxu0 0
    %1254 = vmatprep.subr.bf16.mxu0 0
    %1255 = vmatpush2.bf16.msra.mxu0 0
    %1256 = vmatprep.subr.bf16.mxu0 0
    %1257 = vmatpush2.bf16.msra.mxu0 0
    %1258 = vmatprep.subr.bf16.mxu0 0
    %1259 = vmatpush2.bf16.msra.mxu0 0
    %1260 = vmatprep.subr.bf16.mxu0 0
    %1261 = vmatpush2.bf16.msra.mxu0 0
    %1262 = vmatprep.subr.bf16.mxu0 0
    %1263 = vmatpush2.bf16.msra.mxu0 0
    %1264 = vmatprep.subr.bf16.mxu0 0
    %1265 = vmatpush2.bf16.msra.mxu0 0
    %1266 = vmatprep.mubr.bf16.mxu0 0
    %1267 = vmatmul.mubr.bf16.gmra.mxu0 %v1192
    %v1268 = vpop.f32.mrf.mxu0
    %v1269 = vadd.f32 0.0, %v1268
    %v1270 = vpop.f32.mrf.mxu0
    %v1271 = vadd.f32 0.0, %v1270
    %v1272 = vpop.f32.mrf.mxu0
    %v1273 = vpop.f32.mrf.mxu0
    %1274 = vdwg.mxu0
    %v1279 = vcombine.low %v1228, %v1230
    %v1280 = vcombine.low %v1269, %v1271
    %v1282 = vunpack.c.l.s4 1983009808
    %v1283 = vunpack.c.0.s8 %v1282
    %v1284 = vlaneseq
    %v1285 = vshrl.u32 %v1284, 7
    %v1286 = vsub.s32 %v1283, %v1285
    %v1287 = vrot.slane %v1279, %v1286
    %v1289 = vunpack.c.l.s4 1983009808
    %v1290 = vunpack.c.0.s8 %v1289
    %v1291 = vlaneseq
    %v1292 = vshrl.u32 %v1291, 7
    %v1293 = vsub.s32 %v1290, %v1292
    %v1294 = vrot.slane %v1280, %v1293
    %v1295 = vcombine.low %v1287, %v1294
    %v1297 = vadd.f32 %v1191, %v1295
    %v1298 = vmul.f32 %v1297, 0.5
    %v1299 = vtanh.pop %v1298
    %v1300 = vadd.f32 %v1299, 1.0
    %v1301 = vmul.f32 %v1300, 0.5
    %v1303 = vrot.slane %v1297, 2
    %v1305 = vmul.f32 %v1303, 0.5
    %v1306 = vtanh.pop %v1305
    %v1307 = vadd.f32 %v1306, 1.0
    %v1308 = vmul.f32 %v1307, 0.5
    %v1309 = vrot.slane %v1297, 4
    %v1311 = vtanh.pop %v1309
    %v1312 = vrot.slane %v1297, 6
    %v1314 = vmul.f32 %v1312, 0.5
    %v1315 = vtanh.pop %v1314
    %v1316 = vadd.f32 %v1315, 1.0
    %v1317 = vmul.f32 %v1316, 0.5
    %v1318 = vmul.f32 %v1308, %v1185
    %v1319 = vmul.f32 %v1301, %v1311
    %v1320 = vadd.f32 %v1318, %v1319
    %v1321 = vtanh.pop %v1320
    %v1322 = vmul.f32 %v1317, %v1321
    %s1323 = scalar_lea.vmem [#allocation3], 8
    %1324 = vst [vmem:[%s1323] sm:$0x3] %v1322
    %s1325 = scalar_lea.vmem [#allocation2], 40
    %v1326 = vld [vmem:[%s1325] sm:$0xff]
    %v1327 = vpack.c.bf16 %v1322, %v1322
    %1328 = vmatprep.subr.bf16.mxu0 %v619
    %1329 = vmatpush1.bf16.msra.mxu0 %v618
    %1330 = vmatprep.subr.bf16.mxu0 %v615
    %1331 = vmatpush1.bf16.msra.mxu0 %v614
    %1332 = vmatprep.subr.bf16.mxu0 %v611
    %1333 = vmatpush1.bf16.msra.mxu0 %v610
    %1334 = vmatprep.subr.bf16.mxu0 %v607
    %1335 = vmatpush1.bf16.msra.mxu0 %v606
    %1336 = vmatprep.subr.bf16.mxu0 %v603
    %1337 = vmatpush1.bf16.msra.mxu0 %v602
    %1338 = vmatprep.subr.bf16.mxu0 %v599
    %1339 = vmatpush1.bf16.msra.mxu0 %v598
    %1340 = vmatprep.subr.bf16.mxu0 %v595
    %1341 = vmatpush1.bf16.msra.mxu0 %v594
    %1342 = vmatprep.subr.bf16.mxu0 %v591
    %1343 = vmatpush1.bf16.msra.mxu0 %v590
    %1344 = vmatprep.subr.bf16.mxu0 0
    %1345 = vmatpush2.bf16.msra.mxu0 0
    %1346 = vmatprep.subr.bf16.mxu0 0
    %1347 = vmatpush2.bf16.msra.mxu0 0
    %1348 = vmatprep.subr.bf16.mxu0 0
    %1349 = vmatpush2.bf16.msra.mxu0 0
    %1350 = vmatprep.subr.bf16.mxu0 0
    %1351 = vmatpush2.bf16.msra.mxu0 0
    %1352 = vmatprep.subr.bf16.mxu0 0
    %1353 = vmatpush2.bf16.msra.mxu0 0
    %1354 = vmatprep.subr.bf16.mxu0 0
    %1355 = vmatpush2.bf16.msra.mxu0 0
    %1356 = vmatprep.subr.bf16.mxu0 0
    %1357 = vmatpush2.bf16.msra.mxu0 0
    %1358 = vmatprep.subr.bf16.mxu0 0
    %1359 = vmatpush2.bf16.msra.mxu0 0
    %1360 = vmatprep.mubr.bf16.mxu0 0
    %1361 = vmatmul.mubr.bf16.gmra.mxu0 %v1327
    %v1362 = vpop.f32.mrf.mxu0
    %v1363 = vadd.f32 0.0, %v1362
    %v1364 = vpop.f32.mrf.mxu0
    %v1365 = vadd.f32 0.0, %v1364
    %v1366 = vpop.f32.mrf.mxu0
    %v1367 = vpop.f32.mrf.mxu0
    %1368 = vdwg.mxu0
    %1369 = vmatprep.subr.bf16.mxu0 %v621
    %1370 = vmatpush1.bf16.msra.mxu0 %v620
    %1371 = vmatprep.subr.bf16.mxu0 %v617
    %1372 = vmatpush1.bf16.msra.mxu0 %v616
    %1373 = vmatprep.subr.bf16.mxu0 %v613
    %1374 = vmatpush1.bf16.msra.mxu0 %v612
    %1375 = vmatprep.subr.bf16.mxu0 %v609
    %1376 = vmatpush1.bf16.msra.mxu0 %v608
    %1377 = vmatprep.subr.bf16.mxu0 %v605
    %1378 = vmatpush1.bf16.msra.mxu0 %v604
    %1379 = vmatprep.subr.bf16.mxu0 %v601
    %1380 = vmatpush1.bf16.msra.mxu0 %v600
    %1381 = vmatprep.subr.bf16.mxu0 %v597
    %1382 = vmatpush1.bf16.msra.mxu0 %v596
    %1383 = vmatprep.subr.bf16.mxu0 %v593
    %1384 = vmatpush1.bf16.msra.mxu0 %v592
    %1385 = vmatprep.subr.bf16.mxu0 0
    %1386 = vmatpush2.bf16.msra.mxu0 0
    %1387 = vmatprep.subr.bf16.mxu0 0
    %1388 = vmatpush2.bf16.msra.mxu0 0
    %1389 = vmatprep.subr.bf16.mxu0 0
    %1390 = vmatpush2.bf16.msra.mxu0 0
    %1391 = vmatprep.subr.bf16.mxu0 0
    %1392 = vmatpush2.bf16.msra.mxu0 0
    %1393 = vmatprep.subr.bf16.mxu0 0
    %1394 = vmatpush2.bf16.msra.mxu0 0
    %1395 = vmatprep.subr.bf16.mxu0 0
    %1396 = vmatpush2.bf16.msra.mxu0 0
    %1397 = vmatprep.subr.bf16.mxu0 0
    %1398 = vmatpush2.bf16.msra.mxu0 0
    %1399 = vmatprep.subr.bf16.mxu0 0
    %1400 = vmatpush2.bf16.msra.mxu0 0
    %1401 = vmatprep.mubr.bf16.mxu0 0
    %1402 = vmatmul.mubr.bf16.gmra.mxu0 %v1327
    %v1403 = vpop.f32.mrf.mxu0
    %v1404 = vadd.f32 0.0, %v1403
    %v1405 = vpop.f32.mrf.mxu0
    %v1406 = vadd.f32 0.0, %v1405
    %v1407 = vpop.f32.mrf.mxu0
    %v1408 = vpop.f32.mrf.mxu0
    %1409 = vdwg.mxu0
    %v1414 = vcombine.low %v1363, %v1365
    %v1415 = vcombine.low %v1404, %v1406
    %v1417 = vunpack.c.l.s4 1983009808
    %v1418 = vunpack.c.0.s8 %v1417
    %v1419 = vlaneseq
    %v1420 = vshrl.u32 %v1419, 7
    %v1421 = vsub.s32 %v1418, %v1420
    %v1422 = vrot.slane %v1414, %v1421
    %v1424 = vunpack.c.l.s4 1983009808
    %v1425 = vunpack.c.0.s8 %v1424
    %v1426 = vlaneseq
    %v1427 = vshrl.u32 %v1426, 7
    %v1428 = vsub.s32 %v1425, %v1427
    %v1429 = vrot.slane %v1415, %v1428
    %v1430 = vcombine.low %v1422, %v1429
    %v1432 = vadd.f32 %v1326, %v1430
    %v1433 = vmul.f32 %v1432, 0.5
    %v1434 = vtanh.pop %v1433
    %v1435 = vadd.f32 %v1434, 1.0
    %v1436 = vmul.f32 %v1435, 0.5
    %v1438 = vrot.slane %v1432, 2
    %v1440 = vmul.f32 %v1438, 0.5
    %v1441 = vtanh.pop %v1440
    %v1442 = vadd.f32 %v1441, 1.0
    %v1443 = vmul.f32 %v1442, 0.5
    %v1444 = vrot.slane %v1432, 4
    %v1446 = vtanh.pop %v1444
    %v1447 = vrot.slane %v1432, 6
    %v1449 = vmul.f32 %v1447, 0.5
    %v1450 = vtanh.pop %v1449
    %v1451 = vadd.f32 %v1450, 1.0
    %v1452 = vmul.f32 %v1451, 0.5
    %v1453 = vmul.f32 %v1443, %v1320
    %v1454 = vmul.f32 %v1436, %v1446
    %v1455 = vadd.f32 %v1453, %v1454
    %v1456 = vtanh.pop %v1455
    %v1457 = vmul.f32 %v1452, %v1456
    %s1458 = scalar_lea.vmem [#allocation3], 10
    %1459 = vst [vmem:[%s1458] sm:$0x3] %v1457
    %s1460 = scalar_lea.vmem [#allocation2], 48
    %v1461 = vld [vmem:[%s1460] sm:$0xff]
    %v1462 = vpack.c.bf16 %v1457, %v1457
    %1463 = vmatprep.subr.bf16.mxu0 %v619
    %1464 = vmatpush1.bf16.msra.mxu0 %v618
    %1465 = vmatprep.subr.bf16.mxu0 %v615
    %1466 = vmatpush1.bf16.msra.mxu0 %v614
    %1467 = vmatprep.subr.bf16.mxu0 %v611
    %1468 = vmatpush1.bf16.msra.mxu0 %v610
    %1469 = vmatprep.subr.bf16.mxu0 %v607
    %1470 = vmatpush1.bf16.msra.mxu0 %v606
    %1471 = vmatprep.subr.bf16.mxu0 %v603
    %1472 = vmatpush1.bf16.msra.mxu0 %v602
    %1473 = vmatprep.subr.bf16.mxu0 %v599
    %1474 = vmatpush1.bf16.msra.mxu0 %v598
    %1475 = vmatprep.subr.bf16.mxu0 %v595
    %1476 = vmatpush1.bf16.msra.mxu0 %v594
    %1477 = vmatprep.subr.bf16.mxu0 %v591
    %1478 = vmatpush1.bf16.msra.mxu0 %v590
    %1479 = vmatprep.subr.bf16.mxu0 0
    %1480 = vmatpush2.bf16.msra.mxu0 0
    %1481 = vmatprep.subr.bf16.mxu0 0
    %1482 = vmatpush2.bf16.msra.mxu0 0
    %1483 = vmatprep.subr.bf16.mxu0 0
    %1484 = vmatpush2.bf16.msra.mxu0 0
    %1485 = vmatprep.subr.bf16.mxu0 0
    %1486 = vmatpush2.bf16.msra.mxu0 0
    %1487 = vmatprep.subr.bf16.mxu0 0
    %1488 = vmatpush2.bf16.msra.mxu0 0
    %1489 = vmatprep.subr.bf16.mxu0 0
    %1490 = vmatpush2.bf16.msra.mxu0 0
    %1491 = vmatprep.subr.bf16.mxu0 0
    %1492 = vmatpush2.bf16.msra.mxu0 0
    %1493 = vmatprep.subr.bf16.mxu0 0
    %1494 = vmatpush2.bf16.msra.mxu0 0
    %1495 = vmatprep.mubr.bf16.mxu0 0
    %1496 = vmatmul.mubr.bf16.gmra.mxu0 %v1462
    %v1497 = vpop.f32.mrf.mxu0
    %v1498 = vadd.f32 0.0, %v1497
    %v1499 = vpop.f32.mrf.mxu0
    %v1500 = vadd.f32 0.0, %v1499
    %v1501 = vpop.f32.mrf.mxu0
    %v1502 = vpop.f32.mrf.mxu0
    %1503 = vdwg.mxu0
    %1504 = vmatprep.subr.bf16.mxu0 %v621
    %1505 = vmatpush1.bf16.msra.mxu0 %v620
    %1506 = vmatprep.subr.bf16.mxu0 %v617
    %1507 = vmatpush1.bf16.msra.mxu0 %v616
    %1508 = vmatprep.subr.bf16.mxu0 %v613
    %1509 = vmatpush1.bf16.msra.mxu0 %v612
    %1510 = vmatprep.subr.bf16.mxu0 %v609
    %1511 = vmatpush1.bf16.msra.mxu0 %v608
    %1512 = vmatprep.subr.bf16.mxu0 %v605
    %1513 = vmatpush1.bf16.msra.mxu0 %v604
    %1514 = vmatprep.subr.bf16.mxu0 %v601
    %1515 = vmatpush1.bf16.msra.mxu0 %v600
    %1516 = vmatprep.subr.bf16.mxu0 %v597
    %1517 = vmatpush1.bf16.msra.mxu0 %v596
    %1518 = vmatprep.subr.bf16.mxu0 %v593
    %1519 = vmatpush1.bf16.msra.mxu0 %v592
    %1520 = vmatprep.subr.bf16.mxu0 0
    %1521 = vmatpush2.bf16.msra.mxu0 0
    %1522 = vmatprep.subr.bf16.mxu0 0
    %1523 = vmatpush2.bf16.msra.mxu0 0
    %1524 = vmatprep.subr.bf16.mxu0 0
    %1525 = vmatpush2.bf16.msra.mxu0 0
    %1526 = vmatprep.subr.bf16.mxu0 0
    %1527 = vmatpush2.bf16.msra.mxu0 0
    %1528 = vmatprep.subr.bf16.mxu0 0
    %1529 = vmatpush2.bf16.msra.mxu0 0
    %1530 = vmatprep.subr.bf16.mxu0 0
    %1531 = vmatpush2.bf16.msra.mxu0 0
    %1532 = vmatprep.subr.bf16.mxu0 0
    %1533 = vmatpush2.bf16.msra.mxu0 0
    %1534 = vmatprep.subr.bf16.mxu0 0
    %1535 = vmatpush2.bf16.msra.mxu0 0
    %1536 = vmatprep.mubr.bf16.mxu0 0
    %1537 = vmatmul.mubr.bf16.gmra.mxu0 %v1462
    %v1538 = vpop.f32.mrf.mxu0
    %v1539 = vadd.f32 0.0, %v1538
    %v1540 = vpop.f32.mrf.mxu0
    %v1541 = vadd.f32 0.0, %v1540
    %v1542 = vpop.f32.mrf.mxu0
    %v1543 = vpop.f32.mrf.mxu0
    %1544 = vdwg.mxu0
    %v1549 = vcombine.low %v1498, %v1500
    %v1550 = vcombine.low %v1539, %v1541
    %v1552 = vunpack.c.l.s4 1983009808
    %v1553 = vunpack.c.0.s8 %v1552
    %v1554 = vlaneseq
    %v1555 = vshrl.u32 %v1554, 7
    %v1556 = vsub.s32 %v1553, %v1555
    %v1557 = vrot.slane %v1549, %v1556
    %v1559 = vunpack.c.l.s4 1983009808
    %v1560 = vunpack.c.0.s8 %v1559
    %v1561 = vlaneseq
    %v1562 = vshrl.u32 %v1561, 7
    %v1563 = vsub.s32 %v1560, %v1562
    %v1564 = vrot.slane %v1550, %v1563
    %v1565 = vcombine.low %v1557, %v1564
    %v1567 = vadd.f32 %v1461, %v1565
    %v1568 = vmul.f32 %v1567, 0.5
    %v1569 = vtanh.pop %v1568
    %v1570 = vadd.f32 %v1569, 1.0
    %v1571 = vmul.f32 %v1570, 0.5
    %v1573 = vrot.slane %v1567, 2
    %v1575 = vmul.f32 %v1573, 0.5
    %v1576 = vtanh.pop %v1575
    %v1577 = vadd.f32 %v1576, 1.0
    %v1578 = vmul.f32 %v1577, 0.5
    %v1579 = vrot.slane %v1567, 4
    %v1581 = vtanh.pop %v1579
    %v1582 = vrot.slane %v1567, 6
    %v1584 = vmul.f32 %v1582, 0.5
    %v1585 = vtanh.pop %v1584
    %v1586 = vadd.f32 %v1585, 1.0
    %v1587 = vmul.f32 %v1586, 0.5
    %v1588 = vmul.f32 %v1578, %v1455
    %v1589 = vmul.f32 %v1571, %v1581
    %v1590 = vadd.f32 %v1588, %v1589
    %v1591 = vtanh.pop %v1590
    %v1592 = vmul.f32 %v1587, %v1591
    %s1593 = scalar_lea.vmem [#allocation3], 12
    %1594 = vst [vmem:[%s1593] sm:$0x3] %v1592
    %s1595 = scalar_lea.vmem [#allocation2], 56
    %v1596 = vld [vmem:[%s1595] sm:$0xff]
    %v1597 = vpack.c.bf16 %v1592, %v1592
    %1598 = vmatprep.subr.bf16.mxu0 %v619
    %1599 = vmatpush1.bf16.msra.mxu0 %v618
    %1600 = vmatprep.subr.bf16.mxu0 %v615
    %1601 = vmatpush1.bf16.msra.mxu0 %v614
    %1602 = vmatprep.subr.bf16.mxu0 %v611
    %1603 = vmatpush1.bf16.msra.mxu0 %v610
    %1604 = vmatprep.subr.bf16.mxu0 %v607
    %1605 = vmatpush1.bf16.msra.mxu0 %v606
    %1606 = vmatprep.subr.bf16.mxu0 %v603
    %1607 = vmatpush1.bf16.msra.mxu0 %v602
    %1608 = vmatprep.subr.bf16.mxu0 %v599
    %1609 = vmatpush1.bf16.msra.mxu0 %v598
    %1610 = vmatprep.subr.bf16.mxu0 %v595
    %1611 = vmatpush1.bf16.msra.mxu0 %v594
    %1612 = vmatprep.subr.bf16.mxu0 %v591
    %1613 = vmatpush1.bf16.msra.mxu0 %v590
    %1614 = vmatprep.subr.bf16.mxu0 0
    %1615 = vmatpush2.bf16.msra.mxu0 0
    %1616 = vmatprep.subr.bf16.mxu0 0
    %1617 = vmatpush2.bf16.msra.mxu0 0
    %1618 = vmatprep.subr.bf16.mxu0 0
    %1619 = vmatpush2.bf16.msra.mxu0 0
    %1620 = vmatprep.subr.bf16.mxu0 0
    %1621 = vmatpush2.bf16.msra.mxu0 0
    %1622 = vmatprep.subr.bf16.mxu0 0
    %1623 = vmatpush2.bf16.msra.mxu0 0
    %1624 = vmatprep.subr.bf16.mxu0 0
    %1625 = vmatpush2.bf16.msra.mxu0 0
    %1626 = vmatprep.subr.bf16.mxu0 0
    %1627 = vmatpush2.bf16.msra.mxu0 0
    %1628 = vmatprep.subr.bf16.mxu0 0
    %1629 = vmatpush2.bf16.msra.mxu0 0
    %1630 = vmatprep.mubr.bf16.mxu0 0
    %1631 = vmatmul.mubr.bf16.gmra.mxu0 %v1597
    %v1632 = vpop.f32.mrf.mxu0
    %v1633 = vadd.f32 0.0, %v1632
    %v1634 = vpop.f32.mrf.mxu0
    %v1635 = vadd.f32 0.0, %v1634
    %v1636 = vpop.f32.mrf.mxu0
    %v1637 = vpop.f32.mrf.mxu0
    %1638 = vdwg.mxu0
    %1639 = vmatprep.subr.bf16.mxu0 %v621
    %1640 = vmatpush1.bf16.msra.mxu0 %v620
    %1641 = vmatprep.subr.bf16.mxu0 %v617
    %1642 = vmatpush1.bf16.msra.mxu0 %v616
    %1643 = vmatprep.subr.bf16.mxu0 %v613
    %1644 = vmatpush1.bf16.msra.mxu0 %v612
    %1645 = vmatprep.subr.bf16.mxu0 %v609
    %1646 = vmatpush1.bf16.msra.mxu0 %v608
    %1647 = vmatprep.subr.bf16.mxu0 %v605
    %1648 = vmatpush1.bf16.msra.mxu0 %v604
    %1649 = vmatprep.subr.bf16.mxu0 %v601
    %1650 = vmatpush1.bf16.msra.mxu0 %v600
    %1651 = vmatprep.subr.bf16.mxu0 %v597
    %1652 = vmatpush1.bf16.msra.mxu0 %v596
    %1653 = vmatprep.subr.bf16.mxu0 %v593
    %1654 = vmatpush1.bf16.msra.mxu0 %v592
    %1655 = vmatprep.subr.bf16.mxu0 0
    %1656 = vmatpush2.bf16.msra.mxu0 0
    %1657 = vmatprep.subr.bf16.mxu0 0
    %1658 = vmatpush2.bf16.msra.mxu0 0
    %1659 = vmatprep.subr.bf16.mxu0 0
    %1660 = vmatpush2.bf16.msra.mxu0 0
    %1661 = vmatprep.subr.bf16.mxu0 0
    %1662 = vmatpush2.bf16.msra.mxu0 0
    %1663 = vmatprep.subr.bf16.mxu0 0
    %1664 = vmatpush2.bf16.msra.mxu0 0
    %1665 = vmatprep.subr.bf16.mxu0 0
    %1666 = vmatpush2.bf16.msra.mxu0 0
    %1667 = vmatprep.subr.bf16.mxu0 0
    %1668 = vmatpush2.bf16.msra.mxu0 0
    %1669 = vmatprep.subr.bf16.mxu0 0
    %1670 = vmatpush2.bf16.msra.mxu0 0
    %1671 = vmatprep.mubr.bf16.mxu0 0
    %1672 = vmatmul.mubr.bf16.gmra.mxu0 %v1597
    %v1673 = vpop.f32.mrf.mxu0
    %v1674 = vadd.f32 0.0, %v1673
    %v1675 = vpop.f32.mrf.mxu0
    %v1676 = vadd.f32 0.0, %v1675
    %v1677 = vpop.f32.mrf.mxu0
    %v1678 = vpop.f32.mrf.mxu0
    %1679 = vdwg.mxu0
    %v1684 = vcombine.low %v1633, %v1635
    %v1685 = vcombine.low %v1674, %v1676
    %v1687 = vunpack.c.l.s4 1983009808
    %v1688 = vunpack.c.0.s8 %v1687
    %v1689 = vlaneseq
    %v1690 = vshrl.u32 %v1689, 7
    %v1691 = vsub.s32 %v1688, %v1690
    %v1692 = vrot.slane %v1684, %v1691
    %v1694 = vunpack.c.l.s4 1983009808
    %v1695 = vunpack.c.0.s8 %v1694
    %v1696 = vlaneseq
    %v1697 = vshrl.u32 %v1696, 7
    %v1698 = vsub.s32 %v1695, %v1697
    %v1699 = vrot.slane %v1685, %v1698
    %v1700 = vcombine.low %v1692, %v1699
    %v1702 = vadd.f32 %v1596, %v1700
    %v1703 = vmul.f32 %v1702, 0.5
    %v1704 = vtanh.pop %v1703
    %v1705 = vadd.f32 %v1704, 1.0
    %v1706 = vmul.f32 %v1705, 0.5
    %v1708 = vrot.slane %v1702, 2
    %v1710 = vmul.f32 %v1708, 0.5
    %v1711 = vtanh.pop %v1710
    %v1712 = vadd.f32 %v1711, 1.0
    %v1713 = vmul.f32 %v1712, 0.5
    %v1714 = vrot.slane %v1702, 4
    %v1716 = vtanh.pop %v1714
    %v1717 = vrot.slane %v1702, 6
    %v1719 = vmul.f32 %v1717, 0.5
    %v1720 = vtanh.pop %v1719
    %v1721 = vadd.f32 %v1720, 1.0
    %v1722 = vmul.f32 %v1721, 0.5
    %v1723 = vmul.f32 %v1713, %v1590
    %v1724 = vmul.f32 %v1706, %v1716
    %v1725 = vadd.f32 %v1723, %v1724
    %v1726 = vtanh.pop %v1725
    %v1727 = vmul.f32 %v1722, %v1726
    %s1728 = scalar_lea.vmem [#allocation3], 14
    %1729 = vst [vmem:[%s1728] sm:$0x3] %v1727
    %1730 = vst [vmem:[#allocation14] sm:$0x3] %v1727
    %1731 = vst [vmem:[#allocation16] sm:$0x3] %v1725
    %v1732 = vld [vmem:[#allocation7] sm:$0xff]
    %v1733 = vld [vmem:[#allocation7 + $0x8] sm:$0xff]
    %v1734 = vld [vmem:[#allocation7 + $0x10] sm:$0xff]
    %v1735 = vld [vmem:[#allocation7 + $0x18] sm:$0xff]
    %v1736 = vld [vmem:[#allocation7 + $0x20] sm:$0xff]
    %v1737 = vld [vmem:[#allocation7 + $0x28] sm:$0xff]
    %v1738 = vld [vmem:[#allocation7 + $0x30] sm:$0xff]
    %v1739 = vld [vmem:[#allocation7 + $0x38] sm:$0xff]
    %v1740 = vld [vmem:[#allocation7 + $0x40] sm:$0xff]
    %v1741 = vld [vmem:[#allocation7 + $0x48] sm:$0xff]
    %v1742 = vld [vmem:[#allocation7 + $0x50] sm:$0xff]
    %v1743 = vld [vmem:[#allocation7 + $0x58] sm:$0xff]
    %v1744 = vld [vmem:[#allocation7 + $0x60] sm:$0xff]
    %v1745 = vld [vmem:[#allocation7 + $0x68] sm:$0xff]
    %v1746 = vld [vmem:[#allocation7 + $0x70] sm:$0xff]
    %v1747 = vld [vmem:[#allocation7 + $0x78] sm:$0xff]
    %v1748 = vld [vmem:[#allocation7 + $0x80] sm:$0xff]
    %v1749 = vld [vmem:[#allocation7 + $0x88] sm:$0xff]
    %v1750 = vld [vmem:[#allocation7 + $0x90] sm:$0xff]
    %v1751 = vld [vmem:[#allocation7 + $0x98] sm:$0xff]
    %v1752 = vld [vmem:[#allocation7 + $0xa0] sm:$0xff]
    %v1753 = vld [vmem:[#allocation7 + $0xa8] sm:$0xff]
    %v1754 = vld [vmem:[#allocation7 + $0xb0] sm:$0xff]
    %v1755 = vld [vmem:[#allocation7 + $0xb8] sm:$0xff]
    %v1756 = vld [vmem:[#allocation7 + $0xc0] sm:$0xff]
    %v1757 = vld [vmem:[#allocation7 + $0xc8] sm:$0xff]
    %v1758 = vld [vmem:[#allocation7 + $0xd0] sm:$0xff]
    %v1759 = vld [vmem:[#allocation7 + $0xd8] sm:$0xff]
    %v1760 = vld [vmem:[#allocation7 + $0xe0] sm:$0xff]
    %v1761 = vld [vmem:[#allocation7 + $0xe8] sm:$0xff]
    %v1762 = vld [vmem:[#allocation7 + $0xf0] sm:$0xff]
    %v1763 = vld [vmem:[#allocation7 + $0xf8] sm:$0xff]
    %v1764 = vld [vmem:[#allocation9] sm:$0xff]
    %v1765 = vld [vmem:[#allocation9 + $0x8] sm:$0xff]
    %v1766 = vld [vmem:[#allocation9 + $0x10] sm:$0xff]
    %v1767 = vld [vmem:[#allocation9 + $0x18] sm:$0xff]
    %v1768 = vld [vmem:[#allocation9 + $0x20] sm:$0xff]
    %v1769 = vld [vmem:[#allocation9 + $0x28] sm:$0xff]
    %v1770 = vld [vmem:[#allocation9 + $0x30] sm:$0xff]
    %v1771 = vld [vmem:[#allocation9 + $0x38] sm:$0xff]
    %v1772 = vld [vmem:[#allocation9 + $0x40] sm:$0xff]
    %v1773 = vld [vmem:[#allocation9 + $0x48] sm:$0xff]
    %v1774 = vld [vmem:[#allocation9 + $0x50] sm:$0xff]
    %v1775 = vld [vmem:[#allocation9 + $0x58] sm:$0xff]
    %v1776 = vld [vmem:[#allocation9 + $0x60] sm:$0xff]
    %v1777 = vld [vmem:[#allocation9 + $0x68] sm:$0xff]
    %v1778 = vld [vmem:[#allocation9 + $0x70] sm:$0xff]
    %v1779 = vld [vmem:[#allocation9 + $0x78] sm:$0xff]
    %v1780 = vld [vmem:[#allocation9 + $0x80] sm:$0xff]
    %v1781 = vld [vmem:[#allocation9 + $0x88] sm:$0xff]
    %v1782 = vld [vmem:[#allocation9 + $0x90] sm:$0xff]
    %v1783 = vld [vmem:[#allocation9 + $0x98] sm:$0xff]
    %v1784 = vld [vmem:[#allocation9 + $0xa0] sm:$0xff]
    %v1785 = vld [vmem:[#allocation9 + $0xa8] sm:$0xff]
    %v1786 = vld [vmem:[#allocation9 + $0xb0] sm:$0xff]
    %v1787 = vld [vmem:[#allocation9 + $0xb8] sm:$0xff]
    %v1788 = vld [vmem:[#allocation9 + $0xc0] sm:$0xff]
    %v1789 = vld [vmem:[#allocation9 + $0xc8] sm:$0xff]
    %v1790 = vld [vmem:[#allocation9 + $0xd0] sm:$0xff]
    %v1791 = vld [vmem:[#allocation9 + $0xd8] sm:$0xff]
    %v1792 = vld [vmem:[#allocation9 + $0xe0] sm:$0xff]
    %v1793 = vld [vmem:[#allocation9 + $0xe8] sm:$0xff]
    %v1794 = vld [vmem:[#allocation9 + $0xf0] sm:$0xff]
    %v1795 = vld [vmem:[#allocation9 + $0xf8] sm:$0xff]
    %v1796 = vld [vmem:[%s6] sm:$0xf]
    %v1797 = vld [vmem:[#allocation3] sm:$0x3]
    %v1798 = vld [vmem:[#allocation3 + $0x2] sm:$0x3]
    %v1799 = vld [vmem:[#allocation3 + $0x4] sm:$0x3]
    %v1800 = vld [vmem:[#allocation3 + $0x6] sm:$0x3]
    %v1801 = vld [vmem:[#allocation3 + $0x8] sm:$0x3]
    %v1802 = vld [vmem:[#allocation3 + $0xa] sm:$0x3]
    %v1803 = vld [vmem:[#allocation3 + $0xc] sm:$0x3]
    %v1804 = vld [vmem:[#allocation3 + $0xe] sm:$0x3]
    %v1813 = vcombine.low %v1797, %v1798
    %v1814 = vcombine.low %v1799, %v1800
    %v1816 = vunpack.c.l.s4 1983009808
    %v1817 = vunpack.c.0.s8 %v1816
    %v1818 = vlaneseq
    %v1819 = vshrl.u32 %v1818, 7
    %v1820 = vsub.s32 %v1817, %v1819
    %v1821 = vrot.slane %v1813, %v1820
    %v1823 = vunpack.c.l.s4 1983009808
    %v1824 = vunpack.c.0.s8 %v1823
    %v1825 = vlaneseq
    %v1826 = vshrl.u32 %v1825, 7
    %v1827 = vsub.s32 %v1824, %v1826
    %v1828 = vrot.slane %v1814, %v1827
    %v1829 = vcombine.low %v1821, %v1828
    %v1830 = vcombine.low %v1801, %v1802
    %v1831 = vcombine.low %v1803, %v1804
    %v1833 = vunpack.c.l.s4 1983009808
    %v1834 = vunpack.c.0.s8 %v1833
    %v1835 = vlaneseq
    %v1836 = vshrl.u32 %v1835, 7
    %v1837 = vsub.s32 %v1834, %v1836
    %v1838 = vrot.slane %v1830, %v1837
    %v1840 = vunpack.c.l.s4 1983009808
    %v1841 = vunpack.c.0.s8 %v1840
    %v1842 = vlaneseq
    %v1843 = vshrl.u32 %v1842, 7
    %v1844 = vsub.s32 %v1841, %v1843
    %v1845 = vrot.slane %v1831, %v1844
    %v1846 = vcombine.low %v1838, %v1845
    %v1849 = vpack.c.bf16 %v1846, %v1829
    %v1882 = vunpack.c.l.b16 %v1732
    %v1883 = vunpack.c.h.b16 %v1732
    %v1884 = vunpack.c.l.b16 %v1733
    %v1885 = vunpack.c.h.b16 %v1733
    %v1886 = vunpack.c.l.b16 %v1734
    %v1887 = vunpack.c.h.b16 %v1734
    %v1888 = vunpack.c.l.b16 %v1735
    %v1889 = vunpack.c.h.b16 %v1735
    %v1890 = vunpack.c.l.b16 %v1736
    %v1891 = vunpack.c.h.b16 %v1736
    %v1892 = vunpack.c.l.b16 %v1737
    %v1893 = vunpack.c.h.b16 %v1737
    %v1894 = vunpack.c.l.b16 %v1738
    %v1895 = vunpack.c.h.b16 %v1738
    %v1896 = vunpack.c.l.b16 %v1739
    %v1897 = vunpack.c.h.b16 %v1739
    %v1898 = vunpack.c.l.b16 %v1740
    %v1899 = vunpack.c.h.b16 %v1740
    %v1900 = vunpack.c.l.b16 %v1741
    %v1901 = vunpack.c.h.b16 %v1741
    %v1902 = vunpack.c.l.b16 %v1742
    %v1903 = vunpack.c.h.b16 %v1742
    %v1904 = vunpack.c.l.b16 %v1743
    %v1905 = vunpack.c.h.b16 %v1743
    %v1906 = vunpack.c.l.b16 %v1744
    %v1907 = vunpack.c.h.b16 %v1744
    %v1908 = vunpack.c.l.b16 %v1745
    %v1909 = vunpack.c.h.b16 %v1745
    %v1910 = vunpack.c.l.b16 %v1746
    %v1911 = vunpack.c.h.b16 %v1746
    %v1912 = vunpack.c.l.b16 %v1747
    %v1913 = vunpack.c.h.b16 %v1747
    %v1914 = vunpack.c.l.b16 %v1748
    %v1915 = vunpack.c.h.b16 %v1748
    %v1916 = vunpack.c.l.b16 %v1749
    %v1917 = vunpack.c.h.b16 %v1749
    %v1918 = vunpack.c.l.b16 %v1750
    %v1919 = vunpack.c.h.b16 %v1750
    %v1920 = vunpack.c.l.b16 %v1751
    %v1921 = vunpack.c.h.b16 %v1751
    %v1922 = vunpack.c.l.b16 %v1752
    %v1923 = vunpack.c.h.b16 %v1752
    %v1924 = vunpack.c.l.b16 %v1753
    %v1925 = vunpack.c.h.b16 %v1753
    %v1926 = vunpack.c.l.b16 %v1754
    %v1927 = vunpack.c.h.b16 %v1754
    %v1928 = vunpack.c.l.b16 %v1755
    %v1929 = vunpack.c.h.b16 %v1755
    %v1930 = vunpack.c.l.b16 %v1756
    %v1931 = vunpack.c.h.b16 %v1756
    %v1932 = vunpack.c.l.b16 %v1757
    %v1933 = vunpack.c.h.b16 %v1757
    %v1934 = vunpack.c.l.b16 %v1758
    %v1935 = vunpack.c.h.b16 %v1758
    %v1936 = vunpack.c.l.b16 %v1759
    %v1937 = vunpack.c.h.b16 %v1759
    %v1938 = vunpack.c.l.b16 %v1760
    %v1939 = vunpack.c.h.b16 %v1760
    %v1940 = vunpack.c.l.b16 %v1761
    %v1941 = vunpack.c.h.b16 %v1761
    %v1942 = vunpack.c.l.b16 %v1762
    %v1943 = vunpack.c.h.b16 %v1762
    %v1944 = vunpack.c.l.b16 %v1763
    %v1945 = vunpack.c.h.b16 %v1763
    %v1946 = vpack.c.b16 %v1886, %v1882
    %v1947 = vpack.c.b16 %v1887, %v1883
    %v1948 = vpack.c.b16 %v1888, %v1884
    %v1949 = vpack.c.b16 %v1889, %v1885
    %v1950 = vpack.c.b16 %v1894, %v1890
    %v1951 = vpack.c.b16 %v1895, %v1891
    %v1952 = vpack.c.b16 %v1896, %v1892
    %v1953 = vpack.c.b16 %v1897, %v1893
    %v1954 = vpack.c.b16 %v1902, %v1898
    %v1955 = vpack.c.b16 %v1903, %v1899
    %v1956 = vpack.c.b16 %v1904, %v1900
    %v1957 = vpack.c.b16 %v1905, %v1901
    %v1958 = vpack.c.b16 %v1910, %v1906
    %v1959 = vpack.c.b16 %v1911, %v1907
    %v1960 = vpack.c.b16 %v1912, %v1908
    %v1961 = vpack.c.b16 %v1913, %v1909
    %v1962 = vpack.c.b16 %v1918, %v1914
    %v1963 = vpack.c.b16 %v1919, %v1915
    %v1964 = vpack.c.b16 %v1920, %v1916
    %v1965 = vpack.c.b16 %v1921, %v1917
    %v1966 = vpack.c.b16 %v1926, %v1922
    %v1967 = vpack.c.b16 %v1927, %v1923
    %v1968 = vpack.c.b16 %v1928, %v1924
    %v1969 = vpack.c.b16 %v1929, %v1925
    %v1970 = vpack.c.b16 %v1934, %v1930
    %v1971 = vpack.c.b16 %v1935, %v1931
    %v1972 = vpack.c.b16 %v1936, %v1932
    %v1973 = vpack.c.b16 %v1937, %v1933
    %v1974 = vpack.c.b16 %v1942, %v1938
    %v1975 = vpack.c.b16 %v1943, %v1939
    %v1976 = vpack.c.b16 %v1944, %v1940
    %v1977 = vpack.c.b16 %v1945, %v1941
    %2010 = vmatprep.subr.bf16.mxu0 %v1975
    %2011 = vmatpush1.bf16.msra.mxu0 %v1974
    %2012 = vmatprep.subr.bf16.mxu0 %v1971
    %2013 = vmatpush1.bf16.msra.mxu0 %v1970
    %2014 = vmatprep.subr.bf16.mxu0 %v1967
    %2015 = vmatpush1.bf16.msra.mxu0 %v1966
    %2016 = vmatprep.subr.bf16.mxu0 %v1963
    %2017 = vmatpush1.bf16.msra.mxu0 %v1962
    %2018 = vmatprep.subr.bf16.mxu0 %v1959
    %2019 = vmatpush1.bf16.msra.mxu0 %v1958
    %2020 = vmatprep.subr.bf16.mxu0 %v1955
    %2021 = vmatpush1.bf16.msra.mxu0 %v1954
    %2022 = vmatprep.subr.bf16.mxu0 %v1951
    %2023 = vmatpush1.bf16.msra.mxu0 %v1950
    %2024 = vmatprep.subr.bf16.mxu0 %v1947
    %2025 = vmatpush1.bf16.msra.mxu0 %v1946
    %2026 = vmatprep.subr.bf16.mxu0 0
    %2027 = vmatpush2.bf16.msra.mxu0 0
    %2028 = vmatprep.subr.bf16.mxu0 0
    %2029 = vmatpush2.bf16.msra.mxu0 0
    %2030 = vmatprep.subr.bf16.mxu0 0
    %2031 = vmatpush2.bf16.msra.mxu0 0
    %2032 = vmatprep.subr.bf16.mxu0 0
    %2033 = vmatpush2.bf16.msra.mxu0 0
    %2034 = vmatprep.subr.bf16.mxu0 0
    %2035 = vmatpush2.bf16.msra.mxu0 0
    %2036 = vmatprep.subr.bf16.mxu0 0
    %2037 = vmatpush2.bf16.msra.mxu0 0
    %2038 = vmatprep.subr.bf16.mxu0 0
    %2039 = vmatpush2.bf16.msra.mxu0 0
    %2040 = vmatprep.subr.bf16.mxu0 0
    %2041 = vmatpush2.bf16.msra.mxu0 0
    %2042 = vmatprep.mubr.bf16.mxu0 0
    %2043 = vmatmul.mubr.bf16.gmra.mxu0 %v1849
    %v2044 = vpop.f32.mrf.mxu0
    %v2045 = vadd.f32 0.0, %v2044
    %v2046 = vpop.f32.mrf.mxu0
    %v2047 = vadd.f32 0.0, %v2046
    %v2048 = vpop.f32.mrf.mxu0
    %v2049 = vadd.f32 0.0, %v2048
    %v2050 = vpop.f32.mrf.mxu0
    %v2051 = vadd.f32 0.0, %v2050
    %2052 = vdwg.mxu0
    %2053 = vmatprep.subr.bf16.mxu0 %v1977
    %2054 = vmatpush1.bf16.msra.mxu0 %v1976
    %2055 = vmatprep.subr.bf16.mxu0 %v1973
    %2056 = vmatpush1.bf16.msra.mxu0 %v1972
    %2057 = vmatprep.subr.bf16.mxu0 %v1969
    %2058 = vmatpush1.bf16.msra.mxu0 %v1968
    %2059 = vmatprep.subr.bf16.mxu0 %v1965
    %2060 = vmatpush1.bf16.msra.mxu0 %v1964
    %2061 = vmatprep.subr.bf16.mxu0 %v1961
    %2062 = vmatpush1.bf16.msra.mxu0 %v1960
    %2063 = vmatprep.subr.bf16.mxu0 %v1957
    %2064 = vmatpush1.bf16.msra.mxu0 %v1956
    %2065 = vmatprep.subr.bf16.mxu0 %v1953
    %2066 = vmatpush1.bf16.msra.mxu0 %v1952
    %2067 = vmatprep.subr.bf16.mxu0 %v1949
    %2068 = vmatpush1.bf16.msra.mxu0 %v1948
    %2069 = vmatprep.subr.bf16.mxu0 0
    %2070 = vmatpush2.bf16.msra.mxu0 0
    %2071 = vmatprep.subr.bf16.mxu0 0
    %2072 = vmatpush2.bf16.msra.mxu0 0
    %2073 = vmatprep.subr.bf16.mxu0 0
    %2074 = vmatpush2.bf16.msra.mxu0 0
    %2075 = vmatprep.subr.bf16.mxu0 0
    %2076 = vmatpush2.bf16.msra.mxu0 0
    %2077 = vmatprep.subr.bf16.mxu0 0
    %2078 = vmatpush2.bf16.msra.mxu0 0
    %2079 = vmatprep.subr.bf16.mxu0 0
    %2080 = vmatpush2.bf16.msra.mxu0 0
    %2081 = vmatprep.subr.bf16.mxu0 0
    %2082 = vmatpush2.bf16.msra.mxu0 0
    %2083 = vmatprep.subr.bf16.mxu0 0
    %2084 = vmatpush2.bf16.msra.mxu0 0
    %2085 = vmatprep.mubr.bf16.mxu0 0
    %2086 = vmatmul.mubr.bf16.gmra.mxu0 %v1849
    %v2087 = vpop.f32.mrf.mxu0
    %v2088 = vadd.f32 0.0, %v2087
    %v2089 = vpop.f32.mrf.mxu0
    %v2090 = vadd.f32 0.0, %v2089
    %v2091 = vpop.f32.mrf.mxu0
    %v2092 = vadd.f32 0.0, %v2091
    %v2093 = vpop.f32.mrf.mxu0
    %v2094 = vadd.f32 0.0, %v2093
    %2095 = vdwg.mxu0
    %v2104 = vcombine.low %v2045, %v2047
    %v2105 = vcombine.high %v2045, %v2047
    %v2106 = vcombine.low %v2088, %v2090
    %v2107 = vcombine.high %v2088, %v2090
    %v2109 = vunpack.c.l.s4 1983009808
    %v2110 = vunpack.c.0.s8 %v2109
    %v2111 = vlaneseq
    %v2112 = vshrl.u32 %v2111, 7
    %v2113 = vsub.s32 %v2110, %v2112
    %v2114 = vrot.slane %v2104, %v2113
    %v2116 = vunpack.c.l.s4 1983009808
    %v2117 = vunpack.c.0.s8 %v2116
    %v2118 = vlaneseq
    %v2119 = vshrl.u32 %v2118, 7
    %v2120 = vsub.s32 %v2117, %v2119
    %v2121 = vrot.slane %v2105, %v2120
    %v2123 = vunpack.c.l.s4 1983009808
    %v2124 = vunpack.c.0.s8 %v2123
    %v2125 = vlaneseq
    %v2126 = vshrl.u32 %v2125, 7
    %v2127 = vsub.s32 %v2124, %v2126
    %v2128 = vrot.slane %v2106, %v2127
    %v2130 = vunpack.c.l.s4 1983009808
    %v2131 = vunpack.c.0.s8 %v2130
    %v2132 = vlaneseq
    %v2133 = vshrl.u32 %v2132, 7
    %v2134 = vsub.s32 %v2131, %v2133
    %v2135 = vrot.slane %v2107, %v2134
    %v2136 = vcombine.low %v2114, %v2128
    %v2137 = vcombine.high %v2114, %v2128
    %v2138 = vcombine.low %v2121, %v2135
    %v2139 = vcombine.high %v2121, %v2135
    %v2140 = vcombine.low %v2049, %v2051
    %v2141 = vcombine.high %v2049, %v2051
    %v2142 = vcombine.low %v2092, %v2094
    %v2143 = vcombine.high %v2092, %v2094
    %v2145 = vunpack.c.l.s4 1983009808
    %v2146 = vunpack.c.0.s8 %v2145
    %v2147 = vlaneseq
    %v2148 = vshrl.u32 %v2147, 7
    %v2149 = vsub.s32 %v2146, %v2148
    %v2150 = vrot.slane %v2140, %v2149
    %v2152 = vunpack.c.l.s4 1983009808
    %v2153 = vunpack.c.0.s8 %v2152
    %v2154 = vlaneseq
    %v2155 = vshrl.u32 %v2154, 7
    %v2156 = vsub.s32 %v2153, %v2155
    %v2157 = vrot.slane %v2141, %v2156
    %v2159 = vunpack.c.l.s4 1983009808
    %v2160 = vunpack.c.0.s8 %v2159
    %v2161 = vlaneseq
    %v2162 = vshrl.u32 %v2161, 7
    %v2163 = vsub.s32 %v2160, %v2162
    %v2164 = vrot.slane %v2142, %v2163
    %v2166 = vunpack.c.l.s4 1983009808
    %v2167 = vunpack.c.0.s8 %v2166
    %v2168 = vlaneseq
    %v2169 = vshrl.u32 %v2168, 7
    %v2170 = vsub.s32 %v2167, %v2169
    %v2171 = vrot.slane %v2143, %v2170
    %v2172 = vcombine.low %v2150, %v2164
    %v2173 = vcombine.high %v2150, %v2164
    %v2174 = vcombine.low %v2157, %v2171
    %v2175 = vcombine.high %v2157, %v2171
    %v2185 = vlaneseq
    %v2186 = vshrl.u32 %v2185, 7
    %v2187 = vsub.s32 0, %v2186
    %v2188 = vrot.slane %v1796, %v2187
    %v2189 = vlaneseq
    %v2190 = vshrl.u32 %v2189, 7
    %v2191 = vsub.s32 1, %v2190
    %v2192 = vrot.slane %v1796, %v2191
    %v2193 = vlaneseq
    %v2194 = vshrl.u32 %v2193, 7
    %v2195 = vsub.s32 2, %v2194
    %v2196 = vrot.slane %v1796, %v2195
    %v2197 = vlaneseq
    %v2198 = vshrl.u32 %v2197, 7
    %v2199 = vsub.s32 3, %v2198
    %v2200 = vrot.slane %v1796, %v2199
    %v2201 = vcombine.low %v2188, %v2192
    %v2202 = vcombine.low %v2196, %v2200
    %v2204 = vunpack.c.l.s4 1983009808
    %v2205 = vunpack.c.0.s8 %v2204
    %v2206 = vlaneseq
    %v2207 = vshrl.u32 %v2206, 7
    %v2208 = vsub.s32 %v2205, %v2207
    %v2209 = vrot.slane %v2201, %v2208
    %v2211 = vunpack.c.l.s4 1983009808
    %v2212 = vunpack.c.0.s8 %v2211
    %v2213 = vlaneseq
    %v2214 = vshrl.u32 %v2213, 7
    %v2215 = vsub.s32 %v2212, %v2214
    %v2216 = vrot.slane %v2202, %v2215
    %v2217 = vcombine.low %v2209, %v2216
    %v2219 = vadd.f32 %v2136, %v2217
    %v2220 = vadd.f32 %v2137, %v2217
    %v2221 = vadd.f32 %v2138, %v2217
    %v2222 = vadd.f32 %v2139, %v2217
    %v2223 = vadd.f32 %v2172, %v2217
    %v2224 = vadd.f32 %v2173, %v2217
    %v2225 = vadd.f32 %v2174, %v2217
    %v2226 = vadd.f32 %v2175, %v2217
    %2227 = vst [vmem:[#allocation2] sm:$0xff] %v2219
    %2228 = vst [vmem:[#allocation2 + $0x8] sm:$0xff] %v2220
    %2229 = vst [vmem:[#allocation2 + $0x10] sm:$0xff] %v2221
    %2230 = vst [vmem:[#allocation2 + $0x18] sm:$0xff] %v2222
    %2231 = vst [vmem:[#allocation2 + $0x20] sm:$0xff] %v2223
    %2232 = vst [vmem:[#allocation2 + $0x28] sm:$0xff] %v2224
    %2233 = vst [vmem:[#allocation2 + $0x30] sm:$0xff] %v2225
    %2234 = vst [vmem:[#allocation2 + $0x38] sm:$0xff] %v2226
    %v2235 = vld [vmem:[#allocation2] sm:$0xff]
    %v2268 = vunpack.c.l.b16 %v1764
    %v2269 = vunpack.c.h.b16 %v1764
    %v2270 = vunpack.c.l.b16 %v1765
    %v2271 = vunpack.c.h.b16 %v1765
    %v2272 = vunpack.c.l.b16 %v1766
    %v2273 = vunpack.c.h.b16 %v1766
    %v2274 = vunpack.c.l.b16 %v1767
    %v2275 = vunpack.c.h.b16 %v1767
    %v2276 = vunpack.c.l.b16 %v1768
    %v2277 = vunpack.c.h.b16 %v1768
    %v2278 = vunpack.c.l.b16 %v1769
    %v2279 = vunpack.c.h.b16 %v1769
    %v2280 = vunpack.c.l.b16 %v1770
    %v2281 = vunpack.c.h.b16 %v1770
    %v2282 = vunpack.c.l.b16 %v1771
    %v2283 = vunpack.c.h.b16 %v1771
    %v2284 = vunpack.c.l.b16 %v1772
    %v2285 = vunpack.c.h.b16 %v1772
    %v2286 = vunpack.c.l.b16 %v1773
    %v2287 = vunpack.c.h.b16 %v1773
    %v2288 = vunpack.c.l.b16 %v1774
    %v2289 = vunpack.c.h.b16 %v1774
    %v2290 = vunpack.c.l.b16 %v1775
    %v2291 = vunpack.c.h.b16 %v1775
    %v2292 = vunpack.c.l.b16 %v1776
    %v2293 = vunpack.c.h.b16 %v1776
    %v2294 = vunpack.c.l.b16 %v1777
    %v2295 = vunpack.c.h.b16 %v1777
    %v2296 = vunpack.c.l.b16 %v1778
    %v2297 = vunpack.c.h.b16 %v1778
    %v2298 = vunpack.c.l.b16 %v1779
    %v2299 = vunpack.c.h.b16 %v1779
    %v2300 = vunpack.c.l.b16 %v1780
    %v2301 = vunpack.c.h.b16 %v1780
    %v2302 = vunpack.c.l.b16 %v1781
    %v2303 = vunpack.c.h.b16 %v1781
    %v2304 = vunpack.c.l.b16 %v1782
    %v2305 = vunpack.c.h.b16 %v1782
    %v2306 = vunpack.c.l.b16 %v1783
    %v2307 = vunpack.c.h.b16 %v1783
    %v2308 = vunpack.c.l.b16 %v1784
    %v2309 = vunpack.c.h.b16 %v1784
    %v2310 = vunpack.c.l.b16 %v1785
    %v2311 = vunpack.c.h.b16 %v1785
    %v2312 = vunpack.c.l.b16 %v1786
    %v2313 = vunpack.c.h.b16 %v1786
    %v2314 = vunpack.c.l.b16 %v1787
    %v2315 = vunpack.c.h.b16 %v1787
    %v2316 = vunpack.c.l.b16 %v1788
    %v2317 = vunpack.c.h.b16 %v1788
    %v2318 = vunpack.c.l.b16 %v1789
    %v2319 = vunpack.c.h.b16 %v1789
    %v2320 = vunpack.c.l.b16 %v1790
    %v2321 = vunpack.c.h.b16 %v1790
    %v2322 = vunpack.c.l.b16 %v1791
    %v2323 = vunpack.c.h.b16 %v1791
    %v2324 = vunpack.c.l.b16 %v1792
    %v2325 = vunpack.c.h.b16 %v1792
    %v2326 = vunpack.c.l.b16 %v1793
    %v2327 = vunpack.c.h.b16 %v1793
    %v2328 = vunpack.c.l.b16 %v1794
    %v2329 = vunpack.c.h.b16 %v1794
    %v2330 = vunpack.c.l.b16 %v1795
    %v2331 = vunpack.c.h.b16 %v1795
    %v2332 = vpack.c.b16 %v2272, %v2268
    %v2333 = vpack.c.b16 %v2273, %v2269
    %v2334 = vpack.c.b16 %v2274, %v2270
    %v2335 = vpack.c.b16 %v2275, %v2271
    %v2336 = vpack.c.b16 %v2280, %v2276
    %v2337 = vpack.c.b16 %v2281, %v2277
    %v2338 = vpack.c.b16 %v2282, %v2278
    %v2339 = vpack.c.b16 %v2283, %v2279
    %v2340 = vpack.c.b16 %v2288, %v2284
    %v2341 = vpack.c.b16 %v2289, %v2285
    %v2342 = vpack.c.b16 %v2290, %v2286
    %v2343 = vpack.c.b16 %v2291, %v2287
    %v2344 = vpack.c.b16 %v2296, %v2292
    %v2345 = vpack.c.b16 %v2297, %v2293
    %v2346 = vpack.c.b16 %v2298, %v2294
    %v2347 = vpack.c.b16 %v2299, %v2295
    %v2348 = vpack.c.b16 %v2304, %v2300
    %v2349 = vpack.c.b16 %v2305, %v2301
    %v2350 = vpack.c.b16 %v2306, %v2302
    %v2351 = vpack.c.b16 %v2307, %v2303
    %v2352 = vpack.c.b16 %v2312, %v2308
    %v2353 = vpack.c.b16 %v2313, %v2309
    %v2354 = vpack.c.b16 %v2314, %v2310
    %v2355 = vpack.c.b16 %v2315, %v2311
    %v2356 = vpack.c.b16 %v2320, %v2316
    %v2357 = vpack.c.b16 %v2321, %v2317
    %v2358 = vpack.c.b16 %v2322, %v2318
    %v2359 = vpack.c.b16 %v2323, %v2319
    %v2360 = vpack.c.b16 %v2328, %v2324
    %v2361 = vpack.c.b16 %v2329, %v2325
    %v2362 = vpack.c.b16 %v2330, %v2326
    %v2363 = vpack.c.b16 %v2331, %v2327
    %2396 = vmatprep.subr.bf16.mxu0 %v2361
    %2397 = vmatpush1.bf16.msra.mxu0 %v2360
    %2398 = vmatprep.subr.bf16.mxu0 %v2357
    %2399 = vmatpush1.bf16.msra.mxu0 %v2356
    %2400 = vmatprep.subr.bf16.mxu0 %v2353
    %2401 = vmatpush1.bf16.msra.mxu0 %v2352
    %2402 = vmatprep.subr.bf16.mxu0 %v2349
    %2403 = vmatpush1.bf16.msra.mxu0 %v2348
    %2404 = vmatprep.subr.bf16.mxu0 %v2345
    %2405 = vmatpush1.bf16.msra.mxu0 %v2344
    %2406 = vmatprep.subr.bf16.mxu0 %v2341
    %2407 = vmatpush1.bf16.msra.mxu0 %v2340
    %2408 = vmatprep.subr.bf16.mxu0 %v2337
    %2409 = vmatpush1.bf16.msra.mxu0 %v2336
    %2410 = vmatprep.subr.bf16.mxu0 %v2333
    %2411 = vmatpush1.bf16.msra.mxu0 %v2332
    %2412 = vmatprep.subr.bf16.mxu0 0
    %2413 = vmatpush2.bf16.msra.mxu0 0
    %2414 = vmatprep.subr.bf16.mxu0 0
    %2415 = vmatpush2.bf16.msra.mxu0 0
    %2416 = vmatprep.subr.bf16.mxu0 0
    %2417 = vmatpush2.bf16.msra.mxu0 0
    %2418 = vmatprep.subr.bf16.mxu0 0
    %2419 = vmatpush2.bf16.msra.mxu0 0
    %2420 = vmatprep.subr.bf16.mxu0 0
    %2421 = vmatpush2.bf16.msra.mxu0 0
    %2422 = vmatprep.subr.bf16.mxu0 0
    %2423 = vmatpush2.bf16.msra.mxu0 0
    %2424 = vmatprep.subr.bf16.mxu0 0
    %2425 = vmatpush2.bf16.msra.mxu0 0
    %2426 = vmatprep.subr.bf16.mxu0 0
    %2427 = vmatpush2.bf16.msra.mxu0 0
    %2428 = vmatprep.mubr.bf16.mxu0 0
    %2429 = vmatmul.mubr.bf16.gmra.mxu0 0
    %v2430 = vpop.f32.mrf.mxu0
    %v2431 = vadd.f32 0.0, %v2430
    %v2432 = vpop.f32.mrf.mxu0
    %v2433 = vadd.f32 0.0, %v2432
    %v2434 = vpop.f32.mrf.mxu0
    %v2435 = vpop.f32.mrf.mxu0
    %2436 = vdwg.mxu0
    %2437 = vmatprep.subr.bf16.mxu0 %v2363
    %2438 = vmatpush1.bf16.msra.mxu0 %v2362
    %2439 = vmatprep.subr.bf16.mxu0 %v2359
    %2440 = vmatpush1.bf16.msra.mxu0 %v2358
    %2441 = vmatprep.subr.bf16.mxu0 %v2355
    %2442 = vmatpush1.bf16.msra.mxu0 %v2354
    %2443 = vmatprep.subr.bf16.mxu0 %v2351
    %2444 = vmatpush1.bf16.msra.mxu0 %v2350
    %2445 = vmatprep.subr.bf16.mxu0 %v2347
    %2446 = vmatpush1.bf16.msra.mxu0 %v2346
    %2447 = vmatprep.subr.bf16.mxu0 %v2343
    %2448 = vmatpush1.bf16.msra.mxu0 %v2342
    %2449 = vmatprep.subr.bf16.mxu0 %v2339
    %2450 = vmatpush1.bf16.msra.mxu0 %v2338
    %2451 = vmatprep.subr.bf16.mxu0 %v2335
    %2452 = vmatpush1.bf16.msra.mxu0 %v2334
    %2453 = vmatprep.subr.bf16.mxu0 0
    %2454 = vmatpush2.bf16.msra.mxu0 0
    %2455 = vmatprep.subr.bf16.mxu0 0
    %2456 = vmatpush2.bf16.msra.mxu0 0
    %2457 = vmatprep.subr.bf16.mxu0 0
    %2458 = vmatpush2.bf16.msra.mxu0 0
    %2459 = vmatprep.subr.bf16.mxu0 0
    %2460 = vmatpush2.bf16.msra.mxu0 0
    %2461 = vmatprep.subr.bf16.mxu0 0
    %2462 = vmatpush2.bf16.msra.mxu0 0
    %2463 = vmatprep.subr.bf16.mxu0 0
    %2464 = vmatpush2.bf16.msra.mxu0 0
    %2465 = vmatprep.subr.bf16.mxu0 0
    %2466 = vmatpush2.bf16.msra.mxu0 0
    %2467 = vmatprep.subr.bf16.mxu0 0
    %2468 = vmatpush2.bf16.msra.mxu0 0
    %2469 = vmatprep.mubr.bf16.mxu0 0
    %2470 = vmatmul.mubr.bf16.gmra.mxu0 0
    %v2471 = vpop.f32.mrf.mxu0
    %v2472 = vadd.f32 0.0, %v2471
    %v2473 = vpop.f32.mrf.mxu0
    %v2474 = vadd.f32 0.0, %v2473
    %v2475 = vpop.f32.mrf.mxu0
    %v2476 = vpop.f32.mrf.mxu0
    %2477 = vdwg.mxu0
    %v2482 = vcombine.low %v2431, %v2433
    %v2483 = vcombine.low %v2472, %v2474
    %v2485 = vunpack.c.l.s4 1983009808
    %v2486 = vunpack.c.0.s8 %v2485
    %v2487 = vlaneseq
    %v2488 = vshrl.u32 %v2487, 7
    %v2489 = vsub.s32 %v2486, %v2488
    %v2490 = vrot.slane %v2482, %v2489
    %v2492 = vunpack.c.l.s4 1983009808
    %v2493 = vunpack.c.0.s8 %v2492
    %v2494 = vlaneseq
    %v2495 = vshrl.u32 %v2494, 7
    %v2496 = vsub.s32 %v2493, %v2495
    %v2497 = vrot.slane %v2483, %v2496
    %v2498 = vcombine.low %v2490, %v2497
    %v2500 = vadd.f32 %v2235, %v2498
    %v2501 = vmul.f32 %v2500, 0.5
    %v2502 = vtanh.pop %v2501
    %v2503 = vadd.f32 %v2502, 1.0
    %v2504 = vmul.f32 %v2503, 0.5
    %v2506 = vrot.slane %v2500, 2
    %v2508 = vmul.f32 %v2506, 0.5
    %v2509 = vtanh.pop %v2508
    %v2510 = vadd.f32 %v2509, 1.0
    %v2511 = vmul.f32 %v2510, 0.5
    %v2512 = vrot.slane %v2500, 4
    %v2514 = vtanh.pop %v2512
    %v2515 = vrot.slane %v2500, 6
    %v2517 = vmul.f32 %v2515, 0.5
    %v2518 = vtanh.pop %v2517
    %v2519 = vadd.f32 %v2518, 1.0
    %v2520 = vmul.f32 %v2519, 0.5
    %v2521 = vmul.f32 %v2511, 0.0
    %v2522 = vmul.f32 %v2504, %v2514
    %v2523 = vadd.f32 %v2521, %v2522
    %v2524 = vtanh.pop %v2523
    %v2525 = vmul.f32 %v2520, %v2524
    %v2526 = vld [vmem:[%s785] sm:$0xff]
    %v2527 = vpack.c.bf16 %v2525, %v2525
    %2528 = vmatprep.subr.bf16.mxu0 %v2361
    %2529 = vmatpush1.bf16.msra.mxu0 %v2360
    %2530 = vmatprep.subr.bf16.mxu0 %v2357
    %2531 = vmatpush1.bf16.msra.mxu0 %v2356
    %2532 = vmatprep.subr.bf16.mxu0 %v2353
    %2533 = vmatpush1.bf16.msra.mxu0 %v2352
    %2534 = vmatprep.subr.bf16.mxu0 %v2349
    %2535 = vmatpush1.bf16.msra.mxu0 %v2348
    %2536 = vmatprep.subr.bf16.mxu0 %v2345
    %2537 = vmatpush1.bf16.msra.mxu0 %v2344
    %2538 = vmatprep.subr.bf16.mxu0 %v2341
    %2539 = vmatpush1.bf16.msra.mxu0 %v2340
    %2540 = vmatprep.subr.bf16.mxu0 %v2337
    %2541 = vmatpush1.bf16.msra.mxu0 %v2336
    %2542 = vmatprep.subr.bf16.mxu0 %v2333
    %2543 = vmatpush1.bf16.msra.mxu0 %v2332
    %2544 = vmatprep.subr.bf16.mxu0 0
    %2545 = vmatpush2.bf16.msra.mxu0 0
    %2546 = vmatprep.subr.bf16.mxu0 0
    %2547 = vmatpush2.bf16.msra.mxu0 0
    %2548 = vmatprep.subr.bf16.mxu0 0
    %2549 = vmatpush2.bf16.msra.mxu0 0
    %2550 = vmatprep.subr.bf16.mxu0 0
    %2551 = vmatpush2.bf16.msra.mxu0 0
    %2552 = vmatprep.subr.bf16.mxu0 0
    %2553 = vmatpush2.bf16.msra.mxu0 0
    %2554 = vmatprep.subr.bf16.mxu0 0
    %2555 = vmatpush2.bf16.msra.mxu0 0
    %2556 = vmatprep.subr.bf16.mxu0 0
    %2557 = vmatpush2.bf16.msra.mxu0 0
    %2558 = vmatprep.subr.bf16.mxu0 0
    %2559 = vmatpush2.bf16.msra.mxu0 0
    %2560 = vmatprep.mubr.bf16.mxu0 0
    %2561 = vmatmul.mubr.bf16.gmra.mxu0 %v2527
    %v2562 = vpop.f32.mrf.mxu0
    %v2563 = vadd.f32 0.0, %v2562
    %v2564 = vpop.f32.mrf.mxu0
    %v2565 = vadd.f32 0.0, %v2564
    %v2566 = vpop.f32.mrf.mxu0
    %v2567 = vpop.f32.mrf.mxu0
    %2568 = vdwg.mxu0
    %2569 = vmatprep.subr.bf16.mxu0 %v2363
    %2570 = vmatpush1.bf16.msra.mxu0 %v2362
    %2571 = vmatprep.subr.bf16.mxu0 %v2359
    %2572 = vmatpush1.bf16.msra.mxu0 %v2358
    %2573 = vmatprep.subr.bf16.mxu0 %v2355
    %2574 = vmatpush1.bf16.msra.mxu0 %v2354
    %2575 = vmatprep.subr.bf16.mxu0 %v2351
    %2576 = vmatpush1.bf16.msra.mxu0 %v2350
    %2577 = vmatprep.subr.bf16.mxu0 %v2347
    %2578 = vmatpush1.bf16.msra.mxu0 %v2346
    %2579 = vmatprep.subr.bf16.mxu0 %v2343
    %2580 = vmatpush1.bf16.msra.mxu0 %v2342
    %2581 = vmatprep.subr.bf16.mxu0 %v2339
    %2582 = vmatpush1.bf16.msra.mxu0 %v2338
    %2583 = vmatprep.subr.bf16.mxu0 %v2335
    %2584 = vmatpush1.bf16.msra.mxu0 %v2334
    %2585 = vmatprep.subr.bf16.mxu0 0
    %2586 = vmatpush2.bf16.msra.mxu0 0
    %2587 = vmatprep.subr.bf16.mxu0 0
    %2588 = vmatpush2.bf16.msra.mxu0 0
    %2589 = vmatprep.subr.bf16.mxu0 0
    %2590 = vmatpush2.bf16.msra.mxu0 0
    %2591 = vmatprep.subr.bf16.mxu0 0
    %2592 = vmatpush2.bf16.msra.mxu0 0
    %2593 = vmatprep.subr.bf16.mxu0 0
    %2594 = vmatpush2.bf16.msra.mxu0 0
    %2595 = vmatprep.subr.bf16.mxu0 0
    %2596 = vmatpush2.bf16.msra.mxu0 0
    %2597 = vmatprep.subr.bf16.mxu0 0
    %2598 = vmatpush2.bf16.msra.mxu0 0
    %2599 = vmatprep.subr.bf16.mxu0 0
    %2600 = vmatpush2.bf16.msra.mxu0 0
    %2601 = vmatprep.mubr.bf16.mxu0 0
    %2602 = vmatmul.mubr.bf16.gmra.mxu0 %v2527
    %v2603 = vpop.f32.mrf.mxu0
    %v2604 = vadd.f32 0.0, %v2603
    %v2605 = vpop.f32.mrf.mxu0
    %v2606 = vadd.f32 0.0, %v2605
    %v2607 = vpop.f32.mrf.mxu0
    %v2608 = vpop.f32.mrf.mxu0
    %2609 = vdwg.mxu0
    %v2614 = vcombine.low %v2563, %v2565
    %v2615 = vcombine.low %v2604, %v2606
    %v2617 = vunpack.c.l.s4 1983009808
    %v2618 = vunpack.c.0.s8 %v2617
    %v2619 = vlaneseq
    %v2620 = vshrl.u32 %v2619, 7
    %v2621 = vsub.s32 %v2618, %v2620
    %v2622 = vrot.slane %v2614, %v2621
    %v2624 = vunpack.c.l.s4 1983009808
    %v2625 = vunpack.c.0.s8 %v2624
    %v2626 = vlaneseq
    %v2627 = vshrl.u32 %v2626, 7
    %v2628 = vsub.s32 %v2625, %v2627
    %v2629 = vrot.slane %v2615, %v2628
    %v2630 = vcombine.low %v2622, %v2629
    %v2632 = vadd.f32 %v2526, %v2630
    %v2633 = vmul.f32 %v2632, 0.5
    %v2634 = vtanh.pop %v2633
    %v2635 = vadd.f32 %v2634, 1.0
    %v2636 = vmul.f32 %v2635, 0.5
    %v2638 = vrot.slane %v2632, 2
    %v2640 = vmul.f32 %v2638, 0.5
    %v2641 = vtanh.pop %v2640
    %v2642 = vadd.f32 %v2641, 1.0
    %v2643 = vmul.f32 %v2642, 0.5
    %v2644 = vrot.slane %v2632, 4
    %v2646 = vtanh.pop %v2644
    %v2647 = vrot.slane %v2632, 6
    %v2649 = vmul.f32 %v2647, 0.5
    %v2650 = vtanh.pop %v2649
    %v2651 = vadd.f32 %v2650, 1.0
    %v2652 = vmul.f32 %v2651, 0.5
    %v2653 = vmul.f32 %v2643, %v2523
    %v2654 = vmul.f32 %v2636, %v2646
    %v2655 = vadd.f32 %v2653, %v2654
    %v2656 = vtanh.pop %v2655
    %v2657 = vmul.f32 %v2652, %v2656
    %v2658 = vld [vmem:[%s920] sm:$0xff]
    %v2659 = vpack.c.bf16 %v2657, %v2657
    %2660 = vmatprep.subr.bf16.mxu0 %v2361
    %2661 = vmatpush1.bf16.msra.mxu0 %v2360
    %2662 = vmatprep.subr.bf16.mxu0 %v2357
    %2663 = vmatpush1.bf16.msra.mxu0 %v2356
    %2664 = vmatprep.subr.bf16.mxu0 %v2353
    %2665 = vmatpush1.bf16.msra.mxu0 %v2352
    %2666 = vmatprep.subr.bf16.mxu0 %v2349
    %2667 = vmatpush1.bf16.msra.mxu0 %v2348
    %2668 = vmatprep.subr.bf16.mxu0 %v2345
    %2669 = vmatpush1.bf16.msra.mxu0 %v2344
    %2670 = vmatprep.subr.bf16.mxu0 %v2341
    %2671 = vmatpush1.bf16.msra.mxu0 %v2340
    %2672 = vmatprep.subr.bf16.mxu0 %v2337
    %2673 = vmatpush1.bf16.msra.mxu0 %v2336
    %2674 = vmatprep.subr.bf16.mxu0 %v2333
    %2675 = vmatpush1.bf16.msra.mxu0 %v2332
    %2676 = vmatprep.subr.bf16.mxu0 0
    %2677 = vmatpush2.bf16.msra.mxu0 0
    %2678 = vmatprep.subr.bf16.mxu0 0
    %2679 = vmatpush2.bf16.msra.mxu0 0
    %2680 = vmatprep.subr.bf16.mxu0 0
    %2681 = vmatpush2.bf16.msra.mxu0 0
    %2682 = vmatprep.subr.bf16.mxu0 0
    %2683 = vmatpush2.bf16.msra.mxu0 0
    %2684 = vmatprep.subr.bf16.mxu0 0
    %2685 = vmatpush2.bf16.msra.mxu0 0
    %2686 = vmatprep.subr.bf16.mxu0 0
    %2687 = vmatpush2.bf16.msra.mxu0 0
    %2688 = vmatprep.subr.bf16.mxu0 0
    %2689 = vmatpush2.bf16.msra.mxu0 0
    %2690 = vmatprep.subr.bf16.mxu0 0
    %2691 = vmatpush2.bf16.msra.mxu0 0
    %2692 = vmatprep.mubr.bf16.mxu0 0
    %2693 = vmatmul.mubr.bf16.gmra.mxu0 %v2659
    %v2694 = vpop.f32.mrf.mxu0
    %v2695 = vadd.f32 0.0, %v2694
    %v2696 = vpop.f32.mrf.mxu0
    %v2697 = vadd.f32 0.0, %v2696
    %v2698 = vpop.f32.mrf.mxu0
    %v2699 = vpop.f32.mrf.mxu0
    %2700 = vdwg.mxu0
    %2701 = vmatprep.subr.bf16.mxu0 %v2363
    %2702 = vmatpush1.bf16.msra.mxu0 %v2362
    %2703 = vmatprep.subr.bf16.mxu0 %v2359
    %2704 = vmatpush1.bf16.msra.mxu0 %v2358
    %2705 = vmatprep.subr.bf16.mxu0 %v2355
    %2706 = vmatpush1.bf16.msra.mxu0 %v2354
    %2707 = vmatprep.subr.bf16.mxu0 %v2351
    %2708 = vmatpush1.bf16.msra.mxu0 %v2350
    %2709 = vmatprep.subr.bf16.mxu0 %v2347
    %2710 = vmatpush1.bf16.msra.mxu0 %v2346
    %2711 = vmatprep.subr.bf16.mxu0 %v2343
    %2712 = vmatpush1.bf16.msra.mxu0 %v2342
    %2713 = vmatprep.subr.bf16.mxu0 %v2339
    %2714 = vmatpush1.bf16.msra.mxu0 %v2338
    %2715 = vmatprep.subr.bf16.mxu0 %v2335
    %2716 = vmatpush1.bf16.msra.mxu0 %v2334
    %2717 = vmatprep.subr.bf16.mxu0 0
    %2718 = vmatpush2.bf16.msra.mxu0 0
    %2719 = vmatprep.subr.bf16.mxu0 0
    %2720 = vmatpush2.bf16.msra.mxu0 0
    %2721 = vmatprep.subr.bf16.mxu0 0
    %2722 = vmatpush2.bf16.msra.mxu0 0
    %2723 = vmatprep.subr.bf16.mxu0 0
    %2724 = vmatpush2.bf16.msra.mxu0 0
    %2725 = vmatprep.subr.bf16.mxu0 0
    %2726 = vmatpush2.bf16.msra.mxu0 0
    %2727 = vmatprep.subr.bf16.mxu0 0
    %2728 = vmatpush2.bf16.msra.mxu0 0
    %2729 = vmatprep.subr.bf16.mxu0 0
    %2730 = vmatpush2.bf16.msra.mxu0 0
    %2731 = vmatprep.subr.bf16.mxu0 0
    %2732 = vmatpush2.bf16.msra.mxu0 0
    %2733 = vmatprep.mubr.bf16.mxu0 0
    %2734 = vmatmul.mubr.bf16.gmra.mxu0 %v2659
    %v2735 = vpop.f32.mrf.mxu0
    %v2736 = vadd.f32 0.0, %v2735
    %v2737 = vpop.f32.mrf.mxu0
    %v2738 = vadd.f32 0.0, %v2737
    %v2739 = vpop.f32.mrf.mxu0
    %v2740 = vpop.f32.mrf.mxu0
    %2741 = vdwg.mxu0
    %v2746 = vcombine.low %v2695, %v2697
    %v2747 = vcombine.low %v2736, %v2738
    %v2749 = vunpack.c.l.s4 1983009808
    %v2750 = vunpack.c.0.s8 %v2749
    %v2751 = vlaneseq
    %v2752 = vshrl.u32 %v2751, 7
    %v2753 = vsub.s32 %v2750, %v2752
    %v2754 = vrot.slane %v2746, %v2753
    %v2756 = vunpack.c.l.s4 1983009808
    %v2757 = vunpack.c.0.s8 %v2756
    %v2758 = vlaneseq
    %v2759 = vshrl.u32 %v2758, 7
    %v2760 = vsub.s32 %v2757, %v2759
    %v2761 = vrot.slane %v2747, %v2760
    %v2762 = vcombine.low %v2754, %v2761
    %v2764 = vadd.f32 %v2658, %v2762
    %v2765 = vmul.f32 %v2764, 0.5
    %v2766 = vtanh.pop %v2765
    %v2767 = vadd.f32 %v2766, 1.0
    %v2768 = vmul.f32 %v2767, 0.5
    %v2770 = vrot.slane %v2764, 2
    %v2772 = vmul.f32 %v2770, 0.5
    %v2773 = vtanh.pop %v2772
    %v2774 = vadd.f32 %v2773, 1.0
    %v2775 = vmul.f32 %v2774, 0.5
    %v2776 = vrot.slane %v2764, 4
    %v2778 = vtanh.pop %v2776
    %v2779 = vrot.slane %v2764, 6
    %v2781 = vmul.f32 %v2779, 0.5
    %v2782 = vtanh.pop %v2781
    %v2783 = vadd.f32 %v2782, 1.0
    %v2784 = vmul.f32 %v2783, 0.5
    %v2785 = vmul.f32 %v2775, %v2655
    %v2786 = vmul.f32 %v2768, %v2778
    %v2787 = vadd.f32 %v2785, %v2786
    %v2788 = vtanh.pop %v2787
    %v2789 = vmul.f32 %v2784, %v2788
    %v2790 = vld [vmem:[%s1055] sm:$0xff]
    %v2791 = vpack.c.bf16 %v2789, %v2789
    %2792 = vmatprep.subr.bf16.mxu0 %v2361
    %2793 = vmatpush1.bf16.msra.mxu0 %v2360
    %2794 = vmatprep.subr.bf16.mxu0 %v2357
    %2795 = vmatpush1.bf16.msra.mxu0 %v2356
    %2796 = vmatprep.subr.bf16.mxu0 %v2353
    %2797 = vmatpush1.bf16.msra.mxu0 %v2352
    %2798 = vmatprep.subr.bf16.mxu0 %v2349
    %2799 = vmatpush1.bf16.msra.mxu0 %v2348
    %2800 = vmatprep.subr.bf16.mxu0 %v2345
    %2801 = vmatpush1.bf16.msra.mxu0 %v2344
    %2802 = vmatprep.subr.bf16.mxu0 %v2341
    %2803 = vmatpush1.bf16.msra.mxu0 %v2340
    %2804 = vmatprep.subr.bf16.mxu0 %v2337
    %2805 = vmatpush1.bf16.msra.mxu0 %v2336
    %2806 = vmatprep.subr.bf16.mxu0 %v2333
    %2807 = vmatpush1.bf16.msra.mxu0 %v2332
    %2808 = vmatprep.subr.bf16.mxu0 0
    %2809 = vmatpush2.bf16.msra.mxu0 0
    %2810 = vmatprep.subr.bf16.mxu0 0
    %2811 = vmatpush2.bf16.msra.mxu0 0
    %2812 = vmatprep.subr.bf16.mxu0 0
    %2813 = vmatpush2.bf16.msra.mxu0 0
    %2814 = vmatprep.subr.bf16.mxu0 0
    %2815 = vmatpush2.bf16.msra.mxu0 0
    %2816 = vmatprep.subr.bf16.mxu0 0
    %2817 = vmatpush2.bf16.msra.mxu0 0
    %2818 = vmatprep.subr.bf16.mxu0 0
    %2819 = vmatpush2.bf16.msra.mxu0 0
    %2820 = vmatprep.subr.bf16.mxu0 0
    %2821 = vmatpush2.bf16.msra.mxu0 0
    %2822 = vmatprep.subr.bf16.mxu0 0
    %2823 = vmatpush2.bf16.msra.mxu0 0
    %2824 = vmatprep.mubr.bf16.mxu0 0
    %2825 = vmatmul.mubr.bf16.gmra.mxu0 %v2791
    %v2826 = vpop.f32.mrf.mxu0
    %v2827 = vadd.f32 0.0, %v2826
    %v2828 = vpop.f32.mrf.mxu0
    %v2829 = vadd.f32 0.0, %v2828
    %v2830 = vpop.f32.mrf.mxu0
    %v2831 = vpop.f32.mrf.mxu0
    %2832 = vdwg.mxu0
    %2833 = vmatprep.subr.bf16.mxu0 %v2363
    %2834 = vmatpush1.bf16.msra.mxu0 %v2362
    %2835 = vmatprep.subr.bf16.mxu0 %v2359
    %2836 = vmatpush1.bf16.msra.mxu0 %v2358
    %2837 = vmatprep.subr.bf16.mxu0 %v2355
    %2838 = vmatpush1.bf16.msra.mxu0 %v2354
    %2839 = vmatprep.subr.bf16.mxu0 %v2351
    %2840 = vmatpush1.bf16.msra.mxu0 %v2350
    %2841 = vmatprep.subr.bf16.mxu0 %v2347
    %2842 = vmatpush1.bf16.msra.mxu0 %v2346
    %2843 = vmatprep.subr.bf16.mxu0 %v2343
    %2844 = vmatpush1.bf16.msra.mxu0 %v2342
    %2845 = vmatprep.subr.bf16.mxu0 %v2339
    %2846 = vmatpush1.bf16.msra.mxu0 %v2338
    %2847 = vmatprep.subr.bf16.mxu0 %v2335
    %2848 = vmatpush1.bf16.msra.mxu0 %v2334
    %2849 = vmatprep.subr.bf16.mxu0 0
    %2850 = vmatpush2.bf16.msra.mxu0 0
    %2851 = vmatprep.subr.bf16.mxu0 0
    %2852 = vmatpush2.bf16.msra.mxu0 0
    %2853 = vmatprep.subr.bf16.mxu0 0
    %2854 = vmatpush2.bf16.msra.mxu0 0
    %2855 = vmatprep.subr.bf16.mxu0 0
    %2856 = vmatpush2.bf16.msra.mxu0 0
    %2857 = vmatprep.subr.bf16.mxu0 0
    %2858 = vmatpush2.bf16.msra.mxu0 0
    %2859 = vmatprep.subr.bf16.mxu0 0
    %2860 = vmatpush2.bf16.msra.mxu0 0
    %2861 = vmatprep.subr.bf16.mxu0 0
    %2862 = vmatpush2.bf16.msra.mxu0 0
    %2863 = vmatprep.subr.bf16.mxu0 0
    %2864 = vmatpush2.bf16.msra.mxu0 0
    %2865 = vmatprep.mubr.bf16.mxu0 0
    %2866 = vmatmul.mubr.bf16.gmra.mxu0 %v2791
    %v2867 = vpop.f32.mrf.mxu0
    %v2868 = vadd.f32 0.0, %v2867
    %v2869 = vpop.f32.mrf.mxu0
    %v2870 = vadd.f32 0.0, %v2869
    %v2871 = vpop.f32.mrf.mxu0
    %v2872 = vpop.f32.mrf.mxu0
    %2873 = vdwg.mxu0
    %v2878 = vcombine.low %v2827, %v2829
    %v2879 = vcombine.low %v2868, %v2870
    %v2881 = vunpack.c.l.s4 1983009808
    %v2882 = vunpack.c.0.s8 %v2881
    %v2883 = vlaneseq
    %v2884 = vshrl.u32 %v2883, 7
    %v2885 = vsub.s32 %v2882, %v2884
    %v2886 = vrot.slane %v2878, %v2885
    %v2888 = vunpack.c.l.s4 1983009808
    %v2889 = vunpack.c.0.s8 %v2888
    %v2890 = vlaneseq
    %v2891 = vshrl.u32 %v2890, 7
    %v2892 = vsub.s32 %v2889, %v2891
    %v2893 = vrot.slane %v2879, %v2892
    %v2894 = vcombine.low %v2886, %v2893
    %v2896 = vadd.f32 %v2790, %v2894
    %v2897 = vmul.f32 %v2896, 0.5
    %v2898 = vtanh.pop %v2897
    %v2899 = vadd.f32 %v2898, 1.0
    %v2900 = vmul.f32 %v2899, 0.5
    %v2902 = vrot.slane %v2896, 2
    %v2904 = vmul.f32 %v2902, 0.5
    %v2905 = vtanh.pop %v2904
    %v2906 = vadd.f32 %v2905, 1.0
    %v2907 = vmul.f32 %v2906, 0.5
    %v2908 = vrot.slane %v2896, 4
    %v2910 = vtanh.pop %v2908
    %v2911 = vrot.slane %v2896, 6
    %v2913 = vmul.f32 %v2911, 0.5
    %v2914 = vtanh.pop %v2913
    %v2915 = vadd.f32 %v2914, 1.0
    %v2916 = vmul.f32 %v2915, 0.5
    %v2917 = vmul.f32 %v2907, %v2787
    %v2918 = vmul.f32 %v2900, %v2910
    %v2919 = vadd.f32 %v2917, %v2918
    %v2920 = vtanh.pop %v2919
    %v2921 = vmul.f32 %v2916, %v2920
    %v2922 = vld [vmem:[%s1190] sm:$0xff]
    %v2923 = vpack.c.bf16 %v2921, %v2921
    %2924 = vmatprep.subr.bf16.mxu0 %v2361
    %2925 = vmatpush1.bf16.msra.mxu0 %v2360
    %2926 = vmatprep.subr.bf16.mxu0 %v2357
    %2927 = vmatpush1.bf16.msra.mxu0 %v2356
    %2928 = vmatprep.subr.bf16.mxu0 %v2353
    %2929 = vmatpush1.bf16.msra.mxu0 %v2352
    %2930 = vmatprep.subr.bf16.mxu0 %v2349
    %2931 = vmatpush1.bf16.msra.mxu0 %v2348
    %2932 = vmatprep.subr.bf16.mxu0 %v2345
    %2933 = vmatpush1.bf16.msra.mxu0 %v2344
    %2934 = vmatprep.subr.bf16.mxu0 %v2341
    %2935 = vmatpush1.bf16.msra.mxu0 %v2340
    %2936 = vmatprep.subr.bf16.mxu0 %v2337
    %2937 = vmatpush1.bf16.msra.mxu0 %v2336
    %2938 = vmatprep.subr.bf16.mxu0 %v2333
    %2939 = vmatpush1.bf16.msra.mxu0 %v2332
    %2940 = vmatprep.subr.bf16.mxu0 0
    %2941 = vmatpush2.bf16.msra.mxu0 0
    %2942 = vmatprep.subr.bf16.mxu0 0
    %2943 = vmatpush2.bf16.msra.mxu0 0
    %2944 = vmatprep.subr.bf16.mxu0 0
    %2945 = vmatpush2.bf16.msra.mxu0 0
    %2946 = vmatprep.subr.bf16.mxu0 0
    %2947 = vmatpush2.bf16.msra.mxu0 0
    %2948 = vmatprep.subr.bf16.mxu0 0
    %2949 = vmatpush2.bf16.msra.mxu0 0
    %2950 = vmatprep.subr.bf16.mxu0 0
    %2951 = vmatpush2.bf16.msra.mxu0 0
    %2952 = vmatprep.subr.bf16.mxu0 0
    %2953 = vmatpush2.bf16.msra.mxu0 0
    %2954 = vmatprep.subr.bf16.mxu0 0
    %2955 = vmatpush2.bf16.msra.mxu0 0
    %2956 = vmatprep.mubr.bf16.mxu0 0
    %2957 = vmatmul.mubr.bf16.gmra.mxu0 %v2923
    %v2958 = vpop.f32.mrf.mxu0
    %v2959 = vadd.f32 0.0, %v2958
    %v2960 = vpop.f32.mrf.mxu0
    %v2961 = vadd.f32 0.0, %v2960
    %v2962 = vpop.f32.mrf.mxu0
    %v2963 = vpop.f32.mrf.mxu0
    %2964 = vdwg.mxu0
    %2965 = vmatprep.subr.bf16.mxu0 %v2363
    %2966 = vmatpush1.bf16.msra.mxu0 %v2362
    %2967 = vmatprep.subr.bf16.mxu0 %v2359
    %2968 = vmatpush1.bf16.msra.mxu0 %v2358
    %2969 = vmatprep.subr.bf16.mxu0 %v2355
    %2970 = vmatpush1.bf16.msra.mxu0 %v2354
    %2971 = vmatprep.subr.bf16.mxu0 %v2351
    %2972 = vmatpush1.bf16.msra.mxu0 %v2350
    %2973 = vmatprep.subr.bf16.mxu0 %v2347
    %2974 = vmatpush1.bf16.msra.mxu0 %v2346
    %2975 = vmatprep.subr.bf16.mxu0 %v2343
    %2976 = vmatpush1.bf16.msra.mxu0 %v2342
    %2977 = vmatprep.subr.bf16.mxu0 %v2339
    %2978 = vmatpush1.bf16.msra.mxu0 %v2338
    %2979 = vmatprep.subr.bf16.mxu0 %v2335
    %2980 = vmatpush1.bf16.msra.mxu0 %v2334
    %2981 = vmatprep.subr.bf16.mxu0 0
    %2982 = vmatpush2.bf16.msra.mxu0 0
    %2983 = vmatprep.subr.bf16.mxu0 0
    %2984 = vmatpush2.bf16.msra.mxu0 0
    %2985 = vmatprep.subr.bf16.mxu0 0
    %2986 = vmatpush2.bf16.msra.mxu0 0
    %2987 = vmatprep.subr.bf16.mxu0 0
    %2988 = vmatpush2.bf16.msra.mxu0 0
    %2989 = vmatprep.subr.bf16.mxu0 0
    %2990 = vmatpush2.bf16.msra.mxu0 0
    %2991 = vmatprep.subr.bf16.mxu0 0
    %2992 = vmatpush2.bf16.msra.mxu0 0
    %2993 = vmatprep.subr.bf16.mxu0 0
    %2994 = vmatpush2.bf16.msra.mxu0 0
    %2995 = vmatprep.subr.bf16.mxu0 0
    %2996 = vmatpush2.bf16.msra.mxu0 0
    %2997 = vmatprep.mubr.bf16.mxu0 0
    %2998 = vmatmul.mubr.bf16.gmra.mxu0 %v2923
    %v2999 = vpop.f32.mrf.mxu0
    %v3000 = vadd.f32 0.0, %v2999
    %v3001 = vpop.f32.mrf.mxu0
    %v3002 = vadd.f32 0.0, %v3001
    %v3003 = vpop.f32.mrf.mxu0
    %v3004 = vpop.f32.mrf.mxu0
    %3005 = vdwg.mxu0
    %v3010 = vcombine.low %v2959, %v2961
    %v3011 = vcombine.low %v3000, %v3002
    %v3013 = vunpack.c.l.s4 1983009808
    %v3014 = vunpack.c.0.s8 %v3013
    %v3015 = vlaneseq
    %v3016 = vshrl.u32 %v3015, 7
    %v3017 = vsub.s32 %v3014, %v3016
    %v3018 = vrot.slane %v3010, %v3017
    %v3020 = vunpack.c.l.s4 1983009808
    %v3021 = vunpack.c.0.s8 %v3020
    %v3022 = vlaneseq
    %v3023 = vshrl.u32 %v3022, 7
    %v3024 = vsub.s32 %v3021, %v3023
    %v3025 = vrot.slane %v3011, %v3024
    %v3026 = vcombine.low %v3018, %v3025
    %v3028 = vadd.f32 %v2922, %v3026
    %v3029 = vmul.f32 %v3028, 0.5
    %v3030 = vtanh.pop %v3029
    %v3031 = vadd.f32 %v3030, 1.0
    %v3032 = vmul.f32 %v3031, 0.5
    %v3034 = vrot.slane %v3028, 2
    %v3036 = vmul.f32 %v3034, 0.5
    %v3037 = vtanh.pop %v3036
    %v3038 = vadd.f32 %v3037, 1.0
    %v3039 = vmul.f32 %v3038, 0.5
    %v3040 = vrot.slane %v3028, 4
    %v3042 = vtanh.pop %v3040
    %v3043 = vrot.slane %v3028, 6
    %v3045 = vmul.f32 %v3043, 0.5
    %v3046 = vtanh.pop %v3045
    %v3047 = vadd.f32 %v3046, 1.0
    %v3048 = vmul.f32 %v3047, 0.5
    %v3049 = vmul.f32 %v3039, %v2919
    %v3050 = vmul.f32 %v3032, %v3042
    %v3051 = vadd.f32 %v3049, %v3050
    %v3052 = vtanh.pop %v3051
    %v3053 = vmul.f32 %v3048, %v3052
    %v3054 = vld [vmem:[%s1325] sm:$0xff]
    %v3055 = vpack.c.bf16 %v3053, %v3053
    %3056 = vmatprep.subr.bf16.mxu0 %v2361
    %3057 = vmatpush1.bf16.msra.mxu0 %v2360
    %3058 = vmatprep.subr.bf16.mxu0 %v2357
    %3059 = vmatpush1.bf16.msra.mxu0 %v2356
    %3060 = vmatprep.subr.bf16.mxu0 %v2353
    %3061 = vmatpush1.bf16.msra.mxu0 %v2352
    %3062 = vmatprep.subr.bf16.mxu0 %v2349
    %3063 = vmatpush1.bf16.msra.mxu0 %v2348
    %3064 = vmatprep.subr.bf16.mxu0 %v2345
    %3065 = vmatpush1.bf16.msra.mxu0 %v2344
    %3066 = vmatprep.subr.bf16.mxu0 %v2341
    %3067 = vmatpush1.bf16.msra.mxu0 %v2340
    %3068 = vmatprep.subr.bf16.mxu0 %v2337
    %3069 = vmatpush1.bf16.msra.mxu0 %v2336
    %3070 = vmatprep.subr.bf16.mxu0 %v2333
    %3071 = vmatpush1.bf16.msra.mxu0 %v2332
    %3072 = vmatprep.subr.bf16.mxu0 0
    %3073 = vmatpush2.bf16.msra.mxu0 0
    %3074 = vmatprep.subr.bf16.mxu0 0
    %3075 = vmatpush2.bf16.msra.mxu0 0
    %3076 = vmatprep.subr.bf16.mxu0 0
    %3077 = vmatpush2.bf16.msra.mxu0 0
    %3078 = vmatprep.subr.bf16.mxu0 0
    %3079 = vmatpush2.bf16.msra.mxu0 0
    %3080 = vmatprep.subr.bf16.mxu0 0
    %3081 = vmatpush2.bf16.msra.mxu0 0
    %3082 = vmatprep.subr.bf16.mxu0 0
    %3083 = vmatpush2.bf16.msra.mxu0 0
    %3084 = vmatprep.subr.bf16.mxu0 0
    %3085 = vmatpush2.bf16.msra.mxu0 0
    %3086 = vmatprep.subr.bf16.mxu0 0
    %3087 = vmatpush2.bf16.msra.mxu0 0
    %3088 = vmatprep.mubr.bf16.mxu0 0
    %3089 = vmatmul.mubr.bf16.gmra.mxu0 %v3055
    %v3090 = vpop.f32.mrf.mxu0
    %v3091 = vadd.f32 0.0, %v3090
    %v3092 = vpop.f32.mrf.mxu0
    %v3093 = vadd.f32 0.0, %v3092
    %v3094 = vpop.f32.mrf.mxu0
    %v3095 = vpop.f32.mrf.mxu0
    %3096 = vdwg.mxu0
    %3097 = vmatprep.subr.bf16.mxu0 %v2363
    %3098 = vmatpush1.bf16.msra.mxu0 %v2362
    %3099 = vmatprep.subr.bf16.mxu0 %v2359
    %3100 = vmatpush1.bf16.msra.mxu0 %v2358
    %3101 = vmatprep.subr.bf16.mxu0 %v2355
    %3102 = vmatpush1.bf16.msra.mxu0 %v2354
    %3103 = vmatprep.subr.bf16.mxu0 %v2351
    %3104 = vmatpush1.bf16.msra.mxu0 %v2350
    %3105 = vmatprep.subr.bf16.mxu0 %v2347
    %3106 = vmatpush1.bf16.msra.mxu0 %v2346
    %3107 = vmatprep.subr.bf16.mxu0 %v2343
    %3108 = vmatpush1.bf16.msra.mxu0 %v2342
    %3109 = vmatprep.subr.bf16.mxu0 %v2339
    %3110 = vmatpush1.bf16.msra.mxu0 %v2338
    %3111 = vmatprep.subr.bf16.mxu0 %v2335
    %3112 = vmatpush1.bf16.msra.mxu0 %v2334
    %3113 = vmatprep.subr.bf16.mxu0 0
    %3114 = vmatpush2.bf16.msra.mxu0 0
    %3115 = vmatprep.subr.bf16.mxu0 0
    %3116 = vmatpush2.bf16.msra.mxu0 0
    %3117 = vmatprep.subr.bf16.mxu0 0
    %3118 = vmatpush2.bf16.msra.mxu0 0
    %3119 = vmatprep.subr.bf16.mxu0 0
    %3120 = vmatpush2.bf16.msra.mxu0 0
    %3121 = vmatprep.subr.bf16.mxu0 0
    %3122 = vmatpush2.bf16.msra.mxu0 0
    %3123 = vmatprep.subr.bf16.mxu0 0
    %3124 = vmatpush2.bf16.msra.mxu0 0
    %3125 = vmatprep.subr.bf16.mxu0 0
    %3126 = vmatpush2.bf16.msra.mxu0 0
    %3127 = vmatprep.subr.bf16.mxu0 0
    %3128 = vmatpush2.bf16.msra.mxu0 0
    %3129 = vmatprep.mubr.bf16.mxu0 0
    %3130 = vmatmul.mubr.bf16.gmra.mxu0 %v3055
    %v3131 = vpop.f32.mrf.mxu0
    %v3132 = vadd.f32 0.0, %v3131
    %v3133 = vpop.f32.mrf.mxu0
    %v3134 = vadd.f32 0.0, %v3133
    %v3135 = vpop.f32.mrf.mxu0
    %v3136 = vpop.f32.mrf.mxu0
    %3137 = vdwg.mxu0
    %v3142 = vcombine.low %v3091, %v3093
    %v3143 = vcombine.low %v3132, %v3134
    %v3145 = vunpack.c.l.s4 1983009808
    %v3146 = vunpack.c.0.s8 %v3145
    %v3147 = vlaneseq
    %v3148 = vshrl.u32 %v3147, 7
    %v3149 = vsub.s32 %v3146, %v3148
    %v3150 = vrot.slane %v3142, %v3149
    %v3152 = vunpack.c.l.s4 1983009808
    %v3153 = vunpack.c.0.s8 %v3152
    %v3154 = vlaneseq
    %v3155 = vshrl.u32 %v3154, 7
    %v3156 = vsub.s32 %v3153, %v3155
    %v3157 = vrot.slane %v3143, %v3156
    %v3158 = vcombine.low %v3150, %v3157
    %v3160 = vadd.f32 %v3054, %v3158
    %v3161 = vmul.f32 %v3160, 0.5
    %v3162 = vtanh.pop %v3161
    %v3163 = vadd.f32 %v3162, 1.0
    %v3164 = vmul.f32 %v3163, 0.5
    %v3166 = vrot.slane %v3160, 2
    %v3168 = vmul.f32 %v3166, 0.5
    %v3169 = vtanh.pop %v3168
    %v3170 = vadd.f32 %v3169, 1.0
    %v3171 = vmul.f32 %v3170, 0.5
    %v3172 = vrot.slane %v3160, 4
    %v3174 = vtanh.pop %v3172
    %v3175 = vrot.slane %v3160, 6
    %v3177 = vmul.f32 %v3175, 0.5
    %v3178 = vtanh.pop %v3177
    %v3179 = vadd.f32 %v3178, 1.0
    %v3180 = vmul.f32 %v3179, 0.5
    %v3181 = vmul.f32 %v3171, %v3051
    %v3182 = vmul.f32 %v3164, %v3174
    %v3183 = vadd.f32 %v3181, %v3182
    %v3184 = vtanh.pop %v3183
    %v3185 = vmul.f32 %v3180, %v3184
    %v3186 = vld [vmem:[%s1460] sm:$0xff]
    %v3187 = vpack.c.bf16 %v3185, %v3185
    %3188 = vmatprep.subr.bf16.mxu0 %v2361
    %3189 = vmatpush1.bf16.msra.mxu0 %v2360
    %3190 = vmatprep.subr.bf16.mxu0 %v2357
    %3191 = vmatpush1.bf16.msra.mxu0 %v2356
    %3192 = vmatprep.subr.bf16.mxu0 %v2353
    %3193 = vmatpush1.bf16.msra.mxu0 %v2352
    %3194 = vmatprep.subr.bf16.mxu0 %v2349
    %3195 = vmatpush1.bf16.msra.mxu0 %v2348
    %3196 = vmatprep.subr.bf16.mxu0 %v2345
    %3197 = vmatpush1.bf16.msra.mxu0 %v2344
    %3198 = vmatprep.subr.bf16.mxu0 %v2341
    %3199 = vmatpush1.bf16.msra.mxu0 %v2340
    %3200 = vmatprep.subr.bf16.mxu0 %v2337
    %3201 = vmatpush1.bf16.msra.mxu0 %v2336
    %3202 = vmatprep.subr.bf16.mxu0 %v2333
    %3203 = vmatpush1.bf16.msra.mxu0 %v2332
    %3204 = vmatprep.subr.bf16.mxu0 0
    %3205 = vmatpush2.bf16.msra.mxu0 0
    %3206 = vmatprep.subr.bf16.mxu0 0
    %3207 = vmatpush2.bf16.msra.mxu0 0
    %3208 = vmatprep.subr.bf16.mxu0 0
    %3209 = vmatpush2.bf16.msra.mxu0 0
    %3210 = vmatprep.subr.bf16.mxu0 0
    %3211 = vmatpush2.bf16.msra.mxu0 0
    %3212 = vmatprep.subr.bf16.mxu0 0
    %3213 = vmatpush2.bf16.msra.mxu0 0
    %3214 = vmatprep.subr.bf16.mxu0 0
    %3215 = vmatpush2.bf16.msra.mxu0 0
    %3216 = vmatprep.subr.bf16.mxu0 0
    %3217 = vmatpush2.bf16.msra.mxu0 0
    %3218 = vmatprep.subr.bf16.mxu0 0
    %3219 = vmatpush2.bf16.msra.mxu0 0
    %3220 = vmatprep.mubr.bf16.mxu0 0
    %3221 = vmatmul.mubr.bf16.gmra.mxu0 %v3187
    %v3222 = vpop.f32.mrf.mxu0
    %v3223 = vadd.f32 0.0, %v3222
    %v3224 = vpop.f32.mrf.mxu0
    %v3225 = vadd.f32 0.0, %v3224
    %v3226 = vpop.f32.mrf.mxu0
    %v3227 = vpop.f32.mrf.mxu0
    %3228 = vdwg.mxu0
    %3229 = vmatprep.subr.bf16.mxu0 %v2363
    %3230 = vmatpush1.bf16.msra.mxu0 %v2362
    %3231 = vmatprep.subr.bf16.mxu0 %v2359
    %3232 = vmatpush1.bf16.msra.mxu0 %v2358
    %3233 = vmatprep.subr.bf16.mxu0 %v2355
    %3234 = vmatpush1.bf16.msra.mxu0 %v2354
    %3235 = vmatprep.subr.bf16.mxu0 %v2351
    %3236 = vmatpush1.bf16.msra.mxu0 %v2350
    %3237 = vmatprep.subr.bf16.mxu0 %v2347
    %3238 = vmatpush1.bf16.msra.mxu0 %v2346
    %3239 = vmatprep.subr.bf16.mxu0 %v2343
    %3240 = vmatpush1.bf16.msra.mxu0 %v2342
    %3241 = vmatprep.subr.bf16.mxu0 %v2339
    %3242 = vmatpush1.bf16.msra.mxu0 %v2338
    %3243 = vmatprep.subr.bf16.mxu0 %v2335
    %3244 = vmatpush1.bf16.msra.mxu0 %v2334
    %3245 = vmatprep.subr.bf16.mxu0 0
    %3246 = vmatpush2.bf16.msra.mxu0 0
    %3247 = vmatprep.subr.bf16.mxu0 0
    %3248 = vmatpush2.bf16.msra.mxu0 0
    %3249 = vmatprep.subr.bf16.mxu0 0
    %3250 = vmatpush2.bf16.msra.mxu0 0
    %3251 = vmatprep.subr.bf16.mxu0 0
    %3252 = vmatpush2.bf16.msra.mxu0 0
    %3253 = vmatprep.subr.bf16.mxu0 0
    %3254 = vmatpush2.bf16.msra.mxu0 0
    %3255 = vmatprep.subr.bf16.mxu0 0
    %3256 = vmatpush2.bf16.msra.mxu0 0
    %3257 = vmatprep.subr.bf16.mxu0 0
    %3258 = vmatpush2.bf16.msra.mxu0 0
    %3259 = vmatprep.subr.bf16.mxu0 0
    %3260 = vmatpush2.bf16.msra.mxu0 0
    %3261 = vmatprep.mubr.bf16.mxu0 0
    %3262 = vmatmul.mubr.bf16.gmra.mxu0 %v3187
    %v3263 = vpop.f32.mrf.mxu0
    %v3264 = vadd.f32 0.0, %v3263
    %v3265 = vpop.f32.mrf.mxu0
    %v3266 = vadd.f32 0.0, %v3265
    %v3267 = vpop.f32.mrf.mxu0
    %v3268 = vpop.f32.mrf.mxu0
    %3269 = vdwg.mxu0
    %v3274 = vcombine.low %v3223, %v3225
    %v3275 = vcombine.low %v3264, %v3266
    %v3277 = vunpack.c.l.s4 1983009808
    %v3278 = vunpack.c.0.s8 %v3277
    %v3279 = vlaneseq
    %v3280 = vshrl.u32 %v3279, 7
    %v3281 = vsub.s32 %v3278, %v3280
    %v3282 = vrot.slane %v3274, %v3281
    %v3284 = vunpack.c.l.s4 1983009808
    %v3285 = vunpack.c.0.s8 %v3284
    %v3286 = vlaneseq
    %v3287 = vshrl.u32 %v3286, 7
    %v3288 = vsub.s32 %v3285, %v3287
    %v3289 = vrot.slane %v3275, %v3288
    %v3290 = vcombine.low %v3282, %v3289
    %v3292 = vadd.f32 %v3186, %v3290
    %v3293 = vmul.f32 %v3292, 0.5
    %v3294 = vtanh.pop %v3293
    %v3295 = vadd.f32 %v3294, 1.0
    %v3296 = vmul.f32 %v3295, 0.5
    %v3298 = vrot.slane %v3292, 2
    %v3300 = vmul.f32 %v3298, 0.5
    %v3301 = vtanh.pop %v3300
    %v3302 = vadd.f32 %v3301, 1.0
    %v3303 = vmul.f32 %v3302, 0.5
    %v3304 = vrot.slane %v3292, 4
    %v3306 = vtanh.pop %v3304
    %v3307 = vrot.slane %v3292, 6
    %v3309 = vmul.f32 %v3307, 0.5
    %v3310 = vtanh.pop %v3309
    %v3311 = vadd.f32 %v3310, 1.0
    %v3312 = vmul.f32 %v3311, 0.5
    %v3313 = vmul.f32 %v3303, %v3183
    %v3314 = vmul.f32 %v3296, %v3306
    %v3315 = vadd.f32 %v3313, %v3314
    %v3316 = vtanh.pop %v3315
    %v3317 = vmul.f32 %v3312, %v3316
    %v3318 = vld [vmem:[%s1595] sm:$0xff]
    %v3319 = vpack.c.bf16 %v3317, %v3317
    %3320 = vmatprep.subr.bf16.mxu0 %v2361
    %3321 = vmatpush1.bf16.msra.mxu0 %v2360
    %3322 = vmatprep.subr.bf16.mxu0 %v2357
    %3323 = vmatpush1.bf16.msra.mxu0 %v2356
    %3324 = vmatprep.subr.bf16.mxu0 %v2353
    %3325 = vmatpush1.bf16.msra.mxu0 %v2352
    %3326 = vmatprep.subr.bf16.mxu0 %v2349
    %3327 = vmatpush1.bf16.msra.mxu0 %v2348
    %3328 = vmatprep.subr.bf16.mxu0 %v2345
    %3329 = vmatpush1.bf16.msra.mxu0 %v2344
    %3330 = vmatprep.subr.bf16.mxu0 %v2341
    %3331 = vmatpush1.bf16.msra.mxu0 %v2340
    %3332 = vmatprep.subr.bf16.mxu0 %v2337
    %3333 = vmatpush1.bf16.msra.mxu0 %v2336
    %3334 = vmatprep.subr.bf16.mxu0 %v2333
    %3335 = vmatpush1.bf16.msra.mxu0 %v2332
    %3336 = vmatprep.subr.bf16.mxu0 0
    %3337 = vmatpush2.bf16.msra.mxu0 0
    %3338 = vmatprep.subr.bf16.mxu0 0
    %3339 = vmatpush2.bf16.msra.mxu0 0
    %3340 = vmatprep.subr.bf16.mxu0 0
    %3341 = vmatpush2.bf16.msra.mxu0 0
    %3342 = vmatprep.subr.bf16.mxu0 0
    %3343 = vmatpush2.bf16.msra.mxu0 0
    %3344 = vmatprep.subr.bf16.mxu0 0
    %3345 = vmatpush2.bf16.msra.mxu0 0
    %3346 = vmatprep.subr.bf16.mxu0 0
    %3347 = vmatpush2.bf16.msra.mxu0 0
    %3348 = vmatprep.subr.bf16.mxu0 0
    %3349 = vmatpush2.bf16.msra.mxu0 0
    %3350 = vmatprep.subr.bf16.mxu0 0
    %3351 = vmatpush2.bf16.msra.mxu0 0
    %3352 = vmatprep.mubr.bf16.mxu0 0
    %3353 = vmatmul.mubr.bf16.gmra.mxu0 %v3319
    %v3354 = vpop.f32.mrf.mxu0
    %v3355 = vadd.f32 0.0, %v3354
    %v3356 = vpop.f32.mrf.mxu0
    %v3357 = vadd.f32 0.0, %v3356
    %v3358 = vpop.f32.mrf.mxu0
    %v3359 = vpop.f32.mrf.mxu0
    %3360 = vdwg.mxu0
    %3361 = vmatprep.subr.bf16.mxu0 %v2363
    %3362 = vmatpush1.bf16.msra.mxu0 %v2362
    %3363 = vmatprep.subr.bf16.mxu0 %v2359
    %3364 = vmatpush1.bf16.msra.mxu0 %v2358
    %3365 = vmatprep.subr.bf16.mxu0 %v2355
    %3366 = vmatpush1.bf16.msra.mxu0 %v2354
    %3367 = vmatprep.subr.bf16.mxu0 %v2351
    %3368 = vmatpush1.bf16.msra.mxu0 %v2350
    %3369 = vmatprep.subr.bf16.mxu0 %v2347
    %3370 = vmatpush1.bf16.msra.mxu0 %v2346
    %3371 = vmatprep.subr.bf16.mxu0 %v2343
    %3372 = vmatpush1.bf16.msra.mxu0 %v2342
    %3373 = vmatprep.subr.bf16.mxu0 %v2339
    %3374 = vmatpush1.bf16.msra.mxu0 %v2338
    %3375 = vmatprep.subr.bf16.mxu0 %v2335
    %3376 = vmatpush1.bf16.msra.mxu0 %v2334
    %3377 = vmatprep.subr.bf16.mxu0 0
    %3378 = vmatpush2.bf16.msra.mxu0 0
    %3379 = vmatprep.subr.bf16.mxu0 0
    %3380 = vmatpush2.bf16.msra.mxu0 0
    %3381 = vmatprep.subr.bf16.mxu0 0
    %3382 = vmatpush2.bf16.msra.mxu0 0
    %3383 = vmatprep.subr.bf16.mxu0 0
    %3384 = vmatpush2.bf16.msra.mxu0 0
    %3385 = vmatprep.subr.bf16.mxu0 0
    %3386 = vmatpush2.bf16.msra.mxu0 0
    %3387 = vmatprep.subr.bf16.mxu0 0
    %3388 = vmatpush2.bf16.msra.mxu0 0
    %3389 = vmatprep.subr.bf16.mxu0 0
    %3390 = vmatpush2.bf16.msra.mxu0 0
    %3391 = vmatprep.subr.bf16.mxu0 0
    %3392 = vmatpush2.bf16.msra.mxu0 0
    %3393 = vmatprep.mubr.bf16.mxu0 0
    %3394 = vmatmul.mubr.bf16.gmra.mxu0 %v3319
    %v3395 = vpop.f32.mrf.mxu0
    %v3396 = vadd.f32 0.0, %v3395
    %v3397 = vpop.f32.mrf.mxu0
    %v3398 = vadd.f32 0.0, %v3397
    %v3399 = vpop.f32.mrf.mxu0
    %v3400 = vpop.f32.mrf.mxu0
    %3401 = vdwg.mxu0
    %v3406 = vcombine.low %v3355, %v3357
    %v3407 = vcombine.low %v3396, %v3398
    %v3409 = vunpack.c.l.s4 1983009808
    %v3410 = vunpack.c.0.s8 %v3409
    %v3411 = vlaneseq
    %v3412 = vshrl.u32 %v3411, 7
    %v3413 = vsub.s32 %v3410, %v3412
    %v3414 = vrot.slane %v3406, %v3413
    %v3416 = vunpack.c.l.s4 1983009808
    %v3417 = vunpack.c.0.s8 %v3416
    %v3418 = vlaneseq
    %v3419 = vshrl.u32 %v3418, 7
    %v3420 = vsub.s32 %v3417, %v3419
    %v3421 = vrot.slane %v3407, %v3420
    %v3422 = vcombine.low %v3414, %v3421
    %v3424 = vadd.f32 %v3318, %v3422
    %v3425 = vmul.f32 %v3424, 0.5
    %v3426 = vtanh.pop %v3425
    %v3427 = vadd.f32 %v3426, 1.0
    %v3428 = vmul.f32 %v3427, 0.5
    %v3430 = vrot.slane %v3424, 2
    %v3432 = vmul.f32 %v3430, 0.5
    %v3433 = vtanh.pop %v3432
    %v3434 = vadd.f32 %v3433, 1.0
    %v3435 = vmul.f32 %v3434, 0.5
    %v3436 = vrot.slane %v3424, 4
    %v3438 = vtanh.pop %v3436
    %v3439 = vrot.slane %v3424, 6
    %v3441 = vmul.f32 %v3439, 0.5
    %v3442 = vtanh.pop %v3441
    %v3443 = vadd.f32 %v3442, 1.0
    %v3444 = vmul.f32 %v3443, 0.5
    %v3445 = vmul.f32 %v3435, %v3315
    %v3446 = vmul.f32 %v3428, %v3438
    %v3447 = vadd.f32 %v3445, %v3446
    %v3448 = vtanh.pop %v3447
    %v3449 = vmul.f32 %v3444, %v3448
    %s3450 = scalar_lea.vmem [#allocation14], 2
    %3451 = vst [vmem:[%s3450] sm:$0x3] %v3449
    %s3452 = scalar_lea.vmem [#allocation16], 2
    %3453 = vst [vmem:[%s3452] sm:$0x3] %v3447
    %v3454 = vpack.c.bf16 %v3449, %v3449
    %v3455 = vld [vmem:[#allocation10] sm:$0xf]
    %v3456 = vld [vmem:[#allocation10 + $0x4] sm:$0xf]
    %v3457 = vld [vmem:[#allocation10 + $0x8] sm:$0xf]
    %v3458 = vld [vmem:[#allocation10 + $0xc] sm:$0xf]
    %v3459 = vld [vmem:[#allocation10 + $0x10] sm:$0xf]
    %v3460 = vld [vmem:[#allocation10 + $0x14] sm:$0xf]
    %v3461 = vld [vmem:[#allocation10 + $0x18] sm:$0xf]
    %v3462 = vld [vmem:[#allocation10 + $0x1c] sm:$0xf]
    %v3463 = vld [vmem:[#allocation10 + $0x20] sm:$0xf]
    %v3464 = vld [vmem:[#allocation10 + $0x24] sm:$0xf]
    %v3465 = vld [vmem:[#allocation10 + $0x28] sm:$0xf]
    %v3466 = vld [vmem:[#allocation10 + $0x2c] sm:$0xf]
    %v3467 = vld [vmem:[#allocation10 + $0x30] sm:$0xf]
    %v3468 = vld [vmem:[#allocation10 + $0x34] sm:$0xf]
    %v3469 = vld [vmem:[#allocation10 + $0x38] sm:$0xf]
    %v3470 = vld [vmem:[#allocation10 + $0x3c] sm:$0xf]
    %v3471 = vld [vmem:[%s8] sm:$0x1]
    %v3473 = vlaneseq
    %v3474 = vshrl.u32 %v3473, 7
    %v3475 = vsub.s32 0, %v3474
    %v3476 = vrot.slane %v3471, %v3475
    %v3494 = vunpack.c.l.b16 %v3455
    %v3495 = vunpack.c.l.b16 %v3456
    %v3496 = vunpack.c.l.b16 %v3457
    %v3497 = vunpack.c.l.b16 %v3458
    %v3498 = vunpack.c.l.b16 %v3459
    %v3499 = vunpack.c.l.b16 %v3460
    %v3500 = vunpack.c.l.b16 %v3461
    %v3501 = vunpack.c.l.b16 %v3462
    %v3502 = vunpack.c.l.b16 %v3463
    %v3503 = vunpack.c.l.b16 %v3464
    %v3504 = vunpack.c.l.b16 %v3465
    %v3505 = vunpack.c.l.b16 %v3466
    %v3506 = vunpack.c.l.b16 %v3467
    %v3507 = vunpack.c.l.b16 %v3468
    %v3508 = vunpack.c.l.b16 %v3469
    %v3509 = vunpack.c.l.b16 %v3470
    %v3510 = vpack.c.b16 %v3495, %v3494
    %v3511 = vpack.c.b16 %v3497, %v3496
    %v3512 = vpack.c.b16 %v3499, %v3498
    %v3513 = vpack.c.b16 %v3501, %v3500
    %v3514 = vpack.c.b16 %v3503, %v3502
    %v3515 = vpack.c.b16 %v3505, %v3504
    %v3516 = vpack.c.b16 %v3507, %v3506
    %v3517 = vpack.c.b16 %v3509, %v3508
    %3526 = vmatprep.subr.bf16.mxu0 0
    %3527 = vmatpush1.bf16.msra.mxu0 %v3517
    %3528 = vmatprep.subr.bf16.mxu0 0
    %3529 = vmatpush1.bf16.msra.mxu0 %v3516
    %3530 = vmatprep.subr.bf16.mxu0 0
    %3531 = vmatpush1.bf16.msra.mxu0 %v3515
    %3532 = vmatprep.subr.bf16.mxu0 0
    %3533 = vmatpush1.bf16.msra.mxu0 %v3514
    %3534 = vmatprep.subr.bf16.mxu0 0
    %3535 = vmatpush1.bf16.msra.mxu0 %v3513
    %3536 = vmatprep.subr.bf16.mxu0 0
    %3537 = vmatpush1.bf16.msra.mxu0 %v3512
    %3538 = vmatprep.subr.bf16.mxu0 0
    %3539 = vmatpush1.bf16.msra.mxu0 %v3511
    %3540 = vmatprep.subr.bf16.mxu0 0
    %3541 = vmatpush1.bf16.msra.mxu0 %v3510
    %3542 = vmatprep.subr.bf16.mxu0 0
    %3543 = vmatpush2.bf16.msra.mxu0 0
    %3544 = vmatprep.subr.bf16.mxu0 0
    %3545 = vmatpush2.bf16.msra.mxu0 0
    %3546 = vmatprep.subr.bf16.mxu0 0
    %3547 = vmatpush2.bf16.msra.mxu0 0
    %3548 = vmatprep.subr.bf16.mxu0 0
    %3549 = vmatpush2.bf16.msra.mxu0 0
    %3550 = vmatprep.subr.bf16.mxu0 0
    %3551 = vmatpush2.bf16.msra.mxu0 0
    %3552 = vmatprep.subr.bf16.mxu0 0
    %3553 = vmatpush2.bf16.msra.mxu0 0
    %3554 = vmatprep.subr.bf16.mxu0 0
    %3555 = vmatpush2.bf16.msra.mxu0 0
    %3556 = vmatprep.subr.bf16.mxu0 0
    %3557 = vmatpush2.bf16.msra.mxu0 0
    %3558 = vmatprep.mubr.bf16.mxu0 0
    %3559 = vmatmul.mubr.bf16.gmra.mxu0 %v3454
    %v3560 = vpop.f32.mrf.mxu0
    %v3561 = vadd.f32 %v3476, %v3560
    %v3562 = vpop.f32.mrf.mxu0
    %v3563 = vpop.f32.mrf.mxu0
    %v3564 = vpop.f32.mrf.mxu0
    %3565 = vdwg.mxu0
    %v3566 = vtanh.pop %v3561
    %v3567 = vpack.c.bf16 %v3566, %v3566
    %v3568 = vld [vmem:[#allocation12] sm:$0xf]
    %v3569 = vld [vmem:[#allocation12 + $0x4] sm:$0xf]
    %v3570 = vld [vmem:[#allocation12 + $0x8] sm:$0xf]
    %v3571 = vld [vmem:[#allocation12 + $0xc] sm:$0xf]
    %v3572 = vld [vmem:[#allocation12 + $0x10] sm:$0xf]
    %v3573 = vld [vmem:[#allocation12 + $0x14] sm:$0xf]
    %v3574 = vld [vmem:[#allocation12 + $0x18] sm:$0xf]
    %v3575 = vld [vmem:[#allocation12 + $0x1c] sm:$0xf]
    %v3576 = vld [vmem:[#allocation12 + $0x20] sm:$0xf]
    %v3577 = vld [vmem:[#allocation12 + $0x24] sm:$0xf]
    %v3578 = vld [vmem:[#allocation12 + $0x28] sm:$0xf]
    %v3579 = vld [vmem:[#allocation12 + $0x2c] sm:$0xf]
    %v3580 = vld [vmem:[#allocation12 + $0x30] sm:$0xf]
    %v3581 = vld [vmem:[#allocation12 + $0x34] sm:$0xf]
    %v3582 = vld [vmem:[#allocation12 + $0x38] sm:$0xf]
    %v3583 = vld [vmem:[#allocation12 + $0x3c] sm:$0xf]
    %v3584 = vld [vmem:[%s10] sm:$0x1]
    %v3586 = vlaneseq
    %v3587 = vshrl.u32 %v3586, 7
    %v3588 = vsub.s32 0, %v3587
    %v3589 = vrot.slane %v3584, %v3588
    %v3607 = vunpack.c.l.b16 %v3568
    %v3608 = vunpack.c.l.b16 %v3569
    %v3609 = vunpack.c.l.b16 %v3570
    %v3610 = vunpack.c.l.b16 %v3571
    %v3611 = vunpack.c.l.b16 %v3572
    %v3612 = vunpack.c.l.b16 %v3573
    %v3613 = vunpack.c.l.b16 %v3574
    %v3614 = vunpack.c.l.b16 %v3575
    %v3615 = vunpack.c.l.b16 %v3576
    %v3616 = vunpack.c.l.b16 %v3577
    %v3617 = vunpack.c.l.b16 %v3578
    %v3618 = vunpack.c.l.b16 %v3579
    %v3619 = vunpack.c.l.b16 %v3580
    %v3620 = vunpack.c.l.b16 %v3581
    %v3621 = vunpack.c.l.b16 %v3582
    %v3622 = vunpack.c.l.b16 %v3583
    %v3623 = vpack.c.b16 %v3608, %v3607
    %v3624 = vpack.c.b16 %v3610, %v3609
    %v3625 = vpack.c.b16 %v3612, %v3611
    %v3626 = vpack.c.b16 %v3614, %v3613
    %v3627 = vpack.c.b16 %v3616, %v3615
    %v3628 = vpack.c.b16 %v3618, %v3617
    %v3629 = vpack.c.b16 %v3620, %v3619
    %v3630 = vpack.c.b16 %v3622, %v3621
    %3639 = vmatprep.subr.bf16.mxu0 0
    %3640 = vmatpush1.bf16.msra.mxu0 %v3630
    %3641 = vmatprep.subr.bf16.mxu0 0
    %3642 = vmatpush1.bf16.msra.mxu0 %v3629
    %3643 = vmatprep.subr.bf16.mxu0 0
    %3644 = vmatpush1.bf16.msra.mxu0 %v3628
    %3645 = vmatprep.subr.bf16.mxu0 0
    %3646 = vmatpush1.bf16.msra.mxu0 %v3627
    %3647 = vmatprep.subr.bf16.mxu0 0
    %3648 = vmatpush1.bf16.msra.mxu0 %v3626
    %3649 = vmatprep.subr.bf16.mxu0 0
    %3650 = vmatpush1.bf16.msra.mxu0 %v3625
    %3651 = vmatprep.subr.bf16.mxu0 0
    %3652 = vmatpush1.bf16.msra.mxu0 %v3624
    %3653 = vmatprep.subr.bf16.mxu0 0
    %3654 = vmatpush1.bf16.msra.mxu0 %v3623
    %3655 = vmatprep.subr.bf16.mxu0 0
    %3656 = vmatpush2.bf16.msra.mxu0 0
    %3657 = vmatprep.subr.bf16.mxu0 0
    %3658 = vmatpush2.bf16.msra.mxu0 0
    %3659 = vmatprep.subr.bf16.mxu0 0
    %3660 = vmatpush2.bf16.msra.mxu0 0
    %3661 = vmatprep.subr.bf16.mxu0 0
    %3662 = vmatpush2.bf16.msra.mxu0 0
    %3663 = vmatprep.subr.bf16.mxu0 0
    %3664 = vmatpush2.bf16.msra.mxu0 0
    %3665 = vmatprep.subr.bf16.mxu0 0
    %3666 = vmatpush2.bf16.msra.mxu0 0
    %3667 = vmatprep.subr.bf16.mxu0 0
    %3668 = vmatpush2.bf16.msra.mxu0 0
    %3669 = vmatprep.subr.bf16.mxu0 0
    %3670 = vmatpush2.bf16.msra.mxu0 0
    %3671 = vmatprep.mubr.bf16.mxu0 0
    %3672 = vmatmul.mubr.bf16.gmra.mxu0 %v3567
    %v3673 = vpop.f32.mrf.mxu0
    %v3674 = vadd.f32 %v3589, %v3673
    %v3675 = vpop.f32.mrf.mxu0
    %v3676 = vpop.f32.mrf.mxu0
    %v3677 = vpop.f32.mrf.mxu0
    %3678 = vdwg.mxu0
    %3679 = vst [vmem:[#allocation13] sm:$0x3] %v3674
    // Predicated region
    $region66: #{tpu_custom_call.1} parent=1 // pred_check
      _
    $region67: #{tpu_custom_call.1} parent=1 // pred_check_branch
      %3681 = sbr.rel (0) target = $region69
    $region68: #{tpu_custom_call.1} parent=1 // pred_region
      %s3683 = ssub.s32 32, 32
      %3684 = vsyncadd [#allocation6], %s3683
      %s3686 = sshll.u32 [#allocation13], 4
      %s3687 = int_to_ptr.vmem [resolvable:$true] %s3686
      %3689 = dma.vmem_to_hbm [thread:$0]  %s3687, 32, %s11, [#allocation6]
    $region69: #{tpu_custom_call.1} parent=1 // pred_fallthru
      _
    // Predicated region
    $region70: #{tpu_custom_call.1} parent=1 // pred_check
      _
    $region71: #{tpu_custom_call.1} parent=1 // pred_check_branch
      %3691 = sbr.rel (0) target = $region73
    $region72: #{tpu_custom_call.1} parent=1 // pred_region
      %s3693 = ssub.s32 64, 64
      %3694 = vsyncadd [#allocation15], %s3693
      %s3695 = sshll.u32 [#allocation14], 4
      %s3696 = int_to_ptr.vmem [resolvable:$true] %s3695
      %3701 = dma.vmem_to_hbm [thread:$0]  %s3696, 64, %s12, [#allocation15], 32, 32, 2
    $region73: #{tpu_custom_call.1} parent=1 // pred_fallthru
      _
    // Predicated region
    $region74: #{tpu_custom_call.1} parent=1 // pred_check
      _
    $region75: #{tpu_custom_call.1} parent=1 // pred_check_branch
      %3703 = sbr.rel (0) target = $region77
    $region76: #{tpu_custom_call.1} parent=1 // pred_region
      %s3705 = ssub.s32 64, 64
      %3706 = vsyncadd [#allocation15], %s3705
      %s3707 = sshll.u32 [#allocation16], 4
      %s3708 = int_to_ptr.vmem [resolvable:$true] %s3707
      %3713 = dma.vmem_to_hbm [thread:$0]  %s3708, 64, %s13, [#allocation15], 32, 32, 2
    $region77: #{tpu_custom_call.1} parent=1 // pred_fallthru
      _
    // Predicated region
    $region78: #{tpu_custom_call.1} parent=1 // pred_check
      _
    $region79: #{tpu_custom_call.1} parent=1 // pred_check_branch
      %3715 = sbr.rel (0) target = $region81
    $region80: #{tpu_custom_call.1} parent=1 // pred_region
      %3716 = dma.done [#allocation6], 32
    $region81: #{tpu_custom_call.1} parent=1 // pred_fallthru
      _
    // Predicated region
    $region82: #{tpu_custom_call.1} parent=1 // pred_check
      _
    $region83: #{tpu_custom_call.1} parent=1 // pred_check_branch
      %3718 = sbr.rel (0) target = $region85
    $region84: #{tpu_custom_call.1} parent=1 // pred_region
      %3719 = dma.done [#allocation15], 64
    $region85: #{tpu_custom_call.1} parent=1 // pred_fallthru
      _
    // Predicated region
    $region86: #{tpu_custom_call.1} parent=1 // pred_check
      _
    $region87: #{tpu_custom_call.1} parent=1 // pred_check_branch
      %3721 = sbr.rel (0) target = $region89
    $region88: #{tpu_custom_call.1} parent=1 // pred_region
      %3722 = dma.done [#allocation15], 64
    $region89: #{tpu_custom_call.1} parent=1 // pred_fallthru
      _
    %3723 = vsyncpa [#allocation5], 1
    %3724 = vsyncpa [#allocation8], 1
    %3725 = vsyncpa [#allocation11], 1
    %3726 = vsyncpa [#allocation6], 1
    %3727 = vsyncpa [#allocation15], 1

</llo_original>
